<compile_context>
chip_gen: v5e
topology: v5e:2x2
jax: 0.10.0
libtpu: 0.0.40
codegen_flags: <defaults>
</compile_context>

<pallas_src>
import jax
import jax.numpy as jnp
from jax.experimental import pallas as pl
from jax.experimental.pallas import tpu as pltpu

# ---- problem sizes (consistent with the module's __init__) -------------------
IN_FEATS = 32
N_HIDDEN = 8                        # per-head output dim of GATConv
NUM_HEADS = 8
N_CLASSES = 4
N_LAYERS = 2
N_NODES = 16
HIDDEN_FLAT = N_HIDDEN * NUM_HEADS  # 64

GRAPH_TYPES = ['ARGUMENT', 'RECEIVER', 'CALL', 'REACHING_DEF', 'CDG', 'CFG', 'AST']
NUM_GRAPHS = len(GRAPH_TYPES)       # 7
R = NUM_GRAPHS * N_NODES            # 112 stacked node rows
SLAB = NUM_HEADS * N_NODES          # 128 score lanes per row: lane = head*16 + src
FUSED_OUT = 2 * SLAB + HIDDEN_FLAT  # 320 fused fc output columns

SELU_SCALE = 1.0507009873554805
SELU_ALPHA = 1.6732632423543772
LEAKY_SLOPE = 0.2                   # DGL GATConv default negative_slope

_VMEM = pl.BlockSpec(memory_space=pltpu.MemorySpace.VMEM)


# ------------------------------ fused kernel ----------------------------------
def multigat_kernel(x_ref, edge_ref, mask_ref, srcsel_ref, gblock_ref, seg_ref,
                    hmaskb_ref, wf1_ref, b1_ref, wf2_ref, b2_ref, wc_ref, bc_ref,
                    out_ref):
    """Entire MultiGAT forward (eval mode).

    x_ref     : (G, N, F_in)  per-graph node features (G=7, N=16)
    edge_ref  : (R, SLAB)     edge mask; [(g,d), h*16+s] = adj_g[d, s]
    mask_ref  : (R, 1)        node mask, tiled per graph
    srcsel_ref: (R, SLAB)     1 iff lane%16 == row%16 (source-lane selector)
    gblock_ref: (R, R)        1 iff same graph (16x16 ones blocks)
    seg_ref   : (SLAB, SLAB)  1 iff same 16-lane segment (block-summing matrix)
    hmaskb_ref: (SLAB, 64)    1 iff lane//16 == column//8 (head/column match)
    wf{1,2}   : (G, F_in, 320) fused fc weight [W@AR@EXP | W@AL@EXP | W]
    b{1,2}    : (R, 64)       per-row GATConv bias
    wc, bc    : (64, C), (1, C) classification layer
    out_ref   : (1, C)        softmax probabilities
    """
    edge = edge_ref[...] > 0.0                                   # (R, SLAB) bool
    srcsel = srcsel_ref[...]                                     # (R, SLAB)
    gblock = gblock_ref[...]                                     # (R, R)
    seg = seg_ref[...]                                           # (SLAB, SLAB)
    hmaskb = hmaskb_ref[...]                                     # (SLAB, 64)
    neg = jnp.float32(-1e30)

    def gat_layer(h3, wf, brows):
        # Single fused fc matmul: [er_slab | el_exp | z] per graph.        (MXU)
        out3 = jnp.einsum('gnf,gfo->gno', h3, wf,
                          preferred_element_type=jnp.float32)    # (G, N, 320)
        er_slab = out3[..., 0:SLAB].reshape(R, SLAB)             # dst scores per head block
        el_exp = out3[..., SLAB:2 * SLAB].reshape(R, SLAB)       # src scores bcast over lanes
        z3 = out3[..., 2 * SLAB:]                                # (G, N, 64)

        # Source scores into lane (h, s): keep only the row's own source lane,
        # then a per-graph ones-block matmul broadcasts them to every dst row.
        el_slab = jnp.dot(gblock, el_exp * srcsel,
                          preferred_element_type=jnp.float32)    # (R, SLAB)  MXU

        # Block-diagonal masked edge softmax, lane-dense (112, 128) slab.
        e = er_slab + el_slab
        e = jnp.where(e > 0, e, LEAKY_SLOPE * e)                 # leaky_relu
        e = jnp.where(edge, e, neg)                              # mask non-edges
        m = jnp.max(e, axis=1, keepdims=True)                    # per-row max (const per segment)
        p = jnp.where(edge, jnp.exp(e - m), 0.0)
        den = jnp.dot(p, seg, preferred_element_type=jnp.float32)  # 16-lane segment sums (MXU)
        alpha = p / jnp.where(den > 0.0, den, 1.0)               # zero in-degree -> alpha 0

        # Per-graph, per-head aggregation: alpha (16,128) @ zblk (128,64).
        alpha3 = alpha.reshape(NUM_GRAPHS, N_NODES, SLAB)
        zblk = jnp.concatenate([z3] * NUM_HEADS, axis=1) * hmaskb   # (G, 128, 64)
        rst3 = jnp.einsum('gdl,glc->gdc', alpha3, zblk,
                          preferred_element_type=jnp.float32)    # (G, 16, 64)
        rst = rst3.reshape(R, HIDDEN_FLAT) + brows

        # SELU (clamp exp arg on the dead branch to avoid transient inf)
        return SELU_SCALE * jnp.where(
            rst > 0, rst, SELU_ALPHA * (jnp.exp(jnp.minimum(rst, 0.0)) - 1.0))

    h1 = gat_layer(x_ref[...], wf1_ref[...], b1_ref[...])
    h2 = gat_layer(h1.reshape(NUM_GRAPHS, N_NODES, HIDDEN_FLAT),
                   wf2_ref[...], b2_ref[...])

    # per-graph (h*mask).mean(0), then sum over graphs / 7  ==  one global sum
    pooled = jnp.sum(h2 * mask_ref[...], axis=0, keepdims=True) * \
        jnp.float32(1.0 / (N_NODES * NUM_GRAPHS))                # (1, 64)

    logits = jnp.dot(pooled, wc_ref[...],
                     preferred_element_type=jnp.float32) + bc_ref[...]   # (1, C)
    mm = jnp.max(logits, axis=1, keepdims=True)
    ee = jnp.exp(logits - mm)
    out_ref[...] = ee / jnp.sum(ee, axis=1, keepdims=True)


@jax.jit
def multigat_fused(x3, edge, mask_big, srcsel, gblock, seg, hmaskb,
                   wf1, b1, wf2, b2, wc, bc):
    return pl.pallas_call(
        multigat_kernel,
        out_shape=jax.ShapeDtypeStruct((1, N_CLASSES), jnp.float32),
        in_specs=[_VMEM] * 13,
        out_specs=_VMEM,
        cost_estimate=pl.CostEstimate(flops=18_000_000,
                                      transcendentals=45_000,
                                      bytes_accessed=1_200_000),
    )(x3, edge, mask_big, srcsel, gblock, seg, hmaskb, wf1, b1, wf2, b2, wc, bc)


# -------------------------- host-side packing (cheap) --------------------------
def _blockify_attn(a):
    """(G, H, D) attention params -> (G, H*D, H) block-diagonal matrices so that
    el = z @ AL computes per-head additive-attention scores."""
    eye_h = jnp.eye(NUM_HEADS, dtype=a.dtype)                    # (H, H)
    out = a[:, :, :, None] * eye_h[:, None, :]                   # (G, H, D, H)
    return out.reshape(NUM_GRAPHS, NUM_HEADS * N_HIDDEN, NUM_HEADS)


def pack_model(params, graph_dict, mask):
    adjs = jnp.stack([graph_dict[t][0] for t in GRAPH_TYPES], axis=0)   # (G,N,N)
    x3 = jnp.stack([graph_dict[t][1] for t in GRAPH_TYPES], axis=0)     # (G,N,F)

    # edge slab: [(g,d), h*16+s] = adj_g[d, s]  (same adjacency for every head)
    edge = jnp.tile(adjs, (1, 1, NUM_HEADS)).reshape(R, SLAB)
    mask_big = jnp.tile(mask, (NUM_GRAPHS, 1))                          # (R, 1)

    lane = jnp.arange(SLAB)
    row = jnp.arange(R)
    col = jnp.arange(HIDDEN_FLAT)
    srcsel = (lane[None, :] % N_NODES == row[:, None] % N_NODES).astype(jnp.float32)
    gblock = (row[:, None] // N_NODES == row[None, :] // N_NODES).astype(jnp.float32)
    seg = (lane[:, None] // N_NODES == lane[None, :] // N_NODES).astype(jnp.float32)
    hmaskb = (lane[:, None] // N_NODES == col[None, :] // N_HIDDEN).astype(jnp.float32)
    exp_mat = (jnp.arange(NUM_HEADS)[:, None]
               == lane[None, :] // N_NODES).astype(jnp.float32)         # (H, SLAB)

    def stack_layer(li):
        w = jnp.stack([params[t][li][0] for t in GRAPH_TYPES], axis=0)  # (G,F,64)
        al = _blockify_attn(jnp.stack([params[t][li][1] for t in GRAPH_TYPES], axis=0))
        ar = _blockify_attn(jnp.stack([params[t][li][2] for t in GRAPH_TYPES], axis=0))
        # fold attention into the fc weight + expand to the 128-lane slab layout
        w_al = jnp.einsum('gfc,gch->gfh', w, al)                        # (G,F,H)
        w_ar = jnp.einsum('gfc,gch->gfh', w, ar)
        w_al_exp = jnp.einsum('gfh,hl->gfl', w_al, exp_mat)             # (G,F,128)
        w_ar_exp = jnp.einsum('gfh,hl->gfl', w_ar, exp_mat)
        wf = jnp.concatenate([w_ar_exp, w_al_exp, w], axis=2)           # (G,F,320)
        b = jnp.concatenate([params[t][li][3] for t in GRAPH_TYPES], axis=0)  # (G,64)
        b = jnp.repeat(b, N_NODES, axis=0)                              # (R,64)
        return wf, b

    wf1, b1 = stack_layer(0)
    wf2, b2 = stack_layer(1)
    return (x3, edge, mask_big, srcsel, gblock, seg, hmaskb,
            wf1, b1, wf2, b2, params["cls_w"], params["cls_b"])


# ----------------------------- parameter init ----------------------------------
def init_gat_params(key):
    layers = []
    f_in = IN_FEATS
    for _ in range(N_LAYERS):
        key, kw, kl, kr, kb = jax.random.split(key, 5)
        w = 0.1 * jax.random.normal(kw, (f_in, HIDDEN_FLAT), jnp.float32)
        al = 0.1 * jax.random.normal(kl, (NUM_HEADS, N_HIDDEN), jnp.float32)
        ar = 0.1 * jax.random.normal(kr, (NUM_HEADS, N_HIDDEN), jnp.float32)
        b = 0.1 * jax.random.normal(kb, (1, HIDDEN_FLAT), jnp.float32)
        layers.append((w, al, ar, b))
        f_in = HIDDEN_FLAT
    return layers


def init_params(key):
    params = {}
    for t in GRAPH_TYPES:
        key, sub = jax.random.split(key)
        params[t] = init_gat_params(sub)
    key, kw, kb = jax.random.split(key, 3)
    params["cls_w"] = 0.1 * jax.random.normal(kw, (HIDDEN_FLAT, N_CLASSES), jnp.float32)
    params["cls_b"] = 0.1 * jax.random.normal(kb, (1, N_CLASSES), jnp.float32)
    return params


# ----------------------------------- main ---------------------------------------
if __name__ == "__main__":
    root = jax.random.PRNGKey(0)
    pkey, dkey = jax.random.split(root)
    params = init_params(pkey)

    graph_dict = {}
    for t in GRAPH_TYPES:
        dkey, ka, kx = jax.random.split(dkey, 3)
        adj = jax.random.bernoulli(ka, 0.3, (N_NODES, N_NODES)).astype(jnp.float32)
        adj = jnp.maximum(adj, jnp.eye(N_NODES, dtype=jnp.float32))   # self-loops
        x = jax.random.normal(kx, (N_NODES, IN_FEATS), jnp.float32)
        graph_dict[t] = (adj, x)

    dkey, km = jax.random.split(dkey)
    mask = jax.random.bernoulli(km, 0.7, (N_NODES, 1)).astype(jnp.float32)

    packed = pack_model(params, graph_dict, mask)
    out = multigat_fused(*packed)
    out = jax.block_until_ready(out)

    assert out.shape == (1, N_CLASSES)
    assert bool(jnp.isfinite(out).all())
    assert abs(float(jnp.sum(out)) - 1.0) < 1e-4   # softmax sanity
    print("KERNEL_OK")
</pallas_src>

<mosaic_0001>
module attributes {stable_mosaic.version = 11 : i64} {
  func.func @multigat_kernel(%arg0: memref<7x16x32xf32, #tpu.memory_space<vmem>>, %arg1: memref<112x128xf32, #tpu.memory_space<vmem>>, %arg2: memref<112x1xf32, #tpu.memory_space<vmem>>, %arg3: memref<112x128xf32, #tpu.memory_space<vmem>>, %arg4: memref<112x112xf32, #tpu.memory_space<vmem>>, %arg5: memref<128x128xf32, #tpu.memory_space<vmem>>, %arg6: memref<128x64xf32, #tpu.memory_space<vmem>>, %arg7: memref<7x32x320xf32, #tpu.memory_space<vmem>>, %arg8: memref<112x64xf32, #tpu.memory_space<vmem>>, %arg9: memref<7x64x320xf32, #tpu.memory_space<vmem>>, %arg10: memref<112x64xf32, #tpu.memory_space<vmem>>, %arg11: memref<64x4xf32, #tpu.memory_space<vmem>>, %arg12: memref<1x4xf32, #tpu.memory_space<vmem>>, %arg13: memref<1x4xf32, #tpu.memory_space<vmem>>) attributes {dimension_semantics = [], scalar_prefetch = 0 : i64, scratch_operands = 0 : i64, tpu.core_type = #tpu.core_type<tc>} {
    %c0 = arith.constant 0 : index
    %c0_0 = arith.constant 0 : index
    %0 = vector.load %arg1[%c0, %c0_0] : memref<112x128xf32, #tpu.memory_space<vmem>>, vector<112x128xf32>
    %cst = arith.constant 0.000000e+00 : f32
    %1 = vector.broadcast %cst : f32 to vector<112x128xf32>
    %2 = arith.cmpf ogt, %0, %1 : vector<112x128xf32>
    %c0_1 = arith.constant 0 : index
    %c0_2 = arith.constant 0 : index
    %3 = vector.load %arg3[%c0_1, %c0_2] : memref<112x128xf32, #tpu.memory_space<vmem>>, vector<112x128xf32>
    %c0_3 = arith.constant 0 : index
    %c0_4 = arith.constant 0 : index
    %4 = vector.load %arg4[%c0_3, %c0_4] : memref<112x112xf32, #tpu.memory_space<vmem>>, vector<112x112xf32>
    %c0_5 = arith.constant 0 : index
    %c0_6 = arith.constant 0 : index
    %5 = vector.load %arg5[%c0_5, %c0_6] : memref<128x128xf32, #tpu.memory_space<vmem>>, vector<128x128xf32>
    %c0_7 = arith.constant 0 : index
    %c0_8 = arith.constant 0 : index
    %6 = vector.load %arg6[%c0_7, %c0_8] : memref<128x64xf32, #tpu.memory_space<vmem>>, vector<128x64xf32>
    %c0_9 = arith.constant 0 : index
    %c0_10 = arith.constant 0 : index
    %c0_11 = arith.constant 0 : index
    %7 = vector.load %arg0[%c0_9, %c0_10, %c0_11] : memref<7x16x32xf32, #tpu.memory_space<vmem>>, vector<7x16x32xf32>
    %c0_12 = arith.constant 0 : index
    %c0_13 = arith.constant 0 : index
    %c0_14 = arith.constant 0 : index
    %8 = vector.load %arg7[%c0_12, %c0_13, %c0_14] : memref<7x32x320xf32, #tpu.memory_space<vmem>>, vector<7x32x320xf32>
    %c0_15 = arith.constant 0 : index
    %c0_16 = arith.constant 0 : index
    %9 = vector.load %arg8[%c0_15, %c0_16] : memref<112x64xf32, #tpu.memory_space<vmem>>, vector<112x64xf32>
    "tpu.trace_start"() <{level = 10 : i32, message = "gnf,gfo->gno"}> : () -> ()
    %cst_17 = arith.constant dense<0.000000e+00> : vector<7x16x320xf32>
    %10 = tpu.matmul %7, %8, %cst_17 {dimension_numbers = #tpu.dot_dimension_numbers<[2], [1], [1], [2], [0, 0, 0, 1, 1, 2], [0], [0]>} : vector<7x16x32xf32>, vector<7x32x320xf32>, vector<7x16x320xf32> -> vector<7x16x320xf32>
    "tpu.trace_stop"() : () -> ()
    %11 = vector.extract_strided_slice %10 {offsets = [0, 0, 0], sizes = [7, 16, 128], strides = [1, 1, 1]} : vector<7x16x320xf32> to vector<7x16x128xf32>
    %12 = vector.shape_cast %11 : vector<7x16x128xf32> to vector<112x128xf32>
    %13 = vector.extract_strided_slice %10 {offsets = [0, 0, 128], sizes = [7, 16, 128], strides = [1, 1, 1]} : vector<7x16x320xf32> to vector<7x16x128xf32>
    %14 = vector.shape_cast %13 : vector<7x16x128xf32> to vector<112x128xf32>
    %15 = vector.extract_strided_slice %10 {offsets = [0, 0, 256], sizes = [7, 16, 64], strides = [1, 1, 1]} : vector<7x16x320xf32> to vector<7x16x64xf32>
    %16 = arith.mulf %14, %3 : vector<112x128xf32>
    %cst_18 = arith.constant dense<0.000000e+00> : vector<112x128xf32>
    %17 = tpu.matmul %4, %16, %cst_18 {dimension_numbers = #tpu.dot_dimension_numbers<[1], [0], [0], [1], [0, 0, 1, 1], [], []>} : vector<112x112xf32>, vector<112x128xf32>, vector<112x128xf32> -> vector<112x128xf32>
    %18 = arith.addf %12, %17 : vector<112x128xf32>
    %cst_19 = arith.constant 0.000000e+00 : f32
    %19 = vector.broadcast %cst_19 : f32 to vector<112x128xf32>
    %20 = arith.cmpf ogt, %18, %19 : vector<112x128xf32>
    %cst_20 = arith.constant 2.000000e-01 : f32
    %21 = vector.broadcast %cst_20 : f32 to vector<112x128xf32>
    %22 = arith.mulf %21, %18 : vector<112x128xf32>
    %23 = arith.select %20, %18, %22 : vector<112x128xi1>, vector<112x128xf32>
    %cst_21 = arith.constant -1.000000e+30 : f32
    %24 = vector.broadcast %cst_21 : f32 to vector<112x128xf32>
    %25 = arith.select %2, %23, %24 : vector<112x128xi1>, vector<112x128xf32>
    %cst_22 = arith.constant dense<0xFF800000> : vector<112xf32>
    %26 = vector.multi_reduction <maximumf>, %25, %cst_22 [1] : vector<112x128xf32> to vector<112xf32>
    %27 = vector.shape_cast %26 : vector<112xf32> to vector<112x1xf32>
    %28 = vector.broadcast %27 : vector<112x1xf32> to vector<112x128xf32>
    %29 = arith.subf %25, %28 : vector<112x128xf32>
    %30 = math.exp %29 : vector<112x128xf32>
    %cst_23 = arith.constant 0.000000e+00 : f32
    %31 = vector.broadcast %cst_23 : f32 to vector<112x128xf32>
    %32 = arith.select %2, %30, %31 : vector<112x128xi1>, vector<112x128xf32>
    %cst_24 = arith.constant dense<0.000000e+00> : vector<112x128xf32>
    %33 = tpu.matmul %32, %5, %cst_24 {dimension_numbers = #tpu.dot_dimension_numbers<[1], [0], [0], [1], [0, 0, 1, 1], [], []>} : vector<112x128xf32>, vector<128x128xf32>, vector<112x128xf32> -> vector<112x128xf32>
    %cst_25 = arith.constant 0.000000e+00 : f32
    %34 = vector.broadcast %cst_25 : f32 to vector<112x128xf32>
    %35 = arith.cmpf ogt, %33, %34 : vector<112x128xf32>
    %cst_26 = arith.constant 1.000000e+00 : f32
    %36 = vector.broadcast %cst_26 : f32 to vector<112x128xf32>
    %37 = arith.select %35, %33, %36 : vector<112x128xi1>, vector<112x128xf32>
    %38 = arith.divf %32, %37 : vector<112x128xf32>
    %39 = vector.shape_cast %38 : vector<112x128xf32> to vector<7x16x128xf32>
    %40 = tpu.concatenate %15, %15, %15, %15, %15, %15, %15, %15 in 1 : vector<7x16x64xf32>, vector<7x16x64xf32>, vector<7x16x64xf32>, vector<7x16x64xf32>, vector<7x16x64xf32>, vector<7x16x64xf32>, vector<7x16x64xf32>, vector<7x16x64xf32> -> vector<7x128x64xf32>
    %41 = vector.shape_cast %6 : vector<128x64xf32> to vector<1x128x64xf32>
    %42 = vector.broadcast %41 : vector<1x128x64xf32> to vector<7x128x64xf32>
    %43 = arith.mulf %40, %42 : vector<7x128x64xf32>
    "tpu.trace_start"() <{level = 10 : i32, message = "gdl,glc->gdc"}> : () -> ()
    %cst_27 = arith.constant dense<0.000000e+00> : vector<7x16x64xf32>
    %44 = tpu.matmul %39, %43, %cst_27 {dimension_numbers = #tpu.dot_dimension_numbers<[2], [1], [1], [2], [0, 0, 0, 1, 1, 2], [0], [0]>} : vector<7x16x128xf32>, vector<7x128x64xf32>, vector<7x16x64xf32> -> vector<7x16x64xf32>
    "tpu.trace_stop"() : () -> ()
    %45 = vector.shape_cast %44 : vector<7x16x64xf32> to vector<112x64xf32>
    %46 = arith.addf %45, %9 : vector<112x64xf32>
    %cst_28 = arith.constant 0.000000e+00 : f32
    %47 = vector.broadcast %cst_28 : f32 to vector<112x64xf32>
    %48 = arith.cmpf ogt, %46, %47 : vector<112x64xf32>
    %cst_29 = arith.constant 0.000000e+00 : f32
    %49 = vector.broadcast %cst_29 : f32 to vector<112x64xf32>
    %50 = arith.minimumf %46, %49 : vector<112x64xf32>
    %51 = math.exp %50 : vector<112x64xf32>
    %cst_30 = arith.constant 1.000000e+00 : f32
    %52 = vector.broadcast %cst_30 : f32 to vector<112x64xf32>
    %53 = arith.subf %51, %52 : vector<112x64xf32>
    %cst_31 = arith.constant 1.67326319 : f32
    %54 = vector.broadcast %cst_31 : f32 to vector<112x64xf32>
    %55 = arith.mulf %54, %53 : vector<112x64xf32>
    %56 = arith.select %48, %46, %55 : vector<112x64xi1>, vector<112x64xf32>
    %cst_32 = arith.constant 1.05070102 : f32
    %57 = vector.broadcast %cst_32 : f32 to vector<112x64xf32>
    %58 = arith.mulf %57, %56 : vector<112x64xf32>
    %59 = vector.shape_cast %58 : vector<112x64xf32> to vector<7x16x64xf32>
    %c0_33 = arith.constant 0 : index
    %c0_34 = arith.constant 0 : index
    %c0_35 = arith.constant 0 : index
    %60 = vector.load %arg9[%c0_33, %c0_34, %c0_35] : memref<7x64x320xf32, #tpu.memory_space<vmem>>, vector<7x64x320xf32>
    %c0_36 = arith.constant 0 : index
    %c0_37 = arith.constant 0 : index
    %61 = vector.load %arg10[%c0_36, %c0_37] : memref<112x64xf32, #tpu.memory_space<vmem>>, vector<112x64xf32>
    "tpu.trace_start"() <{level = 10 : i32, message = "gnf,gfo->gno"}> : () -> ()
    %cst_38 = arith.constant dense<0.000000e+00> : vector<7x16x320xf32>
    %62 = tpu.matmul %59, %60, %cst_38 {dimension_numbers = #tpu.dot_dimension_numbers<[2], [1], [1], [2], [0, 0, 0, 1, 1, 2], [0], [0]>} : vector<7x16x64xf32>, vector<7x64x320xf32>, vector<7x16x320xf32> -> vector<7x16x320xf32>
    "tpu.trace_stop"() : () -> ()
    %63 = vector.extract_strided_slice %62 {offsets = [0, 0, 0], sizes = [7, 16, 128], strides = [1, 1, 1]} : vector<7x16x320xf32> to vector<7x16x128xf32>
    %64 = vector.shape_cast %63 : vector<7x16x128xf32> to vector<112x128xf32>
    %65 = vector.extract_strided_slice %62 {offsets = [0, 0, 128], sizes = [7, 16, 128], strides = [1, 1, 1]} : vector<7x16x320xf32> to vector<7x16x128xf32>
    %66 = vector.shape_cast %65 : vector<7x16x128xf32> to vector<112x128xf32>
    %67 = vector.extract_strided_slice %62 {offsets = [0, 0, 256], sizes = [7, 16, 64], strides = [1, 1, 1]} : vector<7x16x320xf32> to vector<7x16x64xf32>
    %68 = arith.mulf %66, %3 : vector<112x128xf32>
    %cst_39 = arith.constant dense<0.000000e+00> : vector<112x128xf32>
    %69 = tpu.matmul %4, %68, %cst_39 {dimension_numbers = #tpu.dot_dimension_numbers<[1], [0], [0], [1], [0, 0, 1, 1], [], []>} : vector<112x112xf32>, vector<112x128xf32>, vector<112x128xf32> -> vector<112x128xf32>
    %70 = arith.addf %64, %69 : vector<112x128xf32>
    %cst_40 = arith.constant 0.000000e+00 : f32
    %71 = vector.broadcast %cst_40 : f32 to vector<112x128xf32>
    %72 = arith.cmpf ogt, %70, %71 : vector<112x128xf32>
    %cst_41 = arith.constant 2.000000e-01 : f32
    %73 = vector.broadcast %cst_41 : f32 to vector<112x128xf32>
    %74 = arith.mulf %73, %70 : vector<112x128xf32>
    %75 = arith.select %72, %70, %74 : vector<112x128xi1>, vector<112x128xf32>
    %cst_42 = arith.constant -1.000000e+30 : f32
    %76 = vector.broadcast %cst_42 : f32 to vector<112x128xf32>
    %77 = arith.select %2, %75, %76 : vector<112x128xi1>, vector<112x128xf32>
    %cst_43 = arith.constant dense<0xFF800000> : vector<112xf32>
    %78 = vector.multi_reduction <maximumf>, %77, %cst_43 [1] : vector<112x128xf32> to vector<112xf32>
    %79 = vector.shape_cast %78 : vector<112xf32> to vector<112x1xf32>
    %80 = vector.broadcast %79 : vector<112x1xf32> to vector<112x128xf32>
    %81 = arith.subf %77, %80 : vector<112x128xf32>
    %82 = math.exp %81 : vector<112x128xf32>
    %cst_44 = arith.constant 0.000000e+00 : f32
    %83 = vector.broadcast %cst_44 : f32 to vector<112x128xf32>
    %84 = arith.select %2, %82, %83 : vector<112x128xi1>, vector<112x128xf32>
    %cst_45 = arith.constant dense<0.000000e+00> : vector<112x128xf32>
    %85 = tpu.matmul %84, %5, %cst_45 {dimension_numbers = #tpu.dot_dimension_numbers<[1], [0], [0], [1], [0, 0, 1, 1], [], []>} : vector<112x128xf32>, vector<128x128xf32>, vector<112x128xf32> -> vector<112x128xf32>
    %cst_46 = arith.constant 0.000000e+00 : f32
    %86 = vector.broadcast %cst_46 : f32 to vector<112x128xf32>
    %87 = arith.cmpf ogt, %85, %86 : vector<112x128xf32>
    %cst_47 = arith.constant 1.000000e+00 : f32
    %88 = vector.broadcast %cst_47 : f32 to vector<112x128xf32>
    %89 = arith.select %87, %85, %88 : vector<112x128xi1>, vector<112x128xf32>
    %90 = arith.divf %84, %89 : vector<112x128xf32>
    %91 = vector.shape_cast %90 : vector<112x128xf32> to vector<7x16x128xf32>
    %92 = tpu.concatenate %67, %67, %67, %67, %67, %67, %67, %67 in 1 : vector<7x16x64xf32>, vector<7x16x64xf32>, vector<7x16x64xf32>, vector<7x16x64xf32>, vector<7x16x64xf32>, vector<7x16x64xf32>, vector<7x16x64xf32>, vector<7x16x64xf32> -> vector<7x128x64xf32>
    %93 = vector.shape_cast %6 : vector<128x64xf32> to vector<1x128x64xf32>
    %94 = vector.broadcast %93 : vector<1x128x64xf32> to vector<7x128x64xf32>
    %95 = arith.mulf %92, %94 : vector<7x128x64xf32>
    "tpu.trace_start"() <{level = 10 : i32, message = "gdl,glc->gdc"}> : () -> ()
    %cst_48 = arith.constant dense<0.000000e+00> : vector<7x16x64xf32>
    %96 = tpu.matmul %91, %95, %cst_48 {dimension_numbers = #tpu.dot_dimension_numbers<[2], [1], [1], [2], [0, 0, 0, 1, 1, 2], [0], [0]>} : vector<7x16x128xf32>, vector<7x128x64xf32>, vector<7x16x64xf32> -> vector<7x16x64xf32>
    "tpu.trace_stop"() : () -> ()
    %97 = vector.shape_cast %96 : vector<7x16x64xf32> to vector<112x64xf32>
    %98 = arith.addf %97, %61 : vector<112x64xf32>
    %cst_49 = arith.constant 0.000000e+00 : f32
    %99 = vector.broadcast %cst_49 : f32 to vector<112x64xf32>
    %100 = arith.cmpf ogt, %98, %99 : vector<112x64xf32>
    %cst_50 = arith.constant 0.000000e+00 : f32
    %101 = vector.broadcast %cst_50 : f32 to vector<112x64xf32>
    %102 = arith.minimumf %98, %101 : vector<112x64xf32>
    %103 = math.exp %102 : vector<112x64xf32>
    %cst_51 = arith.constant 1.000000e+00 : f32
    %104 = vector.broadcast %cst_51 : f32 to vector<112x64xf32>
    %105 = arith.subf %103, %104 : vector<112x64xf32>
    %cst_52 = arith.constant 1.67326319 : f32
    %106 = vector.broadcast %cst_52 : f32 to vector<112x64xf32>
    %107 = arith.mulf %106, %105 : vector<112x64xf32>
    %108 = arith.select %100, %98, %107 : vector<112x64xi1>, vector<112x64xf32>
    %cst_53 = arith.constant 1.05070102 : f32
    %109 = vector.broadcast %cst_53 : f32 to vector<112x64xf32>
    %110 = arith.mulf %109, %108 : vector<112x64xf32>
    %c0_54 = arith.constant 0 : index
    %c0_55 = arith.constant 0 : index
    %111 = vector.load %arg2[%c0_54, %c0_55] : memref<112x1xf32, #tpu.memory_space<vmem>>, vector<112x1xf32>
    %112 = vector.broadcast %111 : vector<112x1xf32> to vector<112x64xf32>
    %113 = arith.mulf %110, %112 : vector<112x64xf32>
    %cst_56 = arith.constant dense<0.000000e+00> : vector<64xf32>
    %114 = vector.multi_reduction <add>, %113, %cst_56 [0] : vector<112x64xf32> to vector<64xf32>
    %115 = vector.shape_cast %114 : vector<64xf32> to vector<1x64xf32>
    %cst_57 = arith.constant 0.00892857183 : f32
    %116 = vector.broadcast %cst_57 : f32 to vector<1x64xf32>
    %117 = arith.mulf %115, %116 : vector<1x64xf32>
    %c0_58 = arith.constant 0 : index
    %c0_59 = arith.constant 0 : index
    %118 = vector.load %arg11[%c0_58, %c0_59] : memref<64x4xf32, #tpu.memory_space<vmem>>, vector<64x4xf32>
    %cst_60 = arith.constant dense<0.000000e+00> : vector<1x4xf32>
    %119 = tpu.matmul %117, %118, %cst_60 {dimension_numbers = #tpu.dot_dimension_numbers<[1], [0], [0], [1], [0, 0, 1, 1], [], []>} : vector<1x64xf32>, vector<64x4xf32>, vector<1x4xf32> -> vector<1x4xf32>
    %c0_61 = arith.constant 0 : index
    %c0_62 = arith.constant 0 : index
    %120 = vector.load %arg12[%c0_61, %c0_62] : memref<1x4xf32, #tpu.memory_space<vmem>>, vector<1x4xf32>
    %121 = arith.addf %119, %120 : vector<1x4xf32>
    %cst_63 = arith.constant dense<0xFF800000> : vector<1xf32>
    %122 = vector.multi_reduction <maximumf>, %121, %cst_63 [1] : vector<1x4xf32> to vector<1xf32>
    %123 = vector.shape_cast %122 : vector<1xf32> to vector<1x1xf32>
    %124 = vector.broadcast %123 : vector<1x1xf32> to vector<1x4xf32>
    %125 = arith.subf %121, %124 : vector<1x4xf32>
    %126 = math.exp %125 : vector<1x4xf32>
    %cst_64 = arith.constant dense<0.000000e+00> : vector<1xf32>
    %127 = vector.multi_reduction <add>, %126, %cst_64 [1] : vector<1x4xf32> to vector<1xf32>
    %128 = vector.shape_cast %127 : vector<1xf32> to vector<1x1xf32>
    %129 = vector.broadcast %128 : vector<1x1xf32> to vector<1x4xf32>
    %130 = arith.divf %126, %129 : vector<1x4xf32>
    %c0_65 = arith.constant 0 : index
    %c0_66 = arith.constant 0 : index
    %131 = vector.load %arg13[%c0_65, %c0_66] : memref<1x4xf32, #tpu.memory_space<vmem>>, vector<1x4xf32>
    tpu.vector_store %arg13[%c0_65, %c0_66], %130 {strides = array<i32>} : memref<1x4xf32, #tpu.memory_space<vmem>>, vector<1x4xf32>,
    return
  }
}

</mosaic_0001>

<llo_original>
// kernel: multigat_fused.1
$region0: #{multigat_fused.1}
  #allocation0 [shape = 'u32[]', space=smem, size = 0x4, offset = 0x4, fixed_abs, tag = 'smem constant byte address 0x4 - core index']
  #allocation1 [shape = 'u32[72,128]{1,0:T(1,128)}', space=vmem, size = 0x9000, scoped, tag = 'internal scratch']
  %s0 = inlined_call_operand.hbm [shape: f32[7,16,32], index: 0, kind: input, shape index: {}]
  %s1 = inlined_call_operand.hbm [shape: f32[112,128], index: 1, kind: input, shape index: {}]
  %s2 = inlined_call_operand.vmem [shape: f32[112,1], index: 2, kind: input, shape index: {}]
  %s3 = inlined_call_operand.hbm [shape: f32[112,128], index: 3, kind: input, shape index: {}]
  %s4 = inlined_call_operand.hbm [shape: f32[112,112], index: 4, kind: input, shape index: {}]
  %s5 = inlined_call_operand.hbm [shape: f32[128,128], index: 5, kind: input, shape index: {}]
  %s6 = inlined_call_operand.vmem [shape: f32[128,64], index: 6, kind: input, shape index: {}]
  %s7 = inlined_call_operand.vmem [shape: f32[7,32,320], index: 7, kind: input, shape index: {}]
  %s8 = inlined_call_operand.vmem [shape: f32[112,64], index: 8, kind: input, shape index: {}]
  %s9 = inlined_call_operand.hbm [shape: f32[7,64,320], index: 9, kind: input, shape index: {}]
  %s10 = inlined_call_operand.vmem [shape: f32[112,64], index: 10, kind: input, shape index: {}]
  %s11 = inlined_call_operand.vmem [shape: f32[64,4], index: 11, kind: input, shape index: {}]
  %s12 = inlined_call_operand.vmem [shape: f32[1,4], index: 12, kind: input, shape index: {}]
  %s13 = inlined_call_operand.hbm [shape: f32[1,4], index: 13, kind: output, shape index: {}]
  %s14 = sld [smem:[#allocation0]]
  $region86: #{multigat_fused.1} parent=0
    _
  %s16 = ssub.s32 1, %s14
  %s17 = scalar_select 0, %s16, %s14
  $region1: #{multigat_fused.1} parent=0
    #allocation2 [shape = 'u8[57344]{0}', space=vmem, size = 0xe000, scoped, tag = 'input window, operand 0, single buffered']
    #allocation3 [shape = 's32[1]{0}', space=sflag, size = 0x4, scoped, tag = 'scoped memory for multigat_fused.1']
    #allocation4 [shape = 's32[1]{0}', space=sflag, size = 0x4, scoped, tag = 'scoped memory for multigat_fused.1']
    #allocation5 [shape = 'u8[57344]{0}', space=vmem, size = 0xe000, scoped, tag = 'input window, operand 1, single buffered']
    #allocation6 [shape = 's32[1]{0}', space=sflag, size = 0x4, scoped, tag = 'scoped memory for multigat_fused.1']
    #allocation7 [shape = 'u8[57344]{0}', space=vmem, size = 0xe000, scoped, tag = 'input window, operand 3, single buffered']
    #allocation8 [shape = 'u8[57344]{0}', space=vmem, size = 0xe000, scoped, tag = 'input window, operand 4, single buffered']
    #allocation9 [shape = 's32[1]{0}', space=sflag, size = 0x4, scoped, tag = 'scoped memory for multigat_fused.1']
    #allocation10 [shape = 'u8[65536]{0}', space=vmem, size = 0x10000, scoped, tag = 'input window, operand 5, single buffered']
    #allocation11 [shape = 'u8[688128]{0}', space=vmem, size = 0xa8000, scoped, tag = 'input window, operand 9, single buffered']
    #allocation12 [shape = 's32[1]{0}', space=sflag, size = 0x4, scoped, tag = 'scoped memory for multigat_fused.1']
    #allocation13 [shape = 'u8[512]{0}', space=vmem, size = 0x400, scoped, tag = 'output window, operand 0, single buffered']
    %18 = vsyncpa [#allocation3], 0
    %19 = vsyncpa [#allocation6], 0
    %20 = vsyncpa [#allocation9], 0
    %21 = vsyncpa [#allocation12], 0
    %22 = vsyncpa [#allocation4], 0
    // Predicated region
    $region2: #{multigat_fused.1} parent=1 // pred_check
      _
    $region3: #{multigat_fused.1} parent=1 // pred_check_branch
      %24 = sbr.rel (0) target = $region5
    $region4: #{multigat_fused.1} parent=1 // pred_region
      %26 = vsyncadd [#allocation3], 0
      %s27 = sshll.u32 %s0, 4
      %s28 = int_to_ptr.hbm [resolvable:$true] %s27
      %s29 = sshll.u32 [#allocation2], 4
      %s30 = int_to_ptr.vmem [resolvable:$true] %s29
      %35 = dma.hbm_to_vmem [thread:$0]  %s28, 1792, %s30, [#allocation3], 128, 128, 8
    $region5: #{multigat_fused.1} parent=1 // pred_fallthru
      _
    // Predicated region
    $region6: #{multigat_fused.1} parent=1 // pred_check
      _
    $region7: #{multigat_fused.1} parent=1 // pred_check_branch
      %37 = sbr.rel (0) target = $region9
    $region8: #{multigat_fused.1} parent=1 // pred_region
      %39 = vsyncadd [#allocation6], 0
      %s40 = sshll.u32 %s1, 4
      %s41 = int_to_ptr.hbm [resolvable:$true] %s40
      %s42 = sshll.u32 [#allocation5], 4
      %s43 = int_to_ptr.vmem [resolvable:$true] %s42
      %48 = dma.hbm_to_vmem [thread:$0]  %s41, 1792, %s43, [#allocation6], 128, 128, 8
    $region9: #{multigat_fused.1} parent=1 // pred_fallthru
      _
    // Predicated region
    $region10: #{multigat_fused.1} parent=1 // pred_check
      _
    $region11: #{multigat_fused.1} parent=1 // pred_check_branch
      %50 = sbr.rel (0) target = $region13
    $region12: #{multigat_fused.1} parent=1 // pred_region
      _
    $region13: #{multigat_fused.1} parent=1 // pred_fallthru
      _
    // Predicated region
    $region14: #{multigat_fused.1} parent=1 // pred_check
      _
    $region15: #{multigat_fused.1} parent=1 // pred_check_branch
      %52 = sbr.rel (0) target = $region17
    $region16: #{multigat_fused.1} parent=1 // pred_region
      %54 = vsyncadd [#allocation6], 0
      %s55 = sshll.u32 %s3, 4
      %s56 = int_to_ptr.hbm [resolvable:$true] %s55
      %s57 = sshll.u32 [#allocation7], 4
      %s58 = int_to_ptr.vmem [resolvable:$true] %s57
      %63 = dma.hbm_to_vmem [thread:$0]  %s56, 1792, %s58, [#allocation6], 128, 128, 8
    $region17: #{multigat_fused.1} parent=1 // pred_fallthru
      _
    // Predicated region
    $region18: #{multigat_fused.1} parent=1 // pred_check
      _
    $region19: #{multigat_fused.1} parent=1 // pred_check_branch
      %65 = sbr.rel (0) target = $region21
    $region20: #{multigat_fused.1} parent=1 // pred_region
      %67 = vsyncadd [#allocation9], 0
      %s68 = sshll.u32 %s4, 4
      %s69 = int_to_ptr.hbm [resolvable:$true] %s68
      %s70 = sshll.u32 [#allocation8], 4
      %s71 = int_to_ptr.vmem [resolvable:$true] %s70
      %76 = dma.hbm_to_vmem [thread:$0]  %s69, 1792, %s71, [#allocation9], 128, 128, 8
    $region21: #{multigat_fused.1} parent=1 // pred_fallthru
      _
    // Predicated region
    $region22: #{multigat_fused.1} parent=1 // pred_check
      _
    $region23: #{multigat_fused.1} parent=1 // pred_check_branch
      %78 = sbr.rel (0) target = $region25
    $region24: #{multigat_fused.1} parent=1 // pred_region
      %80 = vsyncadd [#allocation9], 0
      %s81 = sshll.u32 %s5, 4
      %s82 = int_to_ptr.hbm [resolvable:$true] %s81
      %s83 = sshll.u32 [#allocation10], 4
      %s84 = int_to_ptr.vmem [resolvable:$true] %s83
      %89 = dma.hbm_to_vmem [thread:$0]  %s82, 2048, %s84, [#allocation9], 128, 128, 8
    $region25: #{multigat_fused.1} parent=1 // pred_fallthru
      _
    // Predicated region
    $region26: #{multigat_fused.1} parent=1 // pred_check
      _
    $region27: #{multigat_fused.1} parent=1 // pred_check_branch
      %91 = sbr.rel (0) target = $region29
    $region28: #{multigat_fused.1} parent=1 // pred_region
      _
    $region29: #{multigat_fused.1} parent=1 // pred_fallthru
      _
    // Predicated region
    $region30: #{multigat_fused.1} parent=1 // pred_check
      _
    $region31: #{multigat_fused.1} parent=1 // pred_check_branch
      %93 = sbr.rel (0) target = $region33
    $region32: #{multigat_fused.1} parent=1 // pred_region
      _
    $region33: #{multigat_fused.1} parent=1 // pred_fallthru
      _
    // Predicated region
    $region34: #{multigat_fused.1} parent=1 // pred_check
      _
    $region35: #{multigat_fused.1} parent=1 // pred_check_branch
      %95 = sbr.rel (0) target = $region37
    $region36: #{multigat_fused.1} parent=1 // pred_region
      _
    $region37: #{multigat_fused.1} parent=1 // pred_fallthru
      _
    // Predicated region
    $region38: #{multigat_fused.1} parent=1 // pred_check
      _
    $region39: #{multigat_fused.1} parent=1 // pred_check_branch
      %97 = sbr.rel (0) target = $region41
    $region40: #{multigat_fused.1} parent=1 // pred_region
      %99 = vsyncadd [#allocation12], 0
      %s100 = sshll.u32 %s9, 4
      %s101 = int_to_ptr.hbm [resolvable:$true] %s100
      %s102 = sshll.u32 [#allocation11], 4
      %s103 = int_to_ptr.vmem [resolvable:$true] %s102
      %108 = dma.hbm_to_vmem [thread:$0]  %s101, 21504, %s103, [#allocation12], 384, 384, 24
    $region41: #{multigat_fused.1} parent=1 // pred_fallthru
      _
    // Predicated region
    $region42: #{multigat_fused.1} parent=1 // pred_check
      _
    $region43: #{multigat_fused.1} parent=1 // pred_check_branch
      %110 = sbr.rel (0) target = $region45
    $region44: #{multigat_fused.1} parent=1 // pred_region
      _
    $region45: #{multigat_fused.1} parent=1 // pred_fallthru
      _
    // Predicated region
    $region46: #{multigat_fused.1} parent=1 // pred_check
      _
    $region47: #{multigat_fused.1} parent=1 // pred_check_branch
      %112 = sbr.rel (0) target = $region49
    $region48: #{multigat_fused.1} parent=1 // pred_region
      _
    $region49: #{multigat_fused.1} parent=1 // pred_fallthru
      _
    // Predicated region
    $region50: #{multigat_fused.1} parent=1 // pred_check
      _
    $region51: #{multigat_fused.1} parent=1 // pred_check_branch
      %114 = sbr.rel (0) target = $region53
    $region52: #{multigat_fused.1} parent=1 // pred_region
      _
    $region53: #{multigat_fused.1} parent=1 // pred_fallthru
      _
    // Predicated region
    $region54: #{multigat_fused.1} parent=1 // pred_check
      _
    $region55: #{multigat_fused.1} parent=1 // pred_check_branch
      %116 = sbr.rel (0) target = $region57
    $region56: #{multigat_fused.1} parent=1 // pred_region
      %118 = dma.done [#allocation3], 1792
    $region57: #{multigat_fused.1} parent=1 // pred_fallthru
      _
    // Predicated region
    $region58: #{multigat_fused.1} parent=1 // pred_check
      _
    $region59: #{multigat_fused.1} parent=1 // pred_check_branch
      %120 = sbr.rel (0) target = $region61
    $region60: #{multigat_fused.1} parent=1 // pred_region
      %122 = dma.done [#allocation6], 1792
    $region61: #{multigat_fused.1} parent=1 // pred_fallthru
      _
    // Predicated region
    $region62: #{multigat_fused.1} parent=1 // pred_check
      _
    $region63: #{multigat_fused.1} parent=1 // pred_check_branch
      %124 = sbr.rel (0) target = $region65
    $region64: #{multigat_fused.1} parent=1 // pred_region
      %126 = dma.done [#allocation6], 1792
    $region65: #{multigat_fused.1} parent=1 // pred_fallthru
      _
    // Predicated region
    $region66: #{multigat_fused.1} parent=1 // pred_check
      _
    $region67: #{multigat_fused.1} parent=1 // pred_check_branch
      %128 = sbr.rel (0) target = $region69
    $region68: #{multigat_fused.1} parent=1 // pred_region
      %130 = dma.done [#allocation9], 1792
    $region69: #{multigat_fused.1} parent=1 // pred_fallthru
      _
    // Predicated region
    $region70: #{multigat_fused.1} parent=1 // pred_check
      _
    $region71: #{multigat_fused.1} parent=1 // pred_check_branch
      %132 = sbr.rel (0) target = $region73
    $region72: #{multigat_fused.1} parent=1 // pred_region
      %134 = dma.done [#allocation9], 2048
    $region73: #{multigat_fused.1} parent=1 // pred_fallthru
      _
    // Predicated region
    $region74: #{multigat_fused.1} parent=1 // pred_check
      _
    $region75: #{multigat_fused.1} parent=1 // pred_check_branch
      %136 = sbr.rel (0) target = $region77
    $region76: #{multigat_fused.1} parent=1 // pred_region
      %138 = dma.done [#allocation12], 21504
    $region77: #{multigat_fused.1} parent=1 // pred_fallthru
      _
    %v139 = vld [vmem:[#allocation5] sm:$0xff]
    %v140 = vld [vmem:[#allocation5 + $0x8] sm:$0xff]
    %v141 = vld [vmem:[#allocation5 + $0x10] sm:$0xff]
    %v142 = vld [vmem:[#allocation5 + $0x18] sm:$0xff]
    %v143 = vld [vmem:[#allocation5 + $0x20] sm:$0xff]
    %v144 = vld [vmem:[#allocation5 + $0x28] sm:$0xff]
    %v145 = vld [vmem:[#allocation5 + $0x30] sm:$0xff]
    %v146 = vld [vmem:[#allocation5 + $0x38] sm:$0xff]
    %v147 = vld [vmem:[#allocation5 + $0x40] sm:$0xff]
    %v148 = vld [vmem:[#allocation5 + $0x48] sm:$0xff]
    %v149 = vld [vmem:[#allocation5 + $0x50] sm:$0xff]
    %v150 = vld [vmem:[#allocation5 + $0x58] sm:$0xff]
    %v151 = vld [vmem:[#allocation5 + $0x60] sm:$0xff]
    %v152 = vld [vmem:[#allocation5 + $0x68] sm:$0xff]
    %vm153 = vcmp.gt.f32.partialorder %v139, 0.0
    %vm154 = vcmp.gt.f32.partialorder %v140, 0.0
    %vm155 = vcmp.gt.f32.partialorder %v141, 0.0
    %vm156 = vcmp.gt.f32.partialorder %v142, 0.0
    %vm157 = vcmp.gt.f32.partialorder %v143, 0.0
    %vm158 = vcmp.gt.f32.partialorder %v144, 0.0
    %vm159 = vcmp.gt.f32.partialorder %v145, 0.0
    %vm160 = vcmp.gt.f32.partialorder %v146, 0.0
    %vm161 = vcmp.gt.f32.partialorder %v147, 0.0
    %vm162 = vcmp.gt.f32.partialorder %v148, 0.0
    %vm163 = vcmp.gt.f32.partialorder %v149, 0.0
    %vm164 = vcmp.gt.f32.partialorder %v150, 0.0
    %vm165 = vcmp.gt.f32.partialorder %v151, 0.0
    %vm166 = vcmp.gt.f32.partialorder %v152, 0.0
    %v167 = vld [vmem:[#allocation7] sm:$0xff]
    %v168 = vld [vmem:[#allocation7 + $0x8] sm:$0xff]
    %v169 = vld [vmem:[#allocation7 + $0x10] sm:$0xff]
    %v170 = vld [vmem:[#allocation7 + $0x18] sm:$0xff]
    %v171 = vld [vmem:[#allocation7 + $0x20] sm:$0xff]
    %v172 = vld [vmem:[#allocation7 + $0x28] sm:$0xff]
    %v173 = vld [vmem:[#allocation7 + $0x30] sm:$0xff]
    %v174 = vld [vmem:[#allocation7 + $0x38] sm:$0xff]
    %v175 = vld [vmem:[#allocation7 + $0x40] sm:$0xff]
    %v176 = vld [vmem:[#allocation7 + $0x48] sm:$0xff]
    %v177 = vld [vmem:[#allocation7 + $0x50] sm:$0xff]
    %v178 = vld [vmem:[#allocation7 + $0x58] sm:$0xff]
    %v179 = vld [vmem:[#allocation7 + $0x60] sm:$0xff]
    %v180 = vld [vmem:[#allocation7 + $0x68] sm:$0xff]
    %v181 = vld [vmem:[#allocation8] sm:$0xff]
    %v182 = vld [vmem:[#allocation8 + $0x8] sm:$0xff]
    %v183 = vld [vmem:[#allocation8 + $0x10] sm:$0xff]
    %v184 = vld [vmem:[#allocation8 + $0x18] sm:$0xff]
    %v185 = vld [vmem:[#allocation8 + $0x20] sm:$0xff]
    %v186 = vld [vmem:[#allocation8 + $0x28] sm:$0xff]
    %v187 = vld [vmem:[#allocation8 + $0x30] sm:$0xff]
    %v188 = vld [vmem:[#allocation8 + $0x38] sm:$0xff]
    %v189 = vld [vmem:[#allocation8 + $0x40] sm:$0xff]
    %v190 = vld [vmem:[#allocation8 + $0x48] sm:$0xff]
    %v191 = vld [vmem:[#allocation8 + $0x50] sm:$0xff]
    %v192 = vld [vmem:[#allocation8 + $0x58] sm:$0xff]
    %v193 = vld [vmem:[#allocation8 + $0x60] sm:$0xff]
    %v194 = vld [vmem:[#allocation8 + $0x68] sm:$0xff]
    %v195 = vld [vmem:[#allocation10] sm:$0xff]
    %v196 = vld [vmem:[#allocation10 + $0x8] sm:$0xff]
    %v197 = vld [vmem:[#allocation10 + $0x10] sm:$0xff]
    %v198 = vld [vmem:[#allocation10 + $0x18] sm:$0xff]
    %v199 = vld [vmem:[#allocation10 + $0x20] sm:$0xff]
    %v200 = vld [vmem:[#allocation10 + $0x28] sm:$0xff]
    %v201 = vld [vmem:[#allocation10 + $0x30] sm:$0xff]
    %v202 = vld [vmem:[#allocation10 + $0x38] sm:$0xff]
    %v203 = vld [vmem:[#allocation10 + $0x40] sm:$0xff]
    %v204 = vld [vmem:[#allocation10 + $0x48] sm:$0xff]
    %v205 = vld [vmem:[#allocation10 + $0x50] sm:$0xff]
    %v206 = vld [vmem:[#allocation10 + $0x58] sm:$0xff]
    %v207 = vld [vmem:[#allocation10 + $0x60] sm:$0xff]
    %v208 = vld [vmem:[#allocation10 + $0x68] sm:$0xff]
    %v209 = vld [vmem:[#allocation10 + $0x70] sm:$0xff]
    %v210 = vld [vmem:[#allocation10 + $0x78] sm:$0xff]
    %v211 = vld [vmem:[%s6] sm:$0xff]
    %v212 = vld [vmem:[%s6 + $0x8] sm:$0xff]
    %v213 = vld [vmem:[%s6 + $0x10] sm:$0xff]
    %v214 = vld [vmem:[%s6 + $0x18] sm:$0xff]
    %v215 = vld [vmem:[%s6 + $0x20] sm:$0xff]
    %v216 = vld [vmem:[%s6 + $0x28] sm:$0xff]
    %v217 = vld [vmem:[%s6 + $0x30] sm:$0xff]
    %v218 = vld [vmem:[%s6 + $0x38] sm:$0xff]
    %v219 = vld [vmem:[%s6 + $0x40] sm:$0xff]
    %v220 = vld [vmem:[%s6 + $0x48] sm:$0xff]
    %v221 = vld [vmem:[%s6 + $0x50] sm:$0xff]
    %v222 = vld [vmem:[%s6 + $0x58] sm:$0xff]
    %v223 = vld [vmem:[%s6 + $0x60] sm:$0xff]
    %v224 = vld [vmem:[%s6 + $0x68] sm:$0xff]
    %v225 = vld [vmem:[%s6 + $0x70] sm:$0xff]
    %v226 = vld [vmem:[%s6 + $0x78] sm:$0xff]
    %v227 = vld [vmem:[#allocation2] sm:$0xff]
    %v228 = vld [vmem:[#allocation2 + $0x8] sm:$0xff]
    %v229 = vld [vmem:[#allocation2 + $0x10] sm:$0xff]
    %v230 = vld [vmem:[#allocation2 + $0x18] sm:$0xff]
    %v231 = vld [vmem:[#allocation2 + $0x20] sm:$0xff]
    %v232 = vld [vmem:[#allocation2 + $0x28] sm:$0xff]
    %v233 = vld [vmem:[#allocation2 + $0x30] sm:$0xff]
    %v234 = vld [vmem:[#allocation2 + $0x38] sm:$0xff]
    %v235 = vld [vmem:[#allocation2 + $0x40] sm:$0xff]
    %v236 = vld [vmem:[#allocation2 + $0x48] sm:$0xff]
    %v237 = vld [vmem:[#allocation2 + $0x50] sm:$0xff]
    %v238 = vld [vmem:[#allocation2 + $0x58] sm:$0xff]
    %v239 = vld [vmem:[#allocation2 + $0x60] sm:$0xff]
    %v240 = vld [vmem:[#allocation2 + $0x68] sm:$0xff]
    %v241 = vld [vmem:[%s7] sm:$0xff]
    %v242 = vld [vmem:[%s7 + $0x8] sm:$0xff]
    %v243 = vld [vmem:[%s7 + $0x10] sm:$0xff]
    %v244 = vld [vmem:[%s7 + $0x18] sm:$0xff]
    %v245 = vld [vmem:[%s7 + $0x20] sm:$0xff]
    %v246 = vld [vmem:[%s7 + $0x28] sm:$0xff]
    %v247 = vld [vmem:[%s7 + $0x30] sm:$0xff]
    %v248 = vld [vmem:[%s7 + $0x38] sm:$0xff]
    %v249 = vld [vmem:[%s7 + $0x40] sm:$0xff]
    %v250 = vld [vmem:[%s7 + $0x48] sm:$0xff]
    %v251 = vld [vmem:[%s7 + $0x50] sm:$0xff]
    %v252 = vld [vmem:[%s7 + $0x58] sm:$0xff]
    %v253 = vld [vmem:[%s7 + $0x60] sm:$0xff]
    %v254 = vld [vmem:[%s7 + $0x68] sm:$0xff]
    %v255 = vld [vmem:[%s7 + $0x70] sm:$0xff]
    %v256 = vld [vmem:[%s7 + $0x78] sm:$0xff]
    %v257 = vld [vmem:[%s7 + $0x80] sm:$0xff]
    %v258 = vld [vmem:[%s7 + $0x88] sm:$0xff]
    %v259 = vld [vmem:[%s7 + $0x90] sm:$0xff]
    %v260 = vld [vmem:[%s7 + $0x98] sm:$0xff]
    %v261 = vld [vmem:[%s7 + $0xa0] sm:$0xff]
    %v262 = vld [vmem:[%s7 + $0xa8] sm:$0xff]
    %v263 = vld [vmem:[%s7 + $0xb0] sm:$0xff]
    %v264 = vld [vmem:[%s7 + $0xb8] sm:$0xff]
    %v265 = vld [vmem:[%s7 + $0xc0] sm:$0xff]
    %v266 = vld [vmem:[%s7 + $0xc8] sm:$0xff]
    %v267 = vld [vmem:[%s7 + $0xd0] sm:$0xff]
    %v268 = vld [vmem:[%s7 + $0xd8] sm:$0xff]
    %v269 = vld [vmem:[%s7 + $0xe0] sm:$0xff]
    %v270 = vld [vmem:[%s7 + $0xe8] sm:$0xff]
    %v271 = vld [vmem:[%s7 + $0xf0] sm:$0xff]
    %v272 = vld [vmem:[%s7 + $0xf8] sm:$0xff]
    %v273 = vld [vmem:[%s7 + $0x100] sm:$0xff]
    %v274 = vld [vmem:[%s7 + $0x108] sm:$0xff]
    %v275 = vld [vmem:[%s7 + $0x110] sm:$0xff]
    %v276 = vld [vmem:[%s7 + $0x118] sm:$0xff]
    %v277 = vld [vmem:[%s7 + $0x120] sm:$0xff]
    %v278 = vld [vmem:[%s7 + $0x128] sm:$0xff]
    %v279 = vld [vmem:[%s7 + $0x130] sm:$0xff]
    %v280 = vld [vmem:[%s7 + $0x138] sm:$0xff]
    %v281 = vld [vmem:[%s7 + $0x140] sm:$0xff]
    %v282 = vld [vmem:[%s7 + $0x148] sm:$0xff]
    %v283 = vld [vmem:[%s7 + $0x150] sm:$0xff]
    %v284 = vld [vmem:[%s7 + $0x158] sm:$0xff]
    %v285 = vld [vmem:[%s7 + $0x160] sm:$0xff]
    %v286 = vld [vmem:[%s7 + $0x168] sm:$0xff]
    %v287 = vld [vmem:[%s7 + $0x170] sm:$0xff]
    %v288 = vld [vmem:[%s7 + $0x178] sm:$0xff]
    %v289 = vld [vmem:[%s7 + $0x180] sm:$0xff]
    %v290 = vld [vmem:[%s7 + $0x188] sm:$0xff]
    %v291 = vld [vmem:[%s7 + $0x190] sm:$0xff]
    %v292 = vld [vmem:[%s7 + $0x198] sm:$0xff]
    %v293 = vld [vmem:[%s7 + $0x1a0] sm:$0xff]
    %v294 = vld [vmem:[%s7 + $0x1a8] sm:$0xff]
    %v295 = vld [vmem:[%s7 + $0x1b0] sm:$0xff]
    %v296 = vld [vmem:[%s7 + $0x1b8] sm:$0xff]
    %v297 = vld [vmem:[%s7 + $0x1c0] sm:$0xff]
    %v298 = vld [vmem:[%s7 + $0x1c8] sm:$0xff]
    %v299 = vld [vmem:[%s7 + $0x1d0] sm:$0xff]
    %v300 = vld [vmem:[%s7 + $0x1d8] sm:$0xff]
    %v301 = vld [vmem:[%s7 + $0x1e0] sm:$0xff]
    %v302 = vld [vmem:[%s7 + $0x1e8] sm:$0xff]
    %v303 = vld [vmem:[%s7 + $0x1f0] sm:$0xff]
    %v304 = vld [vmem:[%s7 + $0x1f8] sm:$0xff]
    %v305 = vld [vmem:[%s7 + $0x200] sm:$0xff]
    %v306 = vld [vmem:[%s7 + $0x208] sm:$0xff]
    %v307 = vld [vmem:[%s7 + $0x210] sm:$0xff]
    %v308 = vld [vmem:[%s7 + $0x218] sm:$0xff]
    %v309 = vld [vmem:[%s7 + $0x220] sm:$0xff]
    %v310 = vld [vmem:[%s7 + $0x228] sm:$0xff]
    %v311 = vld [vmem:[%s7 + $0x230] sm:$0xff]
    %v312 = vld [vmem:[%s7 + $0x238] sm:$0xff]
    %v313 = vld [vmem:[%s7 + $0x240] sm:$0xff]
    %v314 = vld [vmem:[%s7 + $0x248] sm:$0xff]
    %v315 = vld [vmem:[%s7 + $0x250] sm:$0xff]
    %v316 = vld [vmem:[%s7 + $0x258] sm:$0xff]
    %v317 = vld [vmem:[%s7 + $0x260] sm:$0xff]
    %v318 = vld [vmem:[%s7 + $0x268] sm:$0xff]
    %v319 = vld [vmem:[%s7 + $0x270] sm:$0xff]
    %v320 = vld [vmem:[%s7 + $0x278] sm:$0xff]
    %v321 = vld [vmem:[%s7 + $0x280] sm:$0xff]
    %v322 = vld [vmem:[%s7 + $0x288] sm:$0xff]
    %v323 = vld [vmem:[%s7 + $0x290] sm:$0xff]
    %v324 = vld [vmem:[%s7 + $0x298] sm:$0xff]
    %v325 = vld [vmem:[%s8] sm:$0xff]
    %v326 = vld [vmem:[%s8 + $0x8] sm:$0xff]
    %v327 = vld [vmem:[%s8 + $0x10] sm:$0xff]
    %v328 = vld [vmem:[%s8 + $0x18] sm:$0xff]
    %v329 = vld [vmem:[%s8 + $0x20] sm:$0xff]
    %v330 = vld [vmem:[%s8 + $0x28] sm:$0xff]
    %v331 = vld [vmem:[%s8 + $0x30] sm:$0xff]
    %v332 = vld [vmem:[%s8 + $0x38] sm:$0xff]
    %v333 = vld [vmem:[%s8 + $0x40] sm:$0xff]
    %v334 = vld [vmem:[%s8 + $0x48] sm:$0xff]
    %v335 = vld [vmem:[%s8 + $0x50] sm:$0xff]
    %v336 = vld [vmem:[%s8 + $0x58] sm:$0xff]
    %v337 = vld [vmem:[%s8 + $0x60] sm:$0xff]
    %v338 = vld [vmem:[%s8 + $0x68] sm:$0xff]
    %vm339 = vcmask 261120
    %v341 = vsel %vm339, %v227, 0
    %v344 = vsel %vm339, %v228, 0
    %346 = vmatpush.msra.mxu0 0.0
    %347 = vmatpush.msra.mxu0 0.0
    %348 = vmatpush.msra.mxu0 0.0
    %349 = vmatpush.msra.mxu0 0.0
    %350 = vmatpush.msra.mxu0 0.0
    %351 = vmatpush.msra.mxu0 0.0
    %352 = vmatpush.msra.mxu0 0.0
    %353 = vmatpush.msra.mxu0 0.0
    %354 = vmatpush.msra.mxu0 0.0
    %355 = vmatpush.msra.mxu0 0.0
    %356 = vmatpush.msra.mxu0 0.0
    %357 = vmatpush.msra.mxu0 0.0
    %358 = vmatpush.msra.mxu0 %v250
    %359 = vmatpush.msra.mxu0 %v247
    %360 = vmatpush.msra.mxu0 %v244
    %361 = vmatpush.msra.mxu0 %v241
    %362 = vmatmul.f32.gmra.mxu0 %v341
    %v363 = vpop.f32.mrf.mxu0
    %v364 = vadd.f32 0.0, %v363
    %365 = vmatmul.f32.gmra.mxu0 %v344
    %v366 = vpop.f32.mrf.mxu0
    %v367 = vadd.f32 0.0, %v366
    %368 = vdwg.mxu0
    %369 = vmatpush.msra.mxu0 0.0
    %370 = vmatpush.msra.mxu0 0.0
    %371 = vmatpush.msra.mxu0 0.0
    %372 = vmatpush.msra.mxu0 0.0
    %373 = vmatpush.msra.mxu0 0.0
    %374 = vmatpush.msra.mxu0 0.0
    %375 = vmatpush.msra.mxu0 0.0
    %376 = vmatpush.msra.mxu0 0.0
    %377 = vmatpush.msra.mxu0 0.0
    %378 = vmatpush.msra.mxu0 0.0
    %379 = vmatpush.msra.mxu0 0.0
    %380 = vmatpush.msra.mxu0 0.0
    %381 = vmatpush.msra.mxu0 %v251
    %382 = vmatpush.msra.mxu0 %v248
    %383 = vmatpush.msra.mxu0 %v245
    %384 = vmatpush.msra.mxu0 %v242
    %385 = vmatmul.f32.gmra.mxu0 %v341
    %v386 = vpop.f32.mrf.mxu0
    %v387 = vadd.f32 0.0, %v386
    %388 = vmatmul.f32.gmra.mxu0 %v344
    %v389 = vpop.f32.mrf.mxu0
    %v390 = vadd.f32 0.0, %v389
    %391 = vdwg.mxu0
    %392 = vmatpush.msra.mxu0 0.0
    %393 = vmatpush.msra.mxu0 0.0
    %394 = vmatpush.msra.mxu0 0.0
    %395 = vmatpush.msra.mxu0 0.0
    %396 = vmatpush.msra.mxu0 0.0
    %397 = vmatpush.msra.mxu0 0.0
    %398 = vmatpush.msra.mxu0 0.0
    %399 = vmatpush.msra.mxu0 0.0
    %400 = vmatpush.msra.mxu0 0.0
    %401 = vmatpush.msra.mxu0 0.0
    %402 = vmatpush.msra.mxu0 0.0
    %403 = vmatpush.msra.mxu0 0.0
    %404 = vmatpush.msra.mxu0 %v252
    %405 = vmatpush.msra.mxu0 %v249
    %406 = vmatpush.msra.mxu0 %v246
    %407 = vmatpush.msra.mxu0 %v243
    %408 = vmatmul.f32.gmra.mxu0 %v341
    %v409 = vpop.f32.mrf.mxu0
    %v410 = vadd.f32 0.0, %v409
    %411 = vmatmul.f32.gmra.mxu0 %v344
    %v412 = vpop.f32.mrf.mxu0
    %v413 = vadd.f32 0.0, %v412
    %414 = vdwg.mxu0
    %v416 = vsel %vm339, %v229, 0
    %v419 = vsel %vm339, %v230, 0
    %421 = vmatpush.msra.mxu0 0.0
    %422 = vmatpush.msra.mxu0 0.0
    %423 = vmatpush.msra.mxu0 0.0
    %424 = vmatpush.msra.mxu0 0.0
    %425 = vmatpush.msra.mxu0 0.0
    %426 = vmatpush.msra.mxu0 0.0
    %427 = vmatpush.msra.mxu0 0.0
    %428 = vmatpush.msra.mxu0 0.0
    %429 = vmatpush.msra.mxu0 0.0
    %430 = vmatpush.msra.mxu0 0.0
    %431 = vmatpush.msra.mxu0 0.0
    %432 = vmatpush.msra.mxu0 0.0
    %433 = vmatpush.msra.mxu0 %v262
    %434 = vmatpush.msra.mxu0 %v259
    %435 = vmatpush.msra.mxu0 %v256
    %436 = vmatpush.msra.mxu0 %v253
    %437 = vmatmul.f32.gmra.mxu0 %v416
    %v438 = vpop.f32.mrf.mxu0
    %v439 = vadd.f32 0.0, %v438
    %440 = vmatmul.f32.gmra.mxu0 %v419
    %v441 = vpop.f32.mrf.mxu0
    %v442 = vadd.f32 0.0, %v441
    %443 = vdwg.mxu0
    %444 = vmatpush.msra.mxu0 0.0
    %445 = vmatpush.msra.mxu0 0.0
    %446 = vmatpush.msra.mxu0 0.0
    %447 = vmatpush.msra.mxu0 0.0
    %448 = vmatpush.msra.mxu0 0.0
    %449 = vmatpush.msra.mxu0 0.0
    %450 = vmatpush.msra.mxu0 0.0
    %451 = vmatpush.msra.mxu0 0.0
    %452 = vmatpush.msra.mxu0 0.0
    %453 = vmatpush.msra.mxu0 0.0
    %454 = vmatpush.msra.mxu0 0.0
    %455 = vmatpush.msra.mxu0 0.0
    %456 = vmatpush.msra.mxu0 %v263
    %457 = vmatpush.msra.mxu0 %v260
    %458 = vmatpush.msra.mxu0 %v257
    %459 = vmatpush.msra.mxu0 %v254
    %460 = vmatmul.f32.gmra.mxu0 %v416
    %v461 = vpop.f32.mrf.mxu0
    %v462 = vadd.f32 0.0, %v461
    %463 = vmatmul.f32.gmra.mxu0 %v419
    %v464 = vpop.f32.mrf.mxu0
    %v465 = vadd.f32 0.0, %v464
    %466 = vdwg.mxu0
    %467 = vmatpush.msra.mxu0 0.0
    %468 = vmatpush.msra.mxu0 0.0
    %469 = vmatpush.msra.mxu0 0.0
    %470 = vmatpush.msra.mxu0 0.0
    %471 = vmatpush.msra.mxu0 0.0
    %472 = vmatpush.msra.mxu0 0.0
    %473 = vmatpush.msra.mxu0 0.0
    %474 = vmatpush.msra.mxu0 0.0
    %475 = vmatpush.msra.mxu0 0.0
    %476 = vmatpush.msra.mxu0 0.0
    %477 = vmatpush.msra.mxu0 0.0
    %478 = vmatpush.msra.mxu0 0.0
    %479 = vmatpush.msra.mxu0 %v264
    %480 = vmatpush.msra.mxu0 %v261
    %481 = vmatpush.msra.mxu0 %v258
    %482 = vmatpush.msra.mxu0 %v255
    %483 = vmatmul.f32.gmra.mxu0 %v416
    %v484 = vpop.f32.mrf.mxu0
    %v485 = vadd.f32 0.0, %v484
    %486 = vmatmul.f32.gmra.mxu0 %v419
    %v487 = vpop.f32.mrf.mxu0
    %v488 = vadd.f32 0.0, %v487
    %489 = vdwg.mxu0
    %v491 = vsel %vm339, %v231, 0
    %v494 = vsel %vm339, %v232, 0
    %496 = vmatpush.msra.mxu0 0.0
    %497 = vmatpush.msra.mxu0 0.0
    %498 = vmatpush.msra.mxu0 0.0
    %499 = vmatpush.msra.mxu0 0.0
    %500 = vmatpush.msra.mxu0 0.0
    %501 = vmatpush.msra.mxu0 0.0
    %502 = vmatpush.msra.mxu0 0.0
    %503 = vmatpush.msra.mxu0 0.0
    %504 = vmatpush.msra.mxu0 0.0
    %505 = vmatpush.msra.mxu0 0.0
    %506 = vmatpush.msra.mxu0 0.0
    %507 = vmatpush.msra.mxu0 0.0
    %508 = vmatpush.msra.mxu0 %v274
    %509 = vmatpush.msra.mxu0 %v271
    %510 = vmatpush.msra.mxu0 %v268
    %511 = vmatpush.msra.mxu0 %v265
    %512 = vmatmul.f32.gmra.mxu0 %v491
    %v513 = vpop.f32.mrf.mxu0
    %v514 = vadd.f32 0.0, %v513
    %515 = vmatmul.f32.gmra.mxu0 %v494
    %v516 = vpop.f32.mrf.mxu0
    %v517 = vadd.f32 0.0, %v516
    %518 = vdwg.mxu0
    %519 = vmatpush.msra.mxu0 0.0
    %520 = vmatpush.msra.mxu0 0.0
    %521 = vmatpush.msra.mxu0 0.0
    %522 = vmatpush.msra.mxu0 0.0
    %523 = vmatpush.msra.mxu0 0.0
    %524 = vmatpush.msra.mxu0 0.0
    %525 = vmatpush.msra.mxu0 0.0
    %526 = vmatpush.msra.mxu0 0.0
    %527 = vmatpush.msra.mxu0 0.0
    %528 = vmatpush.msra.mxu0 0.0
    %529 = vmatpush.msra.mxu0 0.0
    %530 = vmatpush.msra.mxu0 0.0
    %531 = vmatpush.msra.mxu0 %v275
    %532 = vmatpush.msra.mxu0 %v272
    %533 = vmatpush.msra.mxu0 %v269
    %534 = vmatpush.msra.mxu0 %v266
    %535 = vmatmul.f32.gmra.mxu0 %v491
    %v536 = vpop.f32.mrf.mxu0
    %v537 = vadd.f32 0.0, %v536
    %538 = vmatmul.f32.gmra.mxu0 %v494
    %v539 = vpop.f32.mrf.mxu0
    %v540 = vadd.f32 0.0, %v539
    %541 = vdwg.mxu0
    %542 = vmatpush.msra.mxu0 0.0
    %543 = vmatpush.msra.mxu0 0.0
    %544 = vmatpush.msra.mxu0 0.0
    %545 = vmatpush.msra.mxu0 0.0
    %546 = vmatpush.msra.mxu0 0.0
    %547 = vmatpush.msra.mxu0 0.0
    %548 = vmatpush.msra.mxu0 0.0
    %549 = vmatpush.msra.mxu0 0.0
    %550 = vmatpush.msra.mxu0 0.0
    %551 = vmatpush.msra.mxu0 0.0
    %552 = vmatpush.msra.mxu0 0.0
    %553 = vmatpush.msra.mxu0 0.0
    %554 = vmatpush.msra.mxu0 %v276
    %555 = vmatpush.msra.mxu0 %v273
    %556 = vmatpush.msra.mxu0 %v270
    %557 = vmatpush.msra.mxu0 %v267
    %558 = vmatmul.f32.gmra.mxu0 %v491
    %v559 = vpop.f32.mrf.mxu0
    %v560 = vadd.f32 0.0, %v559
    %561 = vmatmul.f32.gmra.mxu0 %v494
    %v562 = vpop.f32.mrf.mxu0
    %v563 = vadd.f32 0.0, %v562
    %564 = vdwg.mxu0
    %v566 = vsel %vm339, %v233, 0
    %v569 = vsel %vm339, %v234, 0
    %571 = vmatpush.msra.mxu0 0.0
    %572 = vmatpush.msra.mxu0 0.0
    %573 = vmatpush.msra.mxu0 0.0
    %574 = vmatpush.msra.mxu0 0.0
    %575 = vmatpush.msra.mxu0 0.0
    %576 = vmatpush.msra.mxu0 0.0
    %577 = vmatpush.msra.mxu0 0.0
    %578 = vmatpush.msra.mxu0 0.0
    %579 = vmatpush.msra.mxu0 0.0
    %580 = vmatpush.msra.mxu0 0.0
    %581 = vmatpush.msra.mxu0 0.0
    %582 = vmatpush.msra.mxu0 0.0
    %583 = vmatpush.msra.mxu0 %v286
    %584 = vmatpush.msra.mxu0 %v283
    %585 = vmatpush.msra.mxu0 %v280
    %586 = vmatpush.msra.mxu0 %v277
    %587 = vmatmul.f32.gmra.mxu0 %v566
    %v588 = vpop.f32.mrf.mxu0
    %v589 = vadd.f32 0.0, %v588
    %590 = vmatmul.f32.gmra.mxu0 %v569
    %v591 = vpop.f32.mrf.mxu0
    %v592 = vadd.f32 0.0, %v591
    %593 = vdwg.mxu0
    %594 = vmatpush.msra.mxu0 0.0
    %595 = vmatpush.msra.mxu0 0.0
    %596 = vmatpush.msra.mxu0 0.0
    %597 = vmatpush.msra.mxu0 0.0
    %598 = vmatpush.msra.mxu0 0.0
    %599 = vmatpush.msra.mxu0 0.0
    %600 = vmatpush.msra.mxu0 0.0
    %601 = vmatpush.msra.mxu0 0.0
    %602 = vmatpush.msra.mxu0 0.0
    %603 = vmatpush.msra.mxu0 0.0
    %604 = vmatpush.msra.mxu0 0.0
    %605 = vmatpush.msra.mxu0 0.0
    %606 = vmatpush.msra.mxu0 %v287
    %607 = vmatpush.msra.mxu0 %v284
    %608 = vmatpush.msra.mxu0 %v281
    %609 = vmatpush.msra.mxu0 %v278
    %610 = vmatmul.f32.gmra.mxu0 %v566
    %v611 = vpop.f32.mrf.mxu0
    %v612 = vadd.f32 0.0, %v611
    %613 = vmatmul.f32.gmra.mxu0 %v569
    %v614 = vpop.f32.mrf.mxu0
    %v615 = vadd.f32 0.0, %v614
    %616 = vdwg.mxu0
    %617 = vmatpush.msra.mxu0 0.0
    %618 = vmatpush.msra.mxu0 0.0
    %619 = vmatpush.msra.mxu0 0.0
    %620 = vmatpush.msra.mxu0 0.0
    %621 = vmatpush.msra.mxu0 0.0
    %622 = vmatpush.msra.mxu0 0.0
    %623 = vmatpush.msra.mxu0 0.0
    %624 = vmatpush.msra.mxu0 0.0
    %625 = vmatpush.msra.mxu0 0.0
    %626 = vmatpush.msra.mxu0 0.0
    %627 = vmatpush.msra.mxu0 0.0
    %628 = vmatpush.msra.mxu0 0.0
    %629 = vmatpush.msra.mxu0 %v288
    %630 = vmatpush.msra.mxu0 %v285
    %631 = vmatpush.msra.mxu0 %v282
    %632 = vmatpush.msra.mxu0 %v279
    %633 = vmatmul.f32.gmra.mxu0 %v566
    %v634 = vpop.f32.mrf.mxu0
    %v635 = vadd.f32 0.0, %v634
    %636 = vmatmul.f32.gmra.mxu0 %v569
    %v637 = vpop.f32.mrf.mxu0
    %v638 = vadd.f32 0.0, %v637
    %639 = vdwg.mxu0
    %v641 = vsel %vm339, %v235, 0
    %v644 = vsel %vm339, %v236, 0
    %646 = vmatpush.msra.mxu0 0.0
    %647 = vmatpush.msra.mxu0 0.0
    %648 = vmatpush.msra.mxu0 0.0
    %649 = vmatpush.msra.mxu0 0.0
    %650 = vmatpush.msra.mxu0 0.0
    %651 = vmatpush.msra.mxu0 0.0
    %652 = vmatpush.msra.mxu0 0.0
    %653 = vmatpush.msra.mxu0 0.0
    %654 = vmatpush.msra.mxu0 0.0
    %655 = vmatpush.msra.mxu0 0.0
    %656 = vmatpush.msra.mxu0 0.0
    %657 = vmatpush.msra.mxu0 0.0
    %658 = vmatpush.msra.mxu0 %v298
    %659 = vmatpush.msra.mxu0 %v295
    %660 = vmatpush.msra.mxu0 %v292
    %661 = vmatpush.msra.mxu0 %v289
    %662 = vmatmul.f32.gmra.mxu0 %v641
    %v663 = vpop.f32.mrf.mxu0
    %v664 = vadd.f32 0.0, %v663
    %665 = vmatmul.f32.gmra.mxu0 %v644
    %v666 = vpop.f32.mrf.mxu0
    %v667 = vadd.f32 0.0, %v666
    %668 = vdwg.mxu0
    %669 = vmatpush.msra.mxu0 0.0
    %670 = vmatpush.msra.mxu0 0.0
    %671 = vmatpush.msra.mxu0 0.0
    %672 = vmatpush.msra.mxu0 0.0
    %673 = vmatpush.msra.mxu0 0.0
    %674 = vmatpush.msra.mxu0 0.0
    %675 = vmatpush.msra.mxu0 0.0
    %676 = vmatpush.msra.mxu0 0.0
    %677 = vmatpush.msra.mxu0 0.0
    %678 = vmatpush.msra.mxu0 0.0
    %679 = vmatpush.msra.mxu0 0.0
    %680 = vmatpush.msra.mxu0 0.0
    %681 = vmatpush.msra.mxu0 %v299
    %682 = vmatpush.msra.mxu0 %v296
    %683 = vmatpush.msra.mxu0 %v293
    %684 = vmatpush.msra.mxu0 %v290
    %685 = vmatmul.f32.gmra.mxu0 %v641
    %v686 = vpop.f32.mrf.mxu0
    %v687 = vadd.f32 0.0, %v686
    %688 = vmatmul.f32.gmra.mxu0 %v644
    %v689 = vpop.f32.mrf.mxu0
    %v690 = vadd.f32 0.0, %v689
    %691 = vdwg.mxu0
    %692 = vmatpush.msra.mxu0 0.0
    %693 = vmatpush.msra.mxu0 0.0
    %694 = vmatpush.msra.mxu0 0.0
    %695 = vmatpush.msra.mxu0 0.0
    %696 = vmatpush.msra.mxu0 0.0
    %697 = vmatpush.msra.mxu0 0.0
    %698 = vmatpush.msra.mxu0 0.0
    %699 = vmatpush.msra.mxu0 0.0
    %700 = vmatpush.msra.mxu0 0.0
    %701 = vmatpush.msra.mxu0 0.0
    %702 = vmatpush.msra.mxu0 0.0
    %703 = vmatpush.msra.mxu0 0.0
    %704 = vmatpush.msra.mxu0 %v300
    %705 = vmatpush.msra.mxu0 %v297
    %706 = vmatpush.msra.mxu0 %v294
    %707 = vmatpush.msra.mxu0 %v291
    %708 = vmatmul.f32.gmra.mxu0 %v641
    %v709 = vpop.f32.mrf.mxu0
    %v710 = vadd.f32 0.0, %v709
    %711 = vmatmul.f32.gmra.mxu0 %v644
    %v712 = vpop.f32.mrf.mxu0
    %v713 = vadd.f32 0.0, %v712
    %714 = vdwg.mxu0
    %v716 = vsel %vm339, %v237, 0
    %v719 = vsel %vm339, %v238, 0
    %721 = vmatpush.msra.mxu0 0.0
    %722 = vmatpush.msra.mxu0 0.0
    %723 = vmatpush.msra.mxu0 0.0
    %724 = vmatpush.msra.mxu0 0.0
    %725 = vmatpush.msra.mxu0 0.0
    %726 = vmatpush.msra.mxu0 0.0
    %727 = vmatpush.msra.mxu0 0.0
    %728 = vmatpush.msra.mxu0 0.0
    %729 = vmatpush.msra.mxu0 0.0
    %730 = vmatpush.msra.mxu0 0.0
    %731 = vmatpush.msra.mxu0 0.0
    %732 = vmatpush.msra.mxu0 0.0
    %733 = vmatpush.msra.mxu0 %v310
    %734 = vmatpush.msra.mxu0 %v307
    %735 = vmatpush.msra.mxu0 %v304
    %736 = vmatpush.msra.mxu0 %v301
    %737 = vmatmul.f32.gmra.mxu0 %v716
    %v738 = vpop.f32.mrf.mxu0
    %v739 = vadd.f32 0.0, %v738
    %740 = vmatmul.f32.gmra.mxu0 %v719
    %v741 = vpop.f32.mrf.mxu0
    %v742 = vadd.f32 0.0, %v741
    %743 = vdwg.mxu0
    %744 = vmatpush.msra.mxu0 0.0
    %745 = vmatpush.msra.mxu0 0.0
    %746 = vmatpush.msra.mxu0 0.0
    %747 = vmatpush.msra.mxu0 0.0
    %748 = vmatpush.msra.mxu0 0.0
    %749 = vmatpush.msra.mxu0 0.0
    %750 = vmatpush.msra.mxu0 0.0
    %751 = vmatpush.msra.mxu0 0.0
    %752 = vmatpush.msra.mxu0 0.0
    %753 = vmatpush.msra.mxu0 0.0
    %754 = vmatpush.msra.mxu0 0.0
    %755 = vmatpush.msra.mxu0 0.0
    %756 = vmatpush.msra.mxu0 %v311
    %757 = vmatpush.msra.mxu0 %v308
    %758 = vmatpush.msra.mxu0 %v305
    %759 = vmatpush.msra.mxu0 %v302
    %760 = vmatmul.f32.gmra.mxu0 %v716
    %v761 = vpop.f32.mrf.mxu0
    %v762 = vadd.f32 0.0, %v761
    %763 = vmatmul.f32.gmra.mxu0 %v719
    %v764 = vpop.f32.mrf.mxu0
    %v765 = vadd.f32 0.0, %v764
    %766 = vdwg.mxu0
    %767 = vmatpush.msra.mxu0 0.0
    %768 = vmatpush.msra.mxu0 0.0
    %769 = vmatpush.msra.mxu0 0.0
    %770 = vmatpush.msra.mxu0 0.0
    %771 = vmatpush.msra.mxu0 0.0
    %772 = vmatpush.msra.mxu0 0.0
    %773 = vmatpush.msra.mxu0 0.0
    %774 = vmatpush.msra.mxu0 0.0
    %775 = vmatpush.msra.mxu0 0.0
    %776 = vmatpush.msra.mxu0 0.0
    %777 = vmatpush.msra.mxu0 0.0
    %778 = vmatpush.msra.mxu0 0.0
    %779 = vmatpush.msra.mxu0 %v312
    %780 = vmatpush.msra.mxu0 %v309
    %781 = vmatpush.msra.mxu0 %v306
    %782 = vmatpush.msra.mxu0 %v303
    %783 = vmatmul.f32.gmra.mxu0 %v716
    %v784 = vpop.f32.mrf.mxu0
    %v785 = vadd.f32 0.0, %v784
    %786 = vmatmul.f32.gmra.mxu0 %v719
    %v787 = vpop.f32.mrf.mxu0
    %v788 = vadd.f32 0.0, %v787
    %789 = vdwg.mxu0
    %v791 = vsel %vm339, %v239, 0
    %v794 = vsel %vm339, %v240, 0
    %796 = vmatpush.msra.mxu0 0.0
    %797 = vmatpush.msra.mxu0 0.0
    %798 = vmatpush.msra.mxu0 0.0
    %799 = vmatpush.msra.mxu0 0.0
    %800 = vmatpush.msra.mxu0 0.0
    %801 = vmatpush.msra.mxu0 0.0
    %802 = vmatpush.msra.mxu0 0.0
    %803 = vmatpush.msra.mxu0 0.0
    %804 = vmatpush.msra.mxu0 0.0
    %805 = vmatpush.msra.mxu0 0.0
    %806 = vmatpush.msra.mxu0 0.0
    %807 = vmatpush.msra.mxu0 0.0
    %808 = vmatpush.msra.mxu0 %v322
    %809 = vmatpush.msra.mxu0 %v319
    %810 = vmatpush.msra.mxu0 %v316
    %811 = vmatpush.msra.mxu0 %v313
    %812 = vmatmul.f32.gmra.mxu0 %v791
    %v813 = vpop.f32.mrf.mxu0
    %v814 = vadd.f32 0.0, %v813
    %815 = vmatmul.f32.gmra.mxu0 %v794
    %v816 = vpop.f32.mrf.mxu0
    %v817 = vadd.f32 0.0, %v816
    %818 = vdwg.mxu0
    %819 = vmatpush.msra.mxu0 0.0
    %820 = vmatpush.msra.mxu0 0.0
    %821 = vmatpush.msra.mxu0 0.0
    %822 = vmatpush.msra.mxu0 0.0
    %823 = vmatpush.msra.mxu0 0.0
    %824 = vmatpush.msra.mxu0 0.0
    %825 = vmatpush.msra.mxu0 0.0
    %826 = vmatpush.msra.mxu0 0.0
    %827 = vmatpush.msra.mxu0 0.0
    %828 = vmatpush.msra.mxu0 0.0
    %829 = vmatpush.msra.mxu0 0.0
    %830 = vmatpush.msra.mxu0 0.0
    %831 = vmatpush.msra.mxu0 %v323
    %832 = vmatpush.msra.mxu0 %v320
    %833 = vmatpush.msra.mxu0 %v317
    %834 = vmatpush.msra.mxu0 %v314
    %835 = vmatmul.f32.gmra.mxu0 %v791
    %v836 = vpop.f32.mrf.mxu0
    %v837 = vadd.f32 0.0, %v836
    %838 = vmatmul.f32.gmra.mxu0 %v794
    %v839 = vpop.f32.mrf.mxu0
    %v840 = vadd.f32 0.0, %v839
    %841 = vdwg.mxu0
    %842 = vmatpush.msra.mxu0 0.0
    %843 = vmatpush.msra.mxu0 0.0
    %844 = vmatpush.msra.mxu0 0.0
    %845 = vmatpush.msra.mxu0 0.0
    %846 = vmatpush.msra.mxu0 0.0
    %847 = vmatpush.msra.mxu0 0.0
    %848 = vmatpush.msra.mxu0 0.0
    %849 = vmatpush.msra.mxu0 0.0
    %850 = vmatpush.msra.mxu0 0.0
    %851 = vmatpush.msra.mxu0 0.0
    %852 = vmatpush.msra.mxu0 0.0
    %853 = vmatpush.msra.mxu0 0.0
    %854 = vmatpush.msra.mxu0 %v324
    %855 = vmatpush.msra.mxu0 %v321
    %856 = vmatpush.msra.mxu0 %v318
    %857 = vmatpush.msra.mxu0 %v315
    %858 = vmatmul.f32.gmra.mxu0 %v791
    %v859 = vpop.f32.mrf.mxu0
    %v860 = vadd.f32 0.0, %v859
    %861 = vmatmul.f32.gmra.mxu0 %v794
    %v862 = vpop.f32.mrf.mxu0
    %v863 = vadd.f32 0.0, %v862
    %864 = vdwg.mxu0
    %v865 = vmul.f32 %v387, %v167
    %v866 = vmul.f32 %v390, %v168
    %v867 = vmul.f32 %v462, %v169
    %v868 = vmul.f32 %v465, %v170
    %v869 = vmul.f32 %v537, %v171
    %v870 = vmul.f32 %v540, %v172
    %v871 = vmul.f32 %v612, %v173
    %v872 = vmul.f32 %v615, %v174
    %v873 = vmul.f32 %v687, %v175
    %v874 = vmul.f32 %v690, %v176
    %v875 = vmul.f32 %v762, %v177
    %v876 = vmul.f32 %v765, %v178
    %v877 = vmul.f32 %v837, %v179
    %v878 = vmul.f32 %v840, %v180
    %vm879 = vcmask 916480
    %v881 = vsel %vm879, %v181, 0
    %v884 = vsel %vm879, %v182, 0
    %v887 = vsel %vm879, %v183, 0
    %v890 = vsel %vm879, %v184, 0
    %v893 = vsel %vm879, %v185, 0
    %v896 = vsel %vm879, %v186, 0
    %v899 = vsel %vm879, %v187, 0
    %v902 = vsel %vm879, %v188, 0
    %v905 = vsel %vm879, %v189, 0
    %v908 = vsel %vm879, %v190, 0
    %v911 = vsel %vm879, %v191, 0
    %v914 = vsel %vm879, %v192, 0
    %v917 = vsel %vm879, %v193, 0
    %v920 = vsel %vm879, %v194, 0
    %922 = vmatpush.msra.mxu0 0.0
    %923 = vmatpush.msra.mxu0 0.0
    %924 = vmatpush.msra.mxu0 %v878
    %925 = vmatpush.msra.mxu0 %v877
    %926 = vmatpush.msra.mxu0 %v876
    %927 = vmatpush.msra.mxu0 %v875
    %928 = vmatpush.msra.mxu0 %v874
    %929 = vmatpush.msra.mxu0 %v873
    %930 = vmatpush.msra.mxu0 %v872
    %931 = vmatpush.msra.mxu0 %v871
    %932 = vmatpush.msra.mxu0 %v870
    %933 = vmatpush.msra.mxu0 %v869
    %934 = vmatpush.msra.mxu0 %v868
    %935 = vmatpush.msra.mxu0 %v867
    %936 = vmatpush.msra.mxu0 %v866
    %937 = vmatpush.msra.mxu0 %v865
    %938 = vmatmul.f32.gmra.mxu0 %v881
    %v939 = vpop.f32.mrf.mxu0
    %v940 = vadd.f32 0.0, %v939
    %941 = vmatmul.f32.gmra.mxu0 %v884
    %v942 = vpop.f32.mrf.mxu0
    %v943 = vadd.f32 0.0, %v942
    %944 = vmatmul.f32.gmra.mxu0 %v887
    %v945 = vpop.f32.mrf.mxu0
    %v946 = vadd.f32 0.0, %v945
    %947 = vmatmul.f32.gmra.mxu0 %v890
    %v948 = vpop.f32.mrf.mxu0
    %v949 = vadd.f32 0.0, %v948
    %950 = vmatmul.f32.gmra.mxu0 %v893
    %v951 = vpop.f32.mrf.mxu0
    %v952 = vadd.f32 0.0, %v951
    %953 = vmatmul.f32.gmra.mxu0 %v896
    %v954 = vpop.f32.mrf.mxu0
    %v955 = vadd.f32 0.0, %v954
    %956 = vmatmul.f32.gmra.mxu0 %v899
    %v957 = vpop.f32.mrf.mxu0
    %v958 = vadd.f32 0.0, %v957
    %959 = vmatmul.f32.gmra.mxu0 %v902
    %v960 = vpop.f32.mrf.mxu0
    %v961 = vadd.f32 0.0, %v960
    %962 = vmatmul.f32.gmra.mxu0 %v905
    %v963 = vpop.f32.mrf.mxu0
    %v964 = vadd.f32 0.0, %v963
    %965 = vmatmul.f32.gmra.mxu0 %v908
    %v966 = vpop.f32.mrf.mxu0
    %v967 = vadd.f32 0.0, %v966
    %968 = vmatmul.f32.gmra.mxu0 %v911
    %v969 = vpop.f32.mrf.mxu0
    %v970 = vadd.f32 0.0, %v969
    %971 = vmatmul.f32.gmra.mxu0 %v914
    %v972 = vpop.f32.mrf.mxu0
    %v973 = vadd.f32 0.0, %v972
    %974 = vmatmul.f32.gmra.mxu0 %v917
    %v975 = vpop.f32.mrf.mxu0
    %v976 = vadd.f32 0.0, %v975
    %977 = vmatmul.f32.gmra.mxu0 %v920
    %v978 = vpop.f32.mrf.mxu0
    %v979 = vadd.f32 0.0, %v978
    %980 = vdwg.mxu0
    %v981 = vadd.f32 %v364, %v940
    %v982 = vadd.f32 %v367, %v943
    %v983 = vadd.f32 %v439, %v946
    %v984 = vadd.f32 %v442, %v949
    %v985 = vadd.f32 %v514, %v952
    %v986 = vadd.f32 %v517, %v955
    %v987 = vadd.f32 %v589, %v958
    %v988 = vadd.f32 %v592, %v961
    %v989 = vadd.f32 %v664, %v964
    %v990 = vadd.f32 %v667, %v967
    %v991 = vadd.f32 %v739, %v970
    %v992 = vadd.f32 %v742, %v973
    %v993 = vadd.f32 %v814, %v976
    %v994 = vadd.f32 %v817, %v979
    %vm995 = vcmp.gt.f32.partialorder %v981, 0.0
    %vm996 = vcmp.gt.f32.partialorder %v982, 0.0
    %vm997 = vcmp.gt.f32.partialorder %v983, 0.0
    %vm998 = vcmp.gt.f32.partialorder %v984, 0.0
    %vm999 = vcmp.gt.f32.partialorder %v985, 0.0
    %vm1000 = vcmp.gt.f32.partialorder %v986, 0.0
    %vm1001 = vcmp.gt.f32.partialorder %v987, 0.0
    %vm1002 = vcmp.gt.f32.partialorder %v988, 0.0
    %vm1003 = vcmp.gt.f32.partialorder %v989, 0.0
    %vm1004 = vcmp.gt.f32.partialorder %v990, 0.0
    %vm1005 = vcmp.gt.f32.partialorder %v991, 0.0
    %vm1006 = vcmp.gt.f32.partialorder %v992, 0.0
    %vm1007 = vcmp.gt.f32.partialorder %v993, 0.0
    %vm1008 = vcmp.gt.f32.partialorder %v994, 0.0
    %v1009 = vmul.f32 %v981, 0.2
    %v1010 = vmul.f32 %v982, 0.2
    %v1011 = vmul.f32 %v983, 0.2
    %v1012 = vmul.f32 %v984, 0.2
    %v1013 = vmul.f32 %v985, 0.2
    %v1014 = vmul.f32 %v986, 0.2
    %v1015 = vmul.f32 %v987, 0.2
    %v1016 = vmul.f32 %v988, 0.2
    %v1017 = vmul.f32 %v989, 0.2
    %v1018 = vmul.f32 %v990, 0.2
    %v1019 = vmul.f32 %v991, 0.2
    %v1020 = vmul.f32 %v992, 0.2
    %v1021 = vmul.f32 %v993, 0.2
    %v1022 = vmul.f32 %v994, 0.2
    %v1023 = vsel %vm995, %v981, %v1009
    %v1024 = vsel %vm996, %v982, %v1010
    %v1025 = vsel %vm997, %v983, %v1011
    %v1026 = vsel %vm998, %v984, %v1012
    %v1027 = vsel %vm999, %v985, %v1013
    %v1028 = vsel %vm1000, %v986, %v1014
    %v1029 = vsel %vm1001, %v987, %v1015
    %v1030 = vsel %vm1002, %v988, %v1016
    %v1031 = vsel %vm1003, %v989, %v1017
    %v1032 = vsel %vm1004, %v990, %v1018
    %v1033 = vsel %vm1005, %v991, %v1019
    %v1034 = vsel %vm1006, %v992, %v1020
    %v1035 = vsel %vm1007, %v993, %v1021
    %v1036 = vsel %vm1008, %v994, %v1022
    %v1037 = vsel %vm153, %v1023, -1e+30
    %v1038 = vsel %vm154, %v1024, -1e+30
    %v1039 = vsel %vm155, %v1025, -1e+30
    %v1040 = vsel %vm156, %v1026, -1e+30
    %v1041 = vsel %vm157, %v1027, -1e+30
    %v1042 = vsel %vm158, %v1028, -1e+30
    %v1043 = vsel %vm159, %v1029, -1e+30
    %v1044 = vsel %vm160, %v1030, -1e+30
    %v1045 = vsel %vm161, %v1031, -1e+30
    %v1046 = vsel %vm162, %v1032, -1e+30
    %v1047 = vsel %vm163, %v1033, -1e+30
    %v1048 = vsel %vm164, %v1034, -1e+30
    %v1049 = vsel %vm165, %v1035, -1e+30
    %v1050 = vsel %vm166, %v1036, -1e+30
    %1051 = vmax.xlane.f32.xlu0 %v1037
    %v1052 = vpop.xlane.xlu0 %1051
    %1053 = vmax.xlane.f32.xlu0 %v1038
    %v1054 = vpop.xlane.xlu0 %1053
    %1055 = vmax.xlane.f32.xlu0 %v1039
    %v1056 = vpop.xlane.xlu0 %1055
    %1057 = vmax.xlane.f32.xlu0 %v1040
    %v1058 = vpop.xlane.xlu0 %1057
    %1059 = vmax.xlane.f32.xlu0 %v1041
    %v1060 = vpop.xlane.xlu0 %1059
    %1061 = vmax.xlane.f32.xlu0 %v1042
    %v1062 = vpop.xlane.xlu0 %1061
    %1063 = vmax.xlane.f32.xlu0 %v1043
    %v1064 = vpop.xlane.xlu0 %1063
    %1065 = vmax.xlane.f32.xlu0 %v1044
    %v1066 = vpop.xlane.xlu0 %1065
    %1067 = vmax.xlane.f32.xlu0 %v1045
    %v1068 = vpop.xlane.xlu0 %1067
    %1069 = vmax.xlane.f32.xlu0 %v1046
    %v1070 = vpop.xlane.xlu0 %1069
    %1071 = vmax.xlane.f32.xlu0 %v1047
    %v1072 = vpop.xlane.xlu0 %1071
    %1073 = vmax.xlane.f32.xlu0 %v1048
    %v1074 = vpop.xlane.xlu0 %1073
    %1075 = vmax.xlane.f32.xlu0 %v1049
    %v1076 = vpop.xlane.xlu0 %1075
    %1077 = vmax.xlane.f32.xlu0 %v1050
    %v1078 = vpop.xlane.xlu0 %1077
    %v1079 = vsub.f32 %v1037, %v1052
    %v1080 = vsub.f32 %v1038, %v1054
    %v1081 = vsub.f32 %v1039, %v1056
    %v1082 = vsub.f32 %v1040, %v1058
    %v1083 = vsub.f32 %v1041, %v1060
    %v1084 = vsub.f32 %v1042, %v1062
    %v1085 = vsub.f32 %v1043, %v1064
    %v1086 = vsub.f32 %v1044, %v1066
    %v1087 = vsub.f32 %v1045, %v1068
    %v1088 = vsub.f32 %v1046, %v1070
    %v1089 = vsub.f32 %v1047, %v1072
    %v1090 = vsub.f32 %v1048, %v1074
    %v1091 = vsub.f32 %v1049, %v1076
    %v1092 = vsub.f32 %v1050, %v1078
    %v1093 = vmul.f32 %v1079, 1.442695
    %v1094 = vpow.pop %v1093
    %v1095 = vmul.f32 %v1080, 1.442695
    %v1096 = vpow.pop %v1095
    %v1097 = vmul.f32 %v1081, 1.442695
    %v1098 = vpow.pop %v1097
    %v1099 = vmul.f32 %v1082, 1.442695
    %v1100 = vpow.pop %v1099
    %v1101 = vmul.f32 %v1083, 1.442695
    %v1102 = vpow.pop %v1101
    %v1103 = vmul.f32 %v1084, 1.442695
    %v1104 = vpow.pop %v1103
    %v1105 = vmul.f32 %v1085, 1.442695
    %v1106 = vpow.pop %v1105
    %v1107 = vmul.f32 %v1086, 1.442695
    %v1108 = vpow.pop %v1107
    %v1109 = vmul.f32 %v1087, 1.442695
    %v1110 = vpow.pop %v1109
    %v1111 = vmul.f32 %v1088, 1.442695
    %v1112 = vpow.pop %v1111
    %v1113 = vmul.f32 %v1089, 1.442695
    %v1114 = vpow.pop %v1113
    %v1115 = vmul.f32 %v1090, 1.442695
    %v1116 = vpow.pop %v1115
    %v1117 = vmul.f32 %v1091, 1.442695
    %v1118 = vpow.pop %v1117
    %v1119 = vmul.f32 %v1092, 1.442695
    %v1120 = vpow.pop %v1119
    %v1121 = vsel %vm153, %v1094, 0.0
    %v1122 = vsel %vm154, %v1096, 0.0
    %v1123 = vsel %vm155, %v1098, 0.0
    %v1124 = vsel %vm156, %v1100, 0.0
    %v1125 = vsel %vm157, %v1102, 0.0
    %v1126 = vsel %vm158, %v1104, 0.0
    %v1127 = vsel %vm159, %v1106, 0.0
    %v1128 = vsel %vm160, %v1108, 0.0
    %v1129 = vsel %vm161, %v1110, 0.0
    %v1130 = vsel %vm162, %v1112, 0.0
    %v1131 = vsel %vm163, %v1114, 0.0
    %v1132 = vsel %vm164, %v1116, 0.0
    %v1133 = vsel %vm165, %v1118, 0.0
    %v1134 = vsel %vm166, %v1120, 0.0
    %1135 = vmatpush.msra.mxu0 %v210
    %1136 = vmatpush.msra.mxu0 %v209
    %1137 = vmatpush.msra.mxu0 %v208
    %1138 = vmatpush.msra.mxu0 %v207
    %1139 = vmatpush.msra.mxu0 %v206
    %1140 = vmatpush.msra.mxu0 %v205
    %1141 = vmatpush.msra.mxu0 %v204
    %1142 = vmatpush.msra.mxu0 %v203
    %1143 = vmatpush.msra.mxu0 %v202
    %1144 = vmatpush.msra.mxu0 %v201
    %1145 = vmatpush.msra.mxu0 %v200
    %1146 = vmatpush.msra.mxu0 %v199
    %1147 = vmatpush.msra.mxu0 %v198
    %1148 = vmatpush.msra.mxu0 %v197
    %1149 = vmatpush.msra.mxu0 %v196
    %1150 = vmatpush.msra.mxu0 %v195
    %1151 = vmatmul.f32.gmra.mxu0 %v1121
    %v1152 = vpop.f32.mrf.mxu0
    %v1153 = vadd.f32 0.0, %v1152
    %1154 = vmatmul.f32.gmra.mxu0 %v1122
    %v1155 = vpop.f32.mrf.mxu0
    %v1156 = vadd.f32 0.0, %v1155
    %1157 = vmatmul.f32.gmra.mxu0 %v1123
    %v1158 = vpop.f32.mrf.mxu0
    %v1159 = vadd.f32 0.0, %v1158
    %1160 = vmatmul.f32.gmra.mxu0 %v1124
    %v1161 = vpop.f32.mrf.mxu0
    %v1162 = vadd.f32 0.0, %v1161
    %1163 = vmatmul.f32.gmra.mxu0 %v1125
    %v1164 = vpop.f32.mrf.mxu0
    %v1165 = vadd.f32 0.0, %v1164
    %1166 = vmatmul.f32.gmra.mxu0 %v1126
    %v1167 = vpop.f32.mrf.mxu0
    %v1168 = vadd.f32 0.0, %v1167
    %1169 = vmatmul.f32.gmra.mxu0 %v1127
    %v1170 = vpop.f32.mrf.mxu0
    %v1171 = vadd.f32 0.0, %v1170
    %1172 = vmatmul.f32.gmra.mxu0 %v1128
    %v1173 = vpop.f32.mrf.mxu0
    %v1174 = vadd.f32 0.0, %v1173
    %1175 = vmatmul.f32.gmra.mxu0 %v1129
    %v1176 = vpop.f32.mrf.mxu0
    %v1177 = vadd.f32 0.0, %v1176
    %1178 = vmatmul.f32.gmra.mxu0 %v1130
    %v1179 = vpop.f32.mrf.mxu0
    %v1180 = vadd.f32 0.0, %v1179
    %1181 = vmatmul.f32.gmra.mxu0 %v1131
    %v1182 = vpop.f32.mrf.mxu0
    %v1183 = vadd.f32 0.0, %v1182
    %1184 = vmatmul.f32.gmra.mxu0 %v1132
    %v1185 = vpop.f32.mrf.mxu0
    %v1186 = vadd.f32 0.0, %v1185
    %1187 = vmatmul.f32.gmra.mxu0 %v1133
    %v1188 = vpop.f32.mrf.mxu0
    %v1189 = vadd.f32 0.0, %v1188
    %1190 = vmatmul.f32.gmra.mxu0 %v1134
    %v1191 = vpop.f32.mrf.mxu0
    %v1192 = vadd.f32 0.0, %v1191
    %1193 = vdwg.mxu0
    %vm1194 = vcmp.gt.f32.partialorder %v1153, 0.0
    %vm1195 = vcmp.gt.f32.partialorder %v1156, 0.0
    %vm1196 = vcmp.gt.f32.partialorder %v1159, 0.0
    %vm1197 = vcmp.gt.f32.partialorder %v1162, 0.0
    %vm1198 = vcmp.gt.f32.partialorder %v1165, 0.0
    %vm1199 = vcmp.gt.f32.partialorder %v1168, 0.0
    %vm1200 = vcmp.gt.f32.partialorder %v1171, 0.0
    %vm1201 = vcmp.gt.f32.partialorder %v1174, 0.0
    %vm1202 = vcmp.gt.f32.partialorder %v1177, 0.0
    %vm1203 = vcmp.gt.f32.partialorder %v1180, 0.0
    %vm1204 = vcmp.gt.f32.partialorder %v1183, 0.0
    %vm1205 = vcmp.gt.f32.partialorder %v1186, 0.0
    %vm1206 = vcmp.gt.f32.partialorder %v1189, 0.0
    %vm1207 = vcmp.gt.f32.partialorder %v1192, 0.0
    %v1208 = vsel %vm1194, %v1153, 1.0
    %v1209 = vsel %vm1195, %v1156, 1.0
    %v1210 = vsel %vm1196, %v1159, 1.0
    %v1211 = vsel %vm1197, %v1162, 1.0
    %v1212 = vsel %vm1198, %v1165, 1.0
    %v1213 = vsel %vm1199, %v1168, 1.0
    %v1214 = vsel %vm1200, %v1171, 1.0
    %v1215 = vsel %vm1201, %v1174, 1.0
    %v1216 = vsel %vm1202, %v1177, 1.0
    %v1217 = vsel %vm1203, %v1180, 1.0
    %v1218 = vsel %vm1204, %v1183, 1.0
    %v1219 = vsel %vm1205, %v1186, 1.0
    %v1220 = vsel %vm1206, %v1189, 1.0
    %v1221 = vsel %vm1207, %v1192, 1.0
    %v1222 = vrcp.pop %v1208
    %v1223 = vmul.f32 %v1208, %v1222
    %v1224 = vsub.f32 1.0, %v1223
    %v1225 = vmul.f32 %v1222, %v1224
    %v1226 = vadd.f32 %v1222, %v1225
    %vm1227 = vweird.f32 %v1208
    %vm1228 = vweird.f32 %v1222
    %vm1229 = vmor %vm1227, %vm1228
    %v1230 = vsel %vm1229, %v1222, %v1226
    %v1231 = vand.u32 2147483647, %v1208
    %vm1232 = vcmp.eq.f32.partialorder %v1231, 8.507059e+37
    %v1233 = vand.u32 %v1208, 2147483648
    %v1234 = vor.u32 1.1754944e-38, %v1233
    %v1235 = vsel %vm1232, %v1234, %v1230
    %v1236 = vmul.f32 %v1121, %v1235
    %v1237 = vrcp.pop %v1209
    %v1238 = vmul.f32 %v1209, %v1237
    %v1239 = vsub.f32 1.0, %v1238
    %v1240 = vmul.f32 %v1237, %v1239
    %v1241 = vadd.f32 %v1237, %v1240
    %vm1242 = vweird.f32 %v1209
    %vm1243 = vweird.f32 %v1237
    %vm1244 = vmor %vm1242, %vm1243
    %v1245 = vsel %vm1244, %v1237, %v1241
    %v1246 = vand.u32 2147483647, %v1209
    %vm1247 = vcmp.eq.f32.partialorder %v1246, 8.507059e+37
    %v1248 = vand.u32 %v1209, 2147483648
    %v1249 = vor.u32 1.1754944e-38, %v1248
    %v1250 = vsel %vm1247, %v1249, %v1245
    %v1251 = vmul.f32 %v1122, %v1250
    %v1252 = vrcp.pop %v1210
    %v1253 = vmul.f32 %v1210, %v1252
    %v1254 = vsub.f32 1.0, %v1253
    %v1255 = vmul.f32 %v1252, %v1254
    %v1256 = vadd.f32 %v1252, %v1255
    %vm1257 = vweird.f32 %v1210
    %vm1258 = vweird.f32 %v1252
    %vm1259 = vmor %vm1257, %vm1258
    %v1260 = vsel %vm1259, %v1252, %v1256
    %v1261 = vand.u32 2147483647, %v1210
    %vm1262 = vcmp.eq.f32.partialorder %v1261, 8.507059e+37
    %v1263 = vand.u32 %v1210, 2147483648
    %v1264 = vor.u32 1.1754944e-38, %v1263
    %v1265 = vsel %vm1262, %v1264, %v1260
    %v1266 = vmul.f32 %v1123, %v1265
    %v1267 = vrcp.pop %v1211
    %v1268 = vmul.f32 %v1211, %v1267
    %v1269 = vsub.f32 1.0, %v1268
    %v1270 = vmul.f32 %v1267, %v1269
    %v1271 = vadd.f32 %v1267, %v1270
    %vm1272 = vweird.f32 %v1211
    %vm1273 = vweird.f32 %v1267
    %vm1274 = vmor %vm1272, %vm1273
    %v1275 = vsel %vm1274, %v1267, %v1271
    %v1276 = vand.u32 2147483647, %v1211
    %vm1277 = vcmp.eq.f32.partialorder %v1276, 8.507059e+37
    %v1278 = vand.u32 %v1211, 2147483648
    %v1279 = vor.u32 1.1754944e-38, %v1278
    %v1280 = vsel %vm1277, %v1279, %v1275
    %v1281 = vmul.f32 %v1124, %v1280
    %v1282 = vrcp.pop %v1212
    %v1283 = vmul.f32 %v1212, %v1282
    %v1284 = vsub.f32 1.0, %v1283
    %v1285 = vmul.f32 %v1282, %v1284
    %v1286 = vadd.f32 %v1282, %v1285
    %vm1287 = vweird.f32 %v1212
    %vm1288 = vweird.f32 %v1282
    %vm1289 = vmor %vm1287, %vm1288
    %v1290 = vsel %vm1289, %v1282, %v1286
    %v1291 = vand.u32 2147483647, %v1212
    %vm1292 = vcmp.eq.f32.partialorder %v1291, 8.507059e+37
    %v1293 = vand.u32 %v1212, 2147483648
    %v1294 = vor.u32 1.1754944e-38, %v1293
    %v1295 = vsel %vm1292, %v1294, %v1290
    %v1296 = vmul.f32 %v1125, %v1295
    %v1297 = vrcp.pop %v1213
    %v1298 = vmul.f32 %v1213, %v1297
    %v1299 = vsub.f32 1.0, %v1298
    %v1300 = vmul.f32 %v1297, %v1299
    %v1301 = vadd.f32 %v1297, %v1300
    %vm1302 = vweird.f32 %v1213
    %vm1303 = vweird.f32 %v1297
    %vm1304 = vmor %vm1302, %vm1303
    %v1305 = vsel %vm1304, %v1297, %v1301
    %v1306 = vand.u32 2147483647, %v1213
    %vm1307 = vcmp.eq.f32.partialorder %v1306, 8.507059e+37
    %v1308 = vand.u32 %v1213, 2147483648
    %v1309 = vor.u32 1.1754944e-38, %v1308
    %v1310 = vsel %vm1307, %v1309, %v1305
    %v1311 = vmul.f32 %v1126, %v1310
    %v1312 = vrcp.pop %v1214
    %v1313 = vmul.f32 %v1214, %v1312
    %v1314 = vsub.f32 1.0, %v1313
    %v1315 = vmul.f32 %v1312, %v1314
    %v1316 = vadd.f32 %v1312, %v1315
    %vm1317 = vweird.f32 %v1214
    %vm1318 = vweird.f32 %v1312
    %vm1319 = vmor %vm1317, %vm1318
    %v1320 = vsel %vm1319, %v1312, %v1316
    %v1321 = vand.u32 2147483647, %v1214
    %vm1322 = vcmp.eq.f32.partialorder %v1321, 8.507059e+37
    %v1323 = vand.u32 %v1214, 2147483648
    %v1324 = vor.u32 1.1754944e-38, %v1323
    %v1325 = vsel %vm1322, %v1324, %v1320
    %v1326 = vmul.f32 %v1127, %v1325
    %v1327 = vrcp.pop %v1215
    %v1328 = vmul.f32 %v1215, %v1327
    %v1329 = vsub.f32 1.0, %v1328
    %v1330 = vmul.f32 %v1327, %v1329
    %v1331 = vadd.f32 %v1327, %v1330
    %vm1332 = vweird.f32 %v1215
    %vm1333 = vweird.f32 %v1327
    %vm1334 = vmor %vm1332, %vm1333
    %v1335 = vsel %vm1334, %v1327, %v1331
    %v1336 = vand.u32 2147483647, %v1215
    %vm1337 = vcmp.eq.f32.partialorder %v1336, 8.507059e+37
    %v1338 = vand.u32 %v1215, 2147483648
    %v1339 = vor.u32 1.1754944e-38, %v1338
    %v1340 = vsel %vm1337, %v1339, %v1335
    %v1341 = vmul.f32 %v1128, %v1340
    %v1342 = vrcp.pop %v1216
    %v1343 = vmul.f32 %v1216, %v1342
    %v1344 = vsub.f32 1.0, %v1343
    %v1345 = vmul.f32 %v1342, %v1344
    %v1346 = vadd.f32 %v1342, %v1345
    %vm1347 = vweird.f32 %v1216
    %vm1348 = vweird.f32 %v1342
    %vm1349 = vmor %vm1347, %vm1348
    %v1350 = vsel %vm1349, %v1342, %v1346
    %v1351 = vand.u32 2147483647, %v1216
    %vm1352 = vcmp.eq.f32.partialorder %v1351, 8.507059e+37
    %v1353 = vand.u32 %v1216, 2147483648
    %v1354 = vor.u32 1.1754944e-38, %v1353
    %v1355 = vsel %vm1352, %v1354, %v1350
    %v1356 = vmul.f32 %v1129, %v1355
    %v1357 = vrcp.pop %v1217
    %v1358 = vmul.f32 %v1217, %v1357
    %v1359 = vsub.f32 1.0, %v1358
    %v1360 = vmul.f32 %v1357, %v1359
    %v1361 = vadd.f32 %v1357, %v1360
    %vm1362 = vweird.f32 %v1217
    %vm1363 = vweird.f32 %v1357
    %vm1364 = vmor %vm1362, %vm1363
    %v1365 = vsel %vm1364, %v1357, %v1361
    %v1366 = vand.u32 2147483647, %v1217
    %vm1367 = vcmp.eq.f32.partialorder %v1366, 8.507059e+37
    %v1368 = vand.u32 %v1217, 2147483648
    %v1369 = vor.u32 1.1754944e-38, %v1368
    %v1370 = vsel %vm1367, %v1369, %v1365
    %v1371 = vmul.f32 %v1130, %v1370
    %v1372 = vrcp.pop %v1218
    %v1373 = vmul.f32 %v1218, %v1372
    %v1374 = vsub.f32 1.0, %v1373
    %v1375 = vmul.f32 %v1372, %v1374
    %v1376 = vadd.f32 %v1372, %v1375
    %vm1377 = vweird.f32 %v1218
    %vm1378 = vweird.f32 %v1372
    %vm1379 = vmor %vm1377, %vm1378
    %v1380 = vsel %vm1379, %v1372, %v1376
    %v1381 = vand.u32 2147483647, %v1218
    %vm1382 = vcmp.eq.f32.partialorder %v1381, 8.507059e+37
    %v1383 = vand.u32 %v1218, 2147483648
    %v1384 = vor.u32 1.1754944e-38, %v1383
    %v1385 = vsel %vm1382, %v1384, %v1380
    %v1386 = vmul.f32 %v1131, %v1385
    %v1387 = vrcp.pop %v1219
    %v1388 = vmul.f32 %v1219, %v1387
    %v1389 = vsub.f32 1.0, %v1388
    %v1390 = vmul.f32 %v1387, %v1389
    %v1391 = vadd.f32 %v1387, %v1390
    %vm1392 = vweird.f32 %v1219
    %vm1393 = vweird.f32 %v1387
    %vm1394 = vmor %vm1392, %vm1393
    %v1395 = vsel %vm1394, %v1387, %v1391
    %v1396 = vand.u32 2147483647, %v1219
    %vm1397 = vcmp.eq.f32.partialorder %v1396, 8.507059e+37
    %v1398 = vand.u32 %v1219, 2147483648
    %v1399 = vor.u32 1.1754944e-38, %v1398
    %v1400 = vsel %vm1397, %v1399, %v1395
    %v1401 = vmul.f32 %v1132, %v1400
    %v1402 = vrcp.pop %v1220
    %v1403 = vmul.f32 %v1220, %v1402
    %v1404 = vsub.f32 1.0, %v1403
    %v1405 = vmul.f32 %v1402, %v1404
    %v1406 = vadd.f32 %v1402, %v1405
    %vm1407 = vweird.f32 %v1220
    %vm1408 = vweird.f32 %v1402
    %vm1409 = vmor %vm1407, %vm1408
    %v1410 = vsel %vm1409, %v1402, %v1406
    %v1411 = vand.u32 2147483647, %v1220
    %vm1412 = vcmp.eq.f32.partialorder %v1411, 8.507059e+37
    %v1413 = vand.u32 %v1220, 2147483648
    %v1414 = vor.u32 1.1754944e-38, %v1413
    %v1415 = vsel %vm1412, %v1414, %v1410
    %v1416 = vmul.f32 %v1133, %v1415
    %v1417 = vrcp.pop %v1221
    %v1418 = vmul.f32 %v1221, %v1417
    %v1419 = vsub.f32 1.0, %v1418
    %v1420 = vmul.f32 %v1417, %v1419
    %v1421 = vadd.f32 %v1417, %v1420
    %vm1422 = vweird.f32 %v1221
    %vm1423 = vweird.f32 %v1417
    %vm1424 = vmor %vm1422, %vm1423
    %v1425 = vsel %vm1424, %v1417, %v1421
    %v1426 = vand.u32 2147483647, %v1221
    %vm1427 = vcmp.eq.f32.partialorder %v1426, 8.507059e+37
    %v1428 = vand.u32 %v1221, 2147483648
    %v1429 = vor.u32 1.1754944e-38, %v1428
    %v1430 = vsel %vm1427, %v1429, %v1425
    %v1431 = vmul.f32 %v1134, %v1430
    %v1432 = vmul.f32 %v410, %v211
    %v1433 = vmul.f32 %v413, %v212
    %v1434 = vmul.f32 %v410, %v213
    %v1435 = vmul.f32 %v413, %v214
    %v1436 = vmul.f32 %v410, %v215
    %v1437 = vmul.f32 %v413, %v216
    %v1438 = vmul.f32 %v410, %v217
    %v1439 = vmul.f32 %v413, %v218
    %v1440 = vmul.f32 %v410, %v219
    %v1441 = vmul.f32 %v413, %v220
    %v1442 = vmul.f32 %v410, %v221
    %v1443 = vmul.f32 %v413, %v222
    %v1444 = vmul.f32 %v410, %v223
    %v1445 = vmul.f32 %v413, %v224
    %v1446 = vmul.f32 %v410, %v225
    %v1447 = vmul.f32 %v413, %v226
    %v1448 = vmul.f32 %v485, %v211
    %v1449 = vmul.f32 %v488, %v212
    %v1450 = vmul.f32 %v485, %v213
    %v1451 = vmul.f32 %v488, %v214
    %v1452 = vmul.f32 %v485, %v215
    %v1453 = vmul.f32 %v488, %v216
    %v1454 = vmul.f32 %v485, %v217
    %v1455 = vmul.f32 %v488, %v218
    %v1456 = vmul.f32 %v485, %v219
    %v1457 = vmul.f32 %v488, %v220
    %v1458 = vmul.f32 %v485, %v221
    %v1459 = vmul.f32 %v488, %v222
    %v1460 = vmul.f32 %v485, %v223
    %v1461 = vmul.f32 %v488, %v224
    %v1462 = vmul.f32 %v485, %v225
    %v1463 = vmul.f32 %v488, %v226
    %v1464 = vmul.f32 %v560, %v211
    %v1465 = vmul.f32 %v563, %v212
    %v1466 = vmul.f32 %v560, %v213
    %v1467 = vmul.f32 %v563, %v214
    %v1468 = vmul.f32 %v560, %v215
    %v1469 = vmul.f32 %v563, %v216
    %v1470 = vmul.f32 %v560, %v217
    %v1471 = vmul.f32 %v563, %v218
    %v1472 = vmul.f32 %v560, %v219
    %v1473 = vmul.f32 %v563, %v220
    %v1474 = vmul.f32 %v560, %v221
    %v1475 = vmul.f32 %v563, %v222
    %v1476 = vmul.f32 %v560, %v223
    %v1477 = vmul.f32 %v563, %v224
    %v1478 = vmul.f32 %v560, %v225
    %v1479 = vmul.f32 %v563, %v226
    %v1480 = vmul.f32 %v635, %v211
    %v1481 = vmul.f32 %v638, %v212
    %v1482 = vmul.f32 %v635, %v213
    %v1483 = vmul.f32 %v638, %v214
    %v1484 = vmul.f32 %v635, %v215
    %v1485 = vmul.f32 %v638, %v216
    %v1486 = vmul.f32 %v635, %v217
    %v1487 = vmul.f32 %v638, %v218
    %v1488 = vmul.f32 %v635, %v219
    %v1489 = vmul.f32 %v638, %v220
    %v1490 = vmul.f32 %v635, %v221
    %v1491 = vmul.f32 %v638, %v222
    %v1492 = vmul.f32 %v635, %v223
    %v1493 = vmul.f32 %v638, %v224
    %v1494 = vmul.f32 %v635, %v225
    %v1495 = vmul.f32 %v638, %v226
    %v1496 = vmul.f32 %v710, %v211
    %v1497 = vmul.f32 %v713, %v212
    %v1498 = vmul.f32 %v710, %v213
    %v1499 = vmul.f32 %v713, %v214
    %v1500 = vmul.f32 %v710, %v215
    %v1501 = vmul.f32 %v713, %v216
    %v1502 = vmul.f32 %v710, %v217
    %v1503 = vmul.f32 %v713, %v218
    %v1504 = vmul.f32 %v710, %v219
    %v1505 = vmul.f32 %v713, %v220
    %v1506 = vmul.f32 %v710, %v221
    %v1507 = vmul.f32 %v713, %v222
    %v1508 = vmul.f32 %v710, %v223
    %v1509 = vmul.f32 %v713, %v224
    %v1510 = vmul.f32 %v710, %v225
    %v1511 = vmul.f32 %v713, %v226
    %v1512 = vmul.f32 %v785, %v211
    %v1513 = vmul.f32 %v788, %v212
    %v1514 = vmul.f32 %v785, %v213
    %v1515 = vmul.f32 %v788, %v214
    %v1516 = vmul.f32 %v785, %v215
    %v1517 = vmul.f32 %v788, %v216
    %v1518 = vmul.f32 %v785, %v217
    %v1519 = vmul.f32 %v788, %v218
    %v1520 = vmul.f32 %v785, %v219
    %v1521 = vmul.f32 %v788, %v220
    %v1522 = vmul.f32 %v785, %v221
    %v1523 = vmul.f32 %v788, %v222
    %v1524 = vmul.f32 %v785, %v223
    %v1525 = vmul.f32 %v788, %v224
    %v1526 = vmul.f32 %v785, %v225
    %v1527 = vmul.f32 %v788, %v226
    %v1528 = vmul.f32 %v860, %v211
    %v1529 = vmul.f32 %v863, %v212
    %v1530 = vmul.f32 %v860, %v213
    %v1531 = vmul.f32 %v863, %v214
    %v1532 = vmul.f32 %v860, %v215
    %v1533 = vmul.f32 %v863, %v216
    %v1534 = vmul.f32 %v860, %v217
    %v1535 = vmul.f32 %v863, %v218
    %v1536 = vmul.f32 %v860, %v219
    %v1537 = vmul.f32 %v863, %v220
    %v1538 = vmul.f32 %v860, %v221
    %v1539 = vmul.f32 %v863, %v222
    %v1540 = vmul.f32 %v860, %v223
    %v1541 = vmul.f32 %v863, %v224
    %v1542 = vmul.f32 %v860, %v225
    %v1543 = vmul.f32 %v863, %v226
    %1544 = vmatpush.msra.mxu0 %v1447
    %1545 = vmatpush.msra.mxu0 %v1446
    %1546 = vmatpush.msra.mxu0 %v1445
    %1547 = vmatpush.msra.mxu0 %v1444
    %1548 = vmatpush.msra.mxu0 %v1443
    %1549 = vmatpush.msra.mxu0 %v1442
    %1550 = vmatpush.msra.mxu0 %v1441
    %1551 = vmatpush.msra.mxu0 %v1440
    %1552 = vmatpush.msra.mxu0 %v1439
    %1553 = vmatpush.msra.mxu0 %v1438
    %1554 = vmatpush.msra.mxu0 %v1437
    %1555 = vmatpush.msra.mxu0 %v1436
    %1556 = vmatpush.msra.mxu0 %v1435
    %1557 = vmatpush.msra.mxu0 %v1434
    %1558 = vmatpush.msra.mxu0 %v1433
    %1559 = vmatpush.msra.mxu0 %v1432
    %1560 = vmatmul.f32.gmra.mxu0 %v1236
    %v1561 = vpop.f32.mrf.mxu0
    %v1562 = vadd.f32 0.0, %v1561
    %1563 = vmatmul.f32.gmra.mxu0 %v1251
    %v1564 = vpop.f32.mrf.mxu0
    %v1565 = vadd.f32 0.0, %v1564
    %1566 = vdwg.mxu0
    %1567 = vmatpush.msra.mxu0 %v1463
    %1568 = vmatpush.msra.mxu0 %v1462
    %1569 = vmatpush.msra.mxu0 %v1461
    %1570 = vmatpush.msra.mxu0 %v1460
    %1571 = vmatpush.msra.mxu0 %v1459
    %1572 = vmatpush.msra.mxu0 %v1458
    %1573 = vmatpush.msra.mxu0 %v1457
    %1574 = vmatpush.msra.mxu0 %v1456
    %1575 = vmatpush.msra.mxu0 %v1455
    %1576 = vmatpush.msra.mxu0 %v1454
    %1577 = vmatpush.msra.mxu0 %v1453
    %1578 = vmatpush.msra.mxu0 %v1452
    %1579 = vmatpush.msra.mxu0 %v1451
    %1580 = vmatpush.msra.mxu0 %v1450
    %1581 = vmatpush.msra.mxu0 %v1449
    %1582 = vmatpush.msra.mxu0 %v1448
    %1583 = vmatmul.f32.gmra.mxu0 %v1266
    %v1584 = vpop.f32.mrf.mxu0
    %v1585 = vadd.f32 0.0, %v1584
    %1586 = vmatmul.f32.gmra.mxu0 %v1281
    %v1587 = vpop.f32.mrf.mxu0
    %v1588 = vadd.f32 0.0, %v1587
    %1589 = vdwg.mxu0
    %1590 = vmatpush.msra.mxu0 %v1479
    %1591 = vmatpush.msra.mxu0 %v1478
    %1592 = vmatpush.msra.mxu0 %v1477
    %1593 = vmatpush.msra.mxu0 %v1476
    %1594 = vmatpush.msra.mxu0 %v1475
    %1595 = vmatpush.msra.mxu0 %v1474
    %1596 = vmatpush.msra.mxu0 %v1473
    %1597 = vmatpush.msra.mxu0 %v1472
    %1598 = vmatpush.msra.mxu0 %v1471
    %1599 = vmatpush.msra.mxu0 %v1470
    %1600 = vmatpush.msra.mxu0 %v1469
    %1601 = vmatpush.msra.mxu0 %v1468
    %1602 = vmatpush.msra.mxu0 %v1467
    %1603 = vmatpush.msra.mxu0 %v1466
    %1604 = vmatpush.msra.mxu0 %v1465
    %1605 = vmatpush.msra.mxu0 %v1464
    %1606 = vmatmul.f32.gmra.mxu0 %v1296
    %v1607 = vpop.f32.mrf.mxu0
    %v1608 = vadd.f32 0.0, %v1607
    %1609 = vmatmul.f32.gmra.mxu0 %v1311
    %v1610 = vpop.f32.mrf.mxu0
    %v1611 = vadd.f32 0.0, %v1610
    %1612 = vdwg.mxu0
    %1613 = vmatpush.msra.mxu0 %v1495
    %1614 = vmatpush.msra.mxu0 %v1494
    %1615 = vmatpush.msra.mxu0 %v1493
    %1616 = vmatpush.msra.mxu0 %v1492
    %1617 = vmatpush.msra.mxu0 %v1491
    %1618 = vmatpush.msra.mxu0 %v1490
    %1619 = vmatpush.msra.mxu0 %v1489
    %1620 = vmatpush.msra.mxu0 %v1488
    %1621 = vmatpush.msra.mxu0 %v1487
    %1622 = vmatpush.msra.mxu0 %v1486
    %1623 = vmatpush.msra.mxu0 %v1485
    %1624 = vmatpush.msra.mxu0 %v1484
    %1625 = vmatpush.msra.mxu0 %v1483
    %1626 = vmatpush.msra.mxu0 %v1482
    %1627 = vmatpush.msra.mxu0 %v1481
    %1628 = vmatpush.msra.mxu0 %v1480
    %1629 = vmatmul.f32.gmra.mxu0 %v1326
    %v1630 = vpop.f32.mrf.mxu0
    %v1631 = vadd.f32 0.0, %v1630
    %1632 = vmatmul.f32.gmra.mxu0 %v1341
    %v1633 = vpop.f32.mrf.mxu0
    %v1634 = vadd.f32 0.0, %v1633
    %1635 = vdwg.mxu0
    %1636 = vmatpush.msra.mxu0 %v1511
    %1637 = vmatpush.msra.mxu0 %v1510
    %1638 = vmatpush.msra.mxu0 %v1509
    %1639 = vmatpush.msra.mxu0 %v1508
    %1640 = vmatpush.msra.mxu0 %v1507
    %1641 = vmatpush.msra.mxu0 %v1506
    %1642 = vmatpush.msra.mxu0 %v1505
    %1643 = vmatpush.msra.mxu0 %v1504
    %1644 = vmatpush.msra.mxu0 %v1503
    %1645 = vmatpush.msra.mxu0 %v1502
    %1646 = vmatpush.msra.mxu0 %v1501
    %1647 = vmatpush.msra.mxu0 %v1500
    %1648 = vmatpush.msra.mxu0 %v1499
    %1649 = vmatpush.msra.mxu0 %v1498
    %1650 = vmatpush.msra.mxu0 %v1497
    %1651 = vmatpush.msra.mxu0 %v1496
    %1652 = vmatmul.f32.gmra.mxu0 %v1356
    %v1653 = vpop.f32.mrf.mxu0
    %v1654 = vadd.f32 0.0, %v1653
    %1655 = vmatmul.f32.gmra.mxu0 %v1371
    %v1656 = vpop.f32.mrf.mxu0
    %v1657 = vadd.f32 0.0, %v1656
    %1658 = vdwg.mxu0
    %1659 = vmatpush.msra.mxu0 %v1527
    %1660 = vmatpush.msra.mxu0 %v1526
    %1661 = vmatpush.msra.mxu0 %v1525
    %1662 = vmatpush.msra.mxu0 %v1524
    %1663 = vmatpush.msra.mxu0 %v1523
    %1664 = vmatpush.msra.mxu0 %v1522
    %1665 = vmatpush.msra.mxu0 %v1521
    %1666 = vmatpush.msra.mxu0 %v1520
    %1667 = vmatpush.msra.mxu0 %v1519
    %1668 = vmatpush.msra.mxu0 %v1518
    %1669 = vmatpush.msra.mxu0 %v1517
    %1670 = vmatpush.msra.mxu0 %v1516
    %1671 = vmatpush.msra.mxu0 %v1515
    %1672 = vmatpush.msra.mxu0 %v1514
    %1673 = vmatpush.msra.mxu0 %v1513
    %1674 = vmatpush.msra.mxu0 %v1512
    %1675 = vmatmul.f32.gmra.mxu0 %v1386
    %v1676 = vpop.f32.mrf.mxu0
    %v1677 = vadd.f32 0.0, %v1676
    %1678 = vmatmul.f32.gmra.mxu0 %v1401
    %v1679 = vpop.f32.mrf.mxu0
    %v1680 = vadd.f32 0.0, %v1679
    %1681 = vdwg.mxu0
    %1682 = vmatpush.msra.mxu0 %v1543
    %1683 = vmatpush.msra.mxu0 %v1542
    %1684 = vmatpush.msra.mxu0 %v1541
    %1685 = vmatpush.msra.mxu0 %v1540
    %1686 = vmatpush.msra.mxu0 %v1539
    %1687 = vmatpush.msra.mxu0 %v1538
    %1688 = vmatpush.msra.mxu0 %v1537
    %1689 = vmatpush.msra.mxu0 %v1536
    %1690 = vmatpush.msra.mxu0 %v1535
    %1691 = vmatpush.msra.mxu0 %v1534
    %1692 = vmatpush.msra.mxu0 %v1533
    %1693 = vmatpush.msra.mxu0 %v1532
    %1694 = vmatpush.msra.mxu0 %v1531
    %1695 = vmatpush.msra.mxu0 %v1530
    %1696 = vmatpush.msra.mxu0 %v1529
    %1697 = vmatpush.msra.mxu0 %v1528
    %1698 = vmatmul.f32.gmra.mxu0 %v1416
    %v1699 = vpop.f32.mrf.mxu0
    %v1700 = vadd.f32 0.0, %v1699
    %1701 = vmatmul.f32.gmra.mxu0 %v1431
    %v1702 = vpop.f32.mrf.mxu0
    %v1703 = vadd.f32 0.0, %v1702
    %1704 = vdwg.mxu0
    %v1705 = vadd.f32 %v1562, %v325
    %v1706 = vadd.f32 %v1565, %v326
    %v1707 = vadd.f32 %v1585, %v327
    %v1708 = vadd.f32 %v1588, %v328
    %v1709 = vadd.f32 %v1608, %v329
    %v1710 = vadd.f32 %v1611, %v330
    %v1711 = vadd.f32 %v1631, %v331
    %v1712 = vadd.f32 %v1634, %v332
    %v1713 = vadd.f32 %v1654, %v333
    %v1714 = vadd.f32 %v1657, %v334
    %v1715 = vadd.f32 %v1677, %v335
    %v1716 = vadd.f32 %v1680, %v336
    %v1717 = vadd.f32 %v1700, %v337
    %v1718 = vadd.f32 %v1703, %v338
    %vm1719 = vcmp.gt.f32.partialorder %v1705, 0.0
    %vm1720 = vcmp.gt.f32.partialorder %v1706, 0.0
    %vm1721 = vcmp.gt.f32.partialorder %v1707, 0.0
    %vm1722 = vcmp.gt.f32.partialorder %v1708, 0.0
    %vm1723 = vcmp.gt.f32.partialorder %v1709, 0.0
    %vm1724 = vcmp.gt.f32.partialorder %v1710, 0.0
    %vm1725 = vcmp.gt.f32.partialorder %v1711, 0.0
    %vm1726 = vcmp.gt.f32.partialorder %v1712, 0.0
    %vm1727 = vcmp.gt.f32.partialorder %v1713, 0.0
    %vm1728 = vcmp.gt.f32.partialorder %v1714, 0.0
    %vm1729 = vcmp.gt.f32.partialorder %v1715, 0.0
    %vm1730 = vcmp.gt.f32.partialorder %v1716, 0.0
    %vm1731 = vcmp.gt.f32.partialorder %v1717, 0.0
    %vm1732 = vcmp.gt.f32.partialorder %v1718, 0.0
    %v1733 = vmin.f32 %v1705, 0.0
    %v1734 = vmin.f32 %v1706, 0.0
    %v1735 = vmin.f32 %v1707, 0.0
    %v1736 = vmin.f32 %v1708, 0.0
    %v1737 = vmin.f32 %v1709, 0.0
    %v1738 = vmin.f32 %v1710, 0.0
    %v1739 = vmin.f32 %v1711, 0.0
    %v1740 = vmin.f32 %v1712, 0.0
    %v1741 = vmin.f32 %v1713, 0.0
    %v1742 = vmin.f32 %v1714, 0.0
    %v1743 = vmin.f32 %v1715, 0.0
    %v1744 = vmin.f32 %v1716, 0.0
    %v1745 = vmin.f32 %v1717, 0.0
    %v1746 = vmin.f32 %v1718, 0.0
    %v1747 = vmul.f32 %v1733, 1.442695
    %v1748 = vpow.pop %v1747
    %v1749 = vmul.f32 %v1734, 1.442695
    %v1750 = vpow.pop %v1749
    %v1751 = vmul.f32 %v1735, 1.442695
    %v1752 = vpow.pop %v1751
    %v1753 = vmul.f32 %v1736, 1.442695
    %v1754 = vpow.pop %v1753
    %v1755 = vmul.f32 %v1737, 1.442695
    %v1756 = vpow.pop %v1755
    %v1757 = vmul.f32 %v1738, 1.442695
    %v1758 = vpow.pop %v1757
    %v1759 = vmul.f32 %v1739, 1.442695
    %v1760 = vpow.pop %v1759
    %v1761 = vmul.f32 %v1740, 1.442695
    %v1762 = vpow.pop %v1761
    %v1763 = vmul.f32 %v1741, 1.442695
    %v1764 = vpow.pop %v1763
    %v1765 = vmul.f32 %v1742, 1.442695
    %v1766 = vpow.pop %v1765
    %v1767 = vmul.f32 %v1743, 1.442695
    %v1768 = vpow.pop %v1767
    %v1769 = vmul.f32 %v1744, 1.442695
    %v1770 = vpow.pop %v1769
    %v1771 = vmul.f32 %v1745, 1.442695
    %v1772 = vpow.pop %v1771
    %v1773 = vmul.f32 %v1746, 1.442695
    %v1774 = vpow.pop %v1773
    %v1775 = vsub.f32 %v1748, 1.0
    %v1776 = vsub.f32 %v1750, 1.0
    %v1777 = vsub.f32 %v1752, 1.0
    %v1778 = vsub.f32 %v1754, 1.0
    %v1779 = vsub.f32 %v1756, 1.0
    %v1780 = vsub.f32 %v1758, 1.0
    %v1781 = vsub.f32 %v1760, 1.0
    %v1782 = vsub.f32 %v1762, 1.0
    %v1783 = vsub.f32 %v1764, 1.0
    %v1784 = vsub.f32 %v1766, 1.0
    %v1785 = vsub.f32 %v1768, 1.0
    %v1786 = vsub.f32 %v1770, 1.0
    %v1787 = vsub.f32 %v1772, 1.0
    %v1788 = vsub.f32 %v1774, 1.0
    %v1789 = vmul.f32 %v1775, 1.6732632
    %v1790 = vmul.f32 %v1776, 1.6732632
    %v1791 = vmul.f32 %v1777, 1.6732632
    %v1792 = vmul.f32 %v1778, 1.6732632
    %v1793 = vmul.f32 %v1779, 1.6732632
    %v1794 = vmul.f32 %v1780, 1.6732632
    %v1795 = vmul.f32 %v1781, 1.6732632
    %v1796 = vmul.f32 %v1782, 1.6732632
    %v1797 = vmul.f32 %v1783, 1.6732632
    %v1798 = vmul.f32 %v1784, 1.6732632
    %v1799 = vmul.f32 %v1785, 1.6732632
    %v1800 = vmul.f32 %v1786, 1.6732632
    %v1801 = vmul.f32 %v1787, 1.6732632
    %v1802 = vmul.f32 %v1788, 1.6732632
    %v1803 = vsel %vm1719, %v1705, %v1789
    %v1804 = vsel %vm1720, %v1706, %v1790
    %v1805 = vsel %vm1721, %v1707, %v1791
    %v1806 = vsel %vm1722, %v1708, %v1792
    %v1807 = vsel %vm1723, %v1709, %v1793
    %v1808 = vsel %vm1724, %v1710, %v1794
    %v1809 = vsel %vm1725, %v1711, %v1795
    %v1810 = vsel %vm1726, %v1712, %v1796
    %v1811 = vsel %vm1727, %v1713, %v1797
    %v1812 = vsel %vm1728, %v1714, %v1798
    %v1813 = vsel %vm1729, %v1715, %v1799
    %v1814 = vsel %vm1730, %v1716, %v1800
    %v1815 = vsel %vm1731, %v1717, %v1801
    %v1816 = vsel %vm1732, %v1718, %v1802
    %v1817 = vmul.f32 %v1803, 1.050701
    %v1818 = vmul.f32 %v1804, 1.050701
    %v1819 = vmul.f32 %v1805, 1.050701
    %v1820 = vmul.f32 %v1806, 1.050701
    %v1821 = vmul.f32 %v1807, 1.050701
    %v1822 = vmul.f32 %v1808, 1.050701
    %v1823 = vmul.f32 %v1809, 1.050701
    %v1824 = vmul.f32 %v1810, 1.050701
    %v1825 = vmul.f32 %v1811, 1.050701
    %v1826 = vmul.f32 %v1812, 1.050701
    %v1827 = vmul.f32 %v1813, 1.050701
    %v1828 = vmul.f32 %v1814, 1.050701
    %v1829 = vmul.f32 %v1815, 1.050701
    %v1830 = vmul.f32 %v1816, 1.050701
    %v1831 = vld [vmem:[#allocation11] sm:$0xff]
    %v1832 = vld [vmem:[#allocation11 + $0x8] sm:$0xff]
    %v1833 = vld [vmem:[#allocation11 + $0x10] sm:$0xff]
    %v1834 = vld [vmem:[#allocation11 + $0x18] sm:$0xff]
    %v1835 = vld [vmem:[#allocation11 + $0x20] sm:$0xff]
    %v1836 = vld [vmem:[#allocation11 + $0x28] sm:$0xff]
    %v1837 = vld [vmem:[#allocation11 + $0x30] sm:$0xff]
    %v1838 = vld [vmem:[#allocation11 + $0x38] sm:$0xff]
    %v1839 = vld [vmem:[#allocation11 + $0x40] sm:$0xff]
    %v1840 = vld [vmem:[#allocation11 + $0x48] sm:$0xff]
    %v1841 = vld [vmem:[#allocation11 + $0x50] sm:$0xff]
    %v1842 = vld [vmem:[#allocation11 + $0x58] sm:$0xff]
    %v1843 = vld [vmem:[#allocation11 + $0x60] sm:$0xff]
    %v1844 = vld [vmem:[#allocation11 + $0x68] sm:$0xff]
    %v1845 = vld [vmem:[#allocation11 + $0x70] sm:$0xff]
    %v1846 = vld [vmem:[#allocation11 + $0x78] sm:$0xff]
    %v1847 = vld [vmem:[#allocation11 + $0x80] sm:$0xff]
    %v1848 = vld [vmem:[#allocation11 + $0x88] sm:$0xff]
    %v1849 = vld [vmem:[#allocation11 + $0x90] sm:$0xff]
    %v1850 = vld [vmem:[#allocation11 + $0x98] sm:$0xff]
    %v1851 = vld [vmem:[#allocation11 + $0xa0] sm:$0xff]
    %v1852 = vld [vmem:[#allocation11 + $0xa8] sm:$0xff]
    %v1853 = vld [vmem:[#allocation11 + $0xb0] sm:$0xff]
    %v1854 = vld [vmem:[#allocation11 + $0xb8] sm:$0xff]
    %v1855 = vld [vmem:[#allocation11 + $0xc0] sm:$0xff]
    %v1856 = vld [vmem:[#allocation11 + $0xc8] sm:$0xff]
    %v1857 = vld [vmem:[#allocation11 + $0xd0] sm:$0xff]
    %v1858 = vld [vmem:[#allocation11 + $0xd8] sm:$0xff]
    %v1859 = vld [vmem:[#allocation11 + $0xe0] sm:$0xff]
    %v1860 = vld [vmem:[#allocation11 + $0xe8] sm:$0xff]
    %v1861 = vld [vmem:[#allocation11 + $0xf0] sm:$0xff]
    %v1862 = vld [vmem:[#allocation11 + $0xf8] sm:$0xff]
    %v1863 = vld [vmem:[#allocation11 + $0x100] sm:$0xff]
    %v1864 = vld [vmem:[#allocation11 + $0x108] sm:$0xff]
    %v1865 = vld [vmem:[#allocation11 + $0x110] sm:$0xff]
    %v1866 = vld [vmem:[#allocation11 + $0x118] sm:$0xff]
    %v1867 = vld [vmem:[#allocation11 + $0x120] sm:$0xff]
    %v1868 = vld [vmem:[#allocation11 + $0x128] sm:$0xff]
    %v1869 = vld [vmem:[#allocation11 + $0x130] sm:$0xff]
    %v1870 = vld [vmem:[#allocation11 + $0x138] sm:$0xff]
    %v1871 = vld [vmem:[#allocation11 + $0x140] sm:$0xff]
    %v1872 = vld [vmem:[#allocation11 + $0x148] sm:$0xff]
    %v1873 = vld [vmem:[#allocation11 + $0x150] sm:$0xff]
    %v1874 = vld [vmem:[#allocation11 + $0x158] sm:$0xff]
    %v1875 = vld [vmem:[#allocation11 + $0x160] sm:$0xff]
    %v1876 = vld [vmem:[#allocation11 + $0x168] sm:$0xff]
    %v1877 = vld [vmem:[#allocation11 + $0x170] sm:$0xff]
    %v1878 = vld [vmem:[#allocation11 + $0x178] sm:$0xff]
    %v1879 = vld [vmem:[#allocation11 + $0x180] sm:$0xff]
    %v1880 = vld [vmem:[#allocation11 + $0x188] sm:$0xff]
    %v1881 = vld [vmem:[#allocation11 + $0x190] sm:$0xff]
    %v1882 = vld [vmem:[#allocation11 + $0x198] sm:$0xff]
    %v1883 = vld [vmem:[#allocation11 + $0x1a0] sm:$0xff]
    %v1884 = vld [vmem:[#allocation11 + $0x1a8] sm:$0xff]
    %v1885 = vld [vmem:[#allocation11 + $0x1b0] sm:$0xff]
    %v1886 = vld [vmem:[#allocation11 + $0x1b8] sm:$0xff]
    %v1887 = vld [vmem:[#allocation11 + $0x1c0] sm:$0xff]
    %v1888 = vld [vmem:[#allocation11 + $0x1c8] sm:$0xff]
    %v1889 = vld [vmem:[#allocation11 + $0x1d0] sm:$0xff]
    %v1890 = vld [vmem:[#allocation11 + $0x1d8] sm:$0xff]
    %v1891 = vld [vmem:[#allocation11 + $0x1e0] sm:$0xff]
    %v1892 = vld [vmem:[#allocation11 + $0x1e8] sm:$0xff]
    %v1893 = vld [vmem:[#allocation11 + $0x1f0] sm:$0xff]
    %v1894 = vld [vmem:[#allocation11 + $0x1f8] sm:$0xff]
    %v1895 = vld [vmem:[#allocation11 + $0x200] sm:$0xff]
    %v1896 = vld [vmem:[#allocation11 + $0x208] sm:$0xff]
    %v1897 = vld [vmem:[#allocation11 + $0x210] sm:$0xff]
    %v1898 = vld [vmem:[#allocation11 + $0x218] sm:$0xff]
    %v1899 = vld [vmem:[#allocation11 + $0x220] sm:$0xff]
    %v1900 = vld [vmem:[#allocation11 + $0x228] sm:$0xff]
    %v1901 = vld [vmem:[#allocation11 + $0x230] sm:$0xff]
    %v1902 = vld [vmem:[#allocation11 + $0x238] sm:$0xff]
    %v1903 = vld [vmem:[#allocation11 + $0x240] sm:$0xff]
    %v1904 = vld [vmem:[#allocation11 + $0x248] sm:$0xff]
    %v1905 = vld [vmem:[#allocation11 + $0x250] sm:$0xff]
    %v1906 = vld [vmem:[#allocation11 + $0x258] sm:$0xff]
    %v1907 = vld [vmem:[#allocation11 + $0x260] sm:$0xff]
    %v1908 = vld [vmem:[#allocation11 + $0x268] sm:$0xff]
    %v1909 = vld [vmem:[#allocation11 + $0x270] sm:$0xff]
    %v1910 = vld [vmem:[#allocation11 + $0x278] sm:$0xff]
    %v1911 = vld [vmem:[#allocation11 + $0x280] sm:$0xff]
    %v1912 = vld [vmem:[#allocation11 + $0x288] sm:$0xff]
    %v1913 = vld [vmem:[#allocation11 + $0x290] sm:$0xff]
    %v1914 = vld [vmem:[#allocation11 + $0x298] sm:$0xff]
    %v1915 = vld [vmem:[#allocation11 + $0x2a0] sm:$0xff]
    %v1916 = vld [vmem:[#allocation11 + $0x2a8] sm:$0xff]
    %v1917 = vld [vmem:[#allocation11 + $0x2b0] sm:$0xff]
    %v1918 = vld [vmem:[#allocation11 + $0x2b8] sm:$0xff]
    %v1919 = vld [vmem:[#allocation11 + $0x2c0] sm:$0xff]
    %v1920 = vld [vmem:[#allocation11 + $0x2c8] sm:$0xff]
    %v1921 = vld [vmem:[#allocation11 + $0x2d0] sm:$0xff]
    %v1922 = vld [vmem:[#allocation11 + $0x2d8] sm:$0xff]
    %v1923 = vld [vmem:[#allocation11 + $0x2e0] sm:$0xff]
    %v1924 = vld [vmem:[#allocation11 + $0x2e8] sm:$0xff]
    %v1925 = vld [vmem:[#allocation11 + $0x2f0] sm:$0xff]
    %v1926 = vld [vmem:[#allocation11 + $0x2f8] sm:$0xff]
    %v1927 = vld [vmem:[#allocation11 + $0x300] sm:$0xff]
    %v1928 = vld [vmem:[#allocation11 + $0x308] sm:$0xff]
    %v1929 = vld [vmem:[#allocation11 + $0x310] sm:$0xff]
    %v1930 = vld [vmem:[#allocation11 + $0x318] sm:$0xff]
    %v1931 = vld [vmem:[#allocation11 + $0x320] sm:$0xff]
    %v1932 = vld [vmem:[#allocation11 + $0x328] sm:$0xff]
    %v1933 = vld [vmem:[#allocation11 + $0x330] sm:$0xff]
    %v1934 = vld [vmem:[#allocation11 + $0x338] sm:$0xff]
    %v1935 = vld [vmem:[#allocation11 + $0x340] sm:$0xff]
    %v1936 = vld [vmem:[#allocation11 + $0x348] sm:$0xff]
    %v1937 = vld [vmem:[#allocation11 + $0x350] sm:$0xff]
    %v1938 = vld [vmem:[#allocation11 + $0x358] sm:$0xff]
    %v1939 = vld [vmem:[#allocation11 + $0x360] sm:$0xff]
    %v1940 = vld [vmem:[#allocation11 + $0x368] sm:$0xff]
    %v1941 = vld [vmem:[#allocation11 + $0x370] sm:$0xff]
    %v1942 = vld [vmem:[#allocation11 + $0x378] sm:$0xff]
    %v1943 = vld [vmem:[#allocation11 + $0x380] sm:$0xff]
    %v1944 = vld [vmem:[#allocation11 + $0x388] sm:$0xff]
    %v1945 = vld [vmem:[#allocation11 + $0x390] sm:$0xff]
    %v1946 = vld [vmem:[#allocation11 + $0x398] sm:$0xff]
    %v1947 = vld [vmem:[#allocation11 + $0x3a0] sm:$0xff]
    %v1948 = vld [vmem:[#allocation11 + $0x3a8] sm:$0xff]
    %v1949 = vld [vmem:[#allocation11 + $0x3b0] sm:$0xff]
    %v1950 = vld [vmem:[#allocation11 + $0x3b8] sm:$0xff]
    %v1951 = vld [vmem:[#allocation11 + $0x3c0] sm:$0xff]
    %v1952 = vld [vmem:[#allocation11 + $0x3c8] sm:$0xff]
    %v1953 = vld [vmem:[#allocation11 + $0x3d0] sm:$0xff]
    %v1954 = vld [vmem:[#allocation11 + $0x3d8] sm:$0xff]
    %v1955 = vld [vmem:[#allocation11 + $0x3e0] sm:$0xff]
    %v1956 = vld [vmem:[#allocation11 + $0x3e8] sm:$0xff]
    %v1957 = vld [vmem:[#allocation11 + $0x3f0] sm:$0xff]
    %v1958 = vld [vmem:[#allocation11 + $0x3f8] sm:$0xff]
    %v1959 = vld [vmem:[#allocation11 + $0x400] sm:$0xff]
    %v1960 = vld [vmem:[#allocation11 + $0x408] sm:$0xff]
    %v1961 = vld [vmem:[#allocation11 + $0x410] sm:$0xff]
    %v1962 = vld [vmem:[#allocation11 + $0x418] sm:$0xff]
    %v1963 = vld [vmem:[#allocation11 + $0x420] sm:$0xff]
    %v1964 = vld [vmem:[#allocation11 + $0x428] sm:$0xff]
    %v1965 = vld [vmem:[#allocation11 + $0x430] sm:$0xff]
    %v1966 = vld [vmem:[#allocation11 + $0x438] sm:$0xff]
    %v1967 = vld [vmem:[#allocation11 + $0x440] sm:$0xff]
    %v1968 = vld [vmem:[#allocation11 + $0x448] sm:$0xff]
    %v1969 = vld [vmem:[#allocation11 + $0x450] sm:$0xff]
    %v1970 = vld [vmem:[#allocation11 + $0x458] sm:$0xff]
    %v1971 = vld [vmem:[#allocation11 + $0x460] sm:$0xff]
    %v1972 = vld [vmem:[#allocation11 + $0x468] sm:$0xff]
    %v1973 = vld [vmem:[#allocation11 + $0x470] sm:$0xff]
    %v1974 = vld [vmem:[#allocation11 + $0x478] sm:$0xff]
    %v1975 = vld [vmem:[#allocation11 + $0x480] sm:$0xff]
    %v1976 = vld [vmem:[#allocation11 + $0x488] sm:$0xff]
    %v1977 = vld [vmem:[#allocation11 + $0x490] sm:$0xff]
    %v1978 = vld [vmem:[#allocation11 + $0x498] sm:$0xff]
    %v1979 = vld [vmem:[#allocation11 + $0x4a0] sm:$0xff]
    %v1980 = vld [vmem:[#allocation11 + $0x4a8] sm:$0xff]
    %v1981 = vld [vmem:[#allocation11 + $0x4b0] sm:$0xff]
    %v1982 = vld [vmem:[#allocation11 + $0x4b8] sm:$0xff]
    %v1983 = vld [vmem:[#allocation11 + $0x4c0] sm:$0xff]
    %v1984 = vld [vmem:[#allocation11 + $0x4c8] sm:$0xff]
    %v1985 = vld [vmem:[#allocation11 + $0x4d0] sm:$0xff]
    %v1986 = vld [vmem:[#allocation11 + $0x4d8] sm:$0xff]
    %v1987 = vld [vmem:[#allocation11 + $0x4e0] sm:$0xff]
    %v1988 = vld [vmem:[#allocation11 + $0x4e8] sm:$0xff]
    %v1989 = vld [vmem:[#allocation11 + $0x4f0] sm:$0xff]
    %v1990 = vld [vmem:[#allocation11 + $0x4f8] sm:$0xff]
    %v1991 = vld [vmem:[#allocation11 + $0x500] sm:$0xff]
    %v1992 = vld [vmem:[#allocation11 + $0x508] sm:$0xff]
    %v1993 = vld [vmem:[#allocation11 + $0x510] sm:$0xff]
    %v1994 = vld [vmem:[#allocation11 + $0x518] sm:$0xff]
    %v1995 = vld [vmem:[#allocation11 + $0x520] sm:$0xff]
    %v1996 = vld [vmem:[#allocation11 + $0x528] sm:$0xff]
    %v1997 = vld [vmem:[#allocation11 + $0x530] sm:$0xff]
    %v1998 = vld [vmem:[#allocation11 + $0x538] sm:$0xff]
    %v1999 = vld [vmem:[%s10] sm:$0xff]
    %v2000 = vld [vmem:[%s10 + $0x8] sm:$0xff]
    %v2001 = vld [vmem:[%s10 + $0x10] sm:$0xff]
    %v2002 = vld [vmem:[%s10 + $0x18] sm:$0xff]
    %v2003 = vld [vmem:[%s10 + $0x20] sm:$0xff]
    %v2004 = vld [vmem:[%s10 + $0x28] sm:$0xff]
    %v2005 = vld [vmem:[%s10 + $0x30] sm:$0xff]
    %v2006 = vld [vmem:[%s10 + $0x38] sm:$0xff]
    %v2007 = vld [vmem:[%s10 + $0x40] sm:$0xff]
    %v2008 = vld [vmem:[%s10 + $0x48] sm:$0xff]
    %v2009 = vld [vmem:[%s10 + $0x50] sm:$0xff]
    %v2010 = vld [vmem:[%s10 + $0x58] sm:$0xff]
    %v2011 = vld [vmem:[%s10 + $0x60] sm:$0xff]
    %v2012 = vld [vmem:[%s10 + $0x68] sm:$0xff]
    %vm2013 = vcmask 523264
    %v2015 = vsel %vm2013, %v1817, 0
    %v2018 = vsel %vm2013, %v1818, 0
    %2020 = vmatpush.msra.mxu0 0.0
    %2021 = vmatpush.msra.mxu0 0.0
    %2022 = vmatpush.msra.mxu0 0.0
    %2023 = vmatpush.msra.mxu0 0.0
    %2024 = vmatpush.msra.mxu0 0.0
    %2025 = vmatpush.msra.mxu0 0.0
    %2026 = vmatpush.msra.mxu0 0.0
    %2027 = vmatpush.msra.mxu0 0.0
    %2028 = vmatpush.msra.mxu0 %v1852
    %2029 = vmatpush.msra.mxu0 %v1849
    %2030 = vmatpush.msra.mxu0 %v1846
    %2031 = vmatpush.msra.mxu0 %v1843
    %2032 = vmatpush.msra.mxu0 %v1840
    %2033 = vmatpush.msra.mxu0 %v1837
    %2034 = vmatpush.msra.mxu0 %v1834
    %2035 = vmatpush.msra.mxu0 %v1831
    %2036 = vmatmul.f32.gmra.mxu0 %v2015
    %v2037 = vpop.f32.mrf.mxu0
    %v2038 = vadd.f32 0.0, %v2037
    %2039 = vmatmul.f32.gmra.mxu0 %v2018
    %v2040 = vpop.f32.mrf.mxu0
    %v2041 = vadd.f32 0.0, %v2040
    %2042 = vdwg.mxu0
    %2043 = vmatpush.msra.mxu0 0.0
    %2044 = vmatpush.msra.mxu0 0.0
    %2045 = vmatpush.msra.mxu0 0.0
    %2046 = vmatpush.msra.mxu0 0.0
    %2047 = vmatpush.msra.mxu0 0.0
    %2048 = vmatpush.msra.mxu0 0.0
    %2049 = vmatpush.msra.mxu0 0.0
    %2050 = vmatpush.msra.mxu0 0.0
    %2051 = vmatpush.msra.mxu0 %v1853
    %2052 = vmatpush.msra.mxu0 %v1850
    %2053 = vmatpush.msra.mxu0 %v1847
    %2054 = vmatpush.msra.mxu0 %v1844
    %2055 = vmatpush.msra.mxu0 %v1841
    %2056 = vmatpush.msra.mxu0 %v1838
    %2057 = vmatpush.msra.mxu0 %v1835
    %2058 = vmatpush.msra.mxu0 %v1832
    %2059 = vmatmul.f32.gmra.mxu0 %v2015
    %v2060 = vpop.f32.mrf.mxu0
    %v2061 = vadd.f32 0.0, %v2060
    %2062 = vmatmul.f32.gmra.mxu0 %v2018
    %v2063 = vpop.f32.mrf.mxu0
    %v2064 = vadd.f32 0.0, %v2063
    %2065 = vdwg.mxu0
    %2066 = vmatpush.msra.mxu0 0.0
    %2067 = vmatpush.msra.mxu0 0.0
    %2068 = vmatpush.msra.mxu0 0.0
    %2069 = vmatpush.msra.mxu0 0.0
    %2070 = vmatpush.msra.mxu0 0.0
    %2071 = vmatpush.msra.mxu0 0.0
    %2072 = vmatpush.msra.mxu0 0.0
    %2073 = vmatpush.msra.mxu0 0.0
    %2074 = vmatpush.msra.mxu0 %v1854
    %2075 = vmatpush.msra.mxu0 %v1851
    %2076 = vmatpush.msra.mxu0 %v1848
    %2077 = vmatpush.msra.mxu0 %v1845
    %2078 = vmatpush.msra.mxu0 %v1842
    %2079 = vmatpush.msra.mxu0 %v1839
    %2080 = vmatpush.msra.mxu0 %v1836
    %2081 = vmatpush.msra.mxu0 %v1833
    %2082 = vmatmul.f32.gmra.mxu0 %v2015
    %v2083 = vpop.f32.mrf.mxu0
    %v2084 = vadd.f32 0.0, %v2083
    %2085 = vmatmul.f32.gmra.mxu0 %v2018
    %v2086 = vpop.f32.mrf.mxu0
    %v2087 = vadd.f32 0.0, %v2086
    %2088 = vdwg.mxu0
    %v2090 = vsel %vm2013, %v1819, 0
    %v2093 = vsel %vm2013, %v1820, 0
    %2095 = vmatpush.msra.mxu0 0.0
    %2096 = vmatpush.msra.mxu0 0.0
    %2097 = vmatpush.msra.mxu0 0.0
    %2098 = vmatpush.msra.mxu0 0.0
    %2099 = vmatpush.msra.mxu0 0.0
    %2100 = vmatpush.msra.mxu0 0.0
    %2101 = vmatpush.msra.mxu0 0.0
    %2102 = vmatpush.msra.mxu0 0.0
    %2103 = vmatpush.msra.mxu0 %v1876
    %2104 = vmatpush.msra.mxu0 %v1873
    %2105 = vmatpush.msra.mxu0 %v1870
    %2106 = vmatpush.msra.mxu0 %v1867
    %2107 = vmatpush.msra.mxu0 %v1864
    %2108 = vmatpush.msra.mxu0 %v1861
    %2109 = vmatpush.msra.mxu0 %v1858
    %2110 = vmatpush.msra.mxu0 %v1855
    %2111 = vmatmul.f32.gmra.mxu0 %v2090
    %v2112 = vpop.f32.mrf.mxu0
    %v2113 = vadd.f32 0.0, %v2112
    %2114 = vmatmul.f32.gmra.mxu0 %v2093
    %v2115 = vpop.f32.mrf.mxu0
    %v2116 = vadd.f32 0.0, %v2115
    %2117 = vdwg.mxu0
    %2118 = vmatpush.msra.mxu0 0.0
    %2119 = vmatpush.msra.mxu0 0.0
    %2120 = vmatpush.msra.mxu0 0.0
    %2121 = vmatpush.msra.mxu0 0.0
    %2122 = vmatpush.msra.mxu0 0.0
    %2123 = vmatpush.msra.mxu0 0.0
    %2124 = vmatpush.msra.mxu0 0.0
    %2125 = vmatpush.msra.mxu0 0.0
    %2126 = vmatpush.msra.mxu0 %v1877
    %2127 = vmatpush.msra.mxu0 %v1874
    %2128 = vmatpush.msra.mxu0 %v1871
    %2129 = vmatpush.msra.mxu0 %v1868
    %2130 = vmatpush.msra.mxu0 %v1865
    %2131 = vmatpush.msra.mxu0 %v1862
    %2132 = vmatpush.msra.mxu0 %v1859
    %2133 = vmatpush.msra.mxu0 %v1856
    %2134 = vmatmul.f32.gmra.mxu0 %v2090
    %v2135 = vpop.f32.mrf.mxu0
    %v2136 = vadd.f32 0.0, %v2135
    %2137 = vmatmul.f32.gmra.mxu0 %v2093
    %v2138 = vpop.f32.mrf.mxu0
    %v2139 = vadd.f32 0.0, %v2138
    %2140 = vdwg.mxu0
    %2141 = vmatpush.msra.mxu0 0.0
    %2142 = vmatpush.msra.mxu0 0.0
    %2143 = vmatpush.msra.mxu0 0.0
    %2144 = vmatpush.msra.mxu0 0.0
    %2145 = vmatpush.msra.mxu0 0.0
    %2146 = vmatpush.msra.mxu0 0.0
    %2147 = vmatpush.msra.mxu0 0.0
    %2148 = vmatpush.msra.mxu0 0.0
    %2149 = vmatpush.msra.mxu0 %v1878
    %2150 = vmatpush.msra.mxu0 %v1875
    %2151 = vmatpush.msra.mxu0 %v1872
    %2152 = vmatpush.msra.mxu0 %v1869
    %2153 = vmatpush.msra.mxu0 %v1866
    %2154 = vmatpush.msra.mxu0 %v1863
    %2155 = vmatpush.msra.mxu0 %v1860
    %2156 = vmatpush.msra.mxu0 %v1857
    %2157 = vmatmul.f32.gmra.mxu0 %v2090
    %v2158 = vpop.f32.mrf.mxu0
    %v2159 = vadd.f32 0.0, %v2158
    %2160 = vmatmul.f32.gmra.mxu0 %v2093
    %v2161 = vpop.f32.mrf.mxu0
    %v2162 = vadd.f32 0.0, %v2161
    %2163 = vdwg.mxu0
    %v2165 = vsel %vm2013, %v1821, 0
    %v2168 = vsel %vm2013, %v1822, 0
    %2170 = vmatpush.msra.mxu0 0.0
    %2171 = vmatpush.msra.mxu0 0.0
    %2172 = vmatpush.msra.mxu0 0.0
    %2173 = vmatpush.msra.mxu0 0.0
    %2174 = vmatpush.msra.mxu0 0.0
    %2175 = vmatpush.msra.mxu0 0.0
    %2176 = vmatpush.msra.mxu0 0.0
    %2177 = vmatpush.msra.mxu0 0.0
    %2178 = vmatpush.msra.mxu0 %v1900
    %2179 = vmatpush.msra.mxu0 %v1897
    %2180 = vmatpush.msra.mxu0 %v1894
    %2181 = vmatpush.msra.mxu0 %v1891
    %2182 = vmatpush.msra.mxu0 %v1888
    %2183 = vmatpush.msra.mxu0 %v1885
    %2184 = vmatpush.msra.mxu0 %v1882
    %2185 = vmatpush.msra.mxu0 %v1879
    %2186 = vmatmul.f32.gmra.mxu0 %v2165
    %v2187 = vpop.f32.mrf.mxu0
    %v2188 = vadd.f32 0.0, %v2187
    %2189 = vmatmul.f32.gmra.mxu0 %v2168
    %v2190 = vpop.f32.mrf.mxu0
    %v2191 = vadd.f32 0.0, %v2190
    %2192 = vdwg.mxu0
    %2193 = vmatpush.msra.mxu0 0.0
    %2194 = vmatpush.msra.mxu0 0.0
    %2195 = vmatpush.msra.mxu0 0.0
    %2196 = vmatpush.msra.mxu0 0.0
    %2197 = vmatpush.msra.mxu0 0.0
    %2198 = vmatpush.msra.mxu0 0.0
    %2199 = vmatpush.msra.mxu0 0.0
    %2200 = vmatpush.msra.mxu0 0.0
    %2201 = vmatpush.msra.mxu0 %v1901
    %2202 = vmatpush.msra.mxu0 %v1898
    %2203 = vmatpush.msra.mxu0 %v1895
    %2204 = vmatpush.msra.mxu0 %v1892
    %2205 = vmatpush.msra.mxu0 %v1889
    %2206 = vmatpush.msra.mxu0 %v1886
    %2207 = vmatpush.msra.mxu0 %v1883
    %2208 = vmatpush.msra.mxu0 %v1880
    %2209 = vmatmul.f32.gmra.mxu0 %v2165
    %v2210 = vpop.f32.mrf.mxu0
    %v2211 = vadd.f32 0.0, %v2210
    %2212 = vmatmul.f32.gmra.mxu0 %v2168
    %v2213 = vpop.f32.mrf.mxu0
    %v2214 = vadd.f32 0.0, %v2213
    %2215 = vdwg.mxu0
    %2216 = vmatpush.msra.mxu0 0.0
    %2217 = vmatpush.msra.mxu0 0.0
    %2218 = vmatpush.msra.mxu0 0.0
    %2219 = vmatpush.msra.mxu0 0.0
    %2220 = vmatpush.msra.mxu0 0.0
    %2221 = vmatpush.msra.mxu0 0.0
    %2222 = vmatpush.msra.mxu0 0.0
    %2223 = vmatpush.msra.mxu0 0.0
    %2224 = vmatpush.msra.mxu0 %v1902
    %2225 = vmatpush.msra.mxu0 %v1899
    %2226 = vmatpush.msra.mxu0 %v1896
    %2227 = vmatpush.msra.mxu0 %v1893
    %2228 = vmatpush.msra.mxu0 %v1890
    %2229 = vmatpush.msra.mxu0 %v1887
    %2230 = vmatpush.msra.mxu0 %v1884
    %2231 = vmatpush.msra.mxu0 %v1881
    %2232 = vmatmul.f32.gmra.mxu0 %v2165
    %v2233 = vpop.f32.mrf.mxu0
    %v2234 = vadd.f32 0.0, %v2233
    %2235 = vmatmul.f32.gmra.mxu0 %v2168
    %v2236 = vpop.f32.mrf.mxu0
    %v2237 = vadd.f32 0.0, %v2236
    %2238 = vdwg.mxu0
    %v2240 = vsel %vm2013, %v1823, 0
    %v2243 = vsel %vm2013, %v1824, 0
    %2245 = vmatpush.msra.mxu0 0.0
    %2246 = vmatpush.msra.mxu0 0.0
    %2247 = vmatpush.msra.mxu0 0.0
    %2248 = vmatpush.msra.mxu0 0.0
    %2249 = vmatpush.msra.mxu0 0.0
    %2250 = vmatpush.msra.mxu0 0.0
    %2251 = vmatpush.msra.mxu0 0.0
    %2252 = vmatpush.msra.mxu0 0.0
    %2253 = vmatpush.msra.mxu0 %v1924
    %2254 = vmatpush.msra.mxu0 %v1921
    %2255 = vmatpush.msra.mxu0 %v1918
    %2256 = vmatpush.msra.mxu0 %v1915
    %2257 = vmatpush.msra.mxu0 %v1912
    %2258 = vmatpush.msra.mxu0 %v1909
    %2259 = vmatpush.msra.mxu0 %v1906
    %2260 = vmatpush.msra.mxu0 %v1903
    %2261 = vmatmul.f32.gmra.mxu0 %v2240
    %v2262 = vpop.f32.mrf.mxu0
    %v2263 = vadd.f32 0.0, %v2262
    %2264 = vmatmul.f32.gmra.mxu0 %v2243
    %v2265 = vpop.f32.mrf.mxu0
    %v2266 = vadd.f32 0.0, %v2265
    %2267 = vdwg.mxu0
    %2268 = vmatpush.msra.mxu0 0.0
    %2269 = vmatpush.msra.mxu0 0.0
    %2270 = vmatpush.msra.mxu0 0.0
    %2271 = vmatpush.msra.mxu0 0.0
    %2272 = vmatpush.msra.mxu0 0.0
    %2273 = vmatpush.msra.mxu0 0.0
    %2274 = vmatpush.msra.mxu0 0.0
    %2275 = vmatpush.msra.mxu0 0.0
    %2276 = vmatpush.msra.mxu0 %v1925
    %2277 = vmatpush.msra.mxu0 %v1922
    %2278 = vmatpush.msra.mxu0 %v1919
    %2279 = vmatpush.msra.mxu0 %v1916
    %2280 = vmatpush.msra.mxu0 %v1913
    %2281 = vmatpush.msra.mxu0 %v1910
    %2282 = vmatpush.msra.mxu0 %v1907
    %2283 = vmatpush.msra.mxu0 %v1904
    %2284 = vmatmul.f32.gmra.mxu0 %v2240
    %v2285 = vpop.f32.mrf.mxu0
    %v2286 = vadd.f32 0.0, %v2285
    %2287 = vmatmul.f32.gmra.mxu0 %v2243
    %v2288 = vpop.f32.mrf.mxu0
    %v2289 = vadd.f32 0.0, %v2288
    %2290 = vdwg.mxu0
    %2291 = vmatpush.msra.mxu0 0.0
    %2292 = vmatpush.msra.mxu0 0.0
    %2293 = vmatpush.msra.mxu0 0.0
    %2294 = vmatpush.msra.mxu0 0.0
    %2295 = vmatpush.msra.mxu0 0.0
    %2296 = vmatpush.msra.mxu0 0.0
    %2297 = vmatpush.msra.mxu0 0.0
    %2298 = vmatpush.msra.mxu0 0.0
    %2299 = vmatpush.msra.mxu0 %v1926
    %2300 = vmatpush.msra.mxu0 %v1923
    %2301 = vmatpush.msra.mxu0 %v1920
    %2302 = vmatpush.msra.mxu0 %v1917
    %2303 = vmatpush.msra.mxu0 %v1914
    %2304 = vmatpush.msra.mxu0 %v1911
    %2305 = vmatpush.msra.mxu0 %v1908
    %2306 = vmatpush.msra.mxu0 %v1905
    %2307 = vmatmul.f32.gmra.mxu0 %v2240
    %v2308 = vpop.f32.mrf.mxu0
    %v2309 = vadd.f32 0.0, %v2308
    %2310 = vmatmul.f32.gmra.mxu0 %v2243
    %v2311 = vpop.f32.mrf.mxu0
    %v2312 = vadd.f32 0.0, %v2311
    %2313 = vdwg.mxu0
    %v2315 = vsel %vm2013, %v1825, 0
    %v2318 = vsel %vm2013, %v1826, 0
    %2320 = vmatpush.msra.mxu0 0.0
    %2321 = vmatpush.msra.mxu0 0.0
    %2322 = vmatpush.msra.mxu0 0.0
    %2323 = vmatpush.msra.mxu0 0.0
    %2324 = vmatpush.msra.mxu0 0.0
    %2325 = vmatpush.msra.mxu0 0.0
    %2326 = vmatpush.msra.mxu0 0.0
    %2327 = vmatpush.msra.mxu0 0.0
    %2328 = vmatpush.msra.mxu0 %v1948
    %2329 = vmatpush.msra.mxu0 %v1945
    %2330 = vmatpush.msra.mxu0 %v1942
    %2331 = vmatpush.msra.mxu0 %v1939
    %2332 = vmatpush.msra.mxu0 %v1936
    %2333 = vmatpush.msra.mxu0 %v1933
    %2334 = vmatpush.msra.mxu0 %v1930
    %2335 = vmatpush.msra.mxu0 %v1927
    %2336 = vmatmul.f32.gmra.mxu0 %v2315
    %v2337 = vpop.f32.mrf.mxu0
    %v2338 = vadd.f32 0.0, %v2337
    %2339 = vmatmul.f32.gmra.mxu0 %v2318
    %v2340 = vpop.f32.mrf.mxu0
    %v2341 = vadd.f32 0.0, %v2340
    %2342 = vdwg.mxu0
    %2343 = vmatpush.msra.mxu0 0.0
    %2344 = vmatpush.msra.mxu0 0.0
    %2345 = vmatpush.msra.mxu0 0.0
    %2346 = vmatpush.msra.mxu0 0.0
    %2347 = vmatpush.msra.mxu0 0.0
    %2348 = vmatpush.msra.mxu0 0.0
    %2349 = vmatpush.msra.mxu0 0.0
    %2350 = vmatpush.msra.mxu0 0.0
    %2351 = vmatpush.msra.mxu0 %v1949
    %2352 = vmatpush.msra.mxu0 %v1946
    %2353 = vmatpush.msra.mxu0 %v1943
    %2354 = vmatpush.msra.mxu0 %v1940
    %2355 = vmatpush.msra.mxu0 %v1937
    %2356 = vmatpush.msra.mxu0 %v1934
    %2357 = vmatpush.msra.mxu0 %v1931
    %2358 = vmatpush.msra.mxu0 %v1928
    %2359 = vmatmul.f32.gmra.mxu0 %v2315
    %v2360 = vpop.f32.mrf.mxu0
    %v2361 = vadd.f32 0.0, %v2360
    %2362 = vmatmul.f32.gmra.mxu0 %v2318
    %v2363 = vpop.f32.mrf.mxu0
    %v2364 = vadd.f32 0.0, %v2363
    %2365 = vdwg.mxu0
    %2366 = vmatpush.msra.mxu0 0.0
    %2367 = vmatpush.msra.mxu0 0.0
    %2368 = vmatpush.msra.mxu0 0.0
    %2369 = vmatpush.msra.mxu0 0.0
    %2370 = vmatpush.msra.mxu0 0.0
    %2371 = vmatpush.msra.mxu0 0.0
    %2372 = vmatpush.msra.mxu0 0.0
    %2373 = vmatpush.msra.mxu0 0.0
    %2374 = vmatpush.msra.mxu0 %v1950
    %2375 = vmatpush.msra.mxu0 %v1947
    %2376 = vmatpush.msra.mxu0 %v1944
    %2377 = vmatpush.msra.mxu0 %v1941
    %2378 = vmatpush.msra.mxu0 %v1938
    %2379 = vmatpush.msra.mxu0 %v1935
    %2380 = vmatpush.msra.mxu0 %v1932
    %2381 = vmatpush.msra.mxu0 %v1929
    %2382 = vmatmul.f32.gmra.mxu0 %v2315
    %v2383 = vpop.f32.mrf.mxu0
    %v2384 = vadd.f32 0.0, %v2383
    %2385 = vmatmul.f32.gmra.mxu0 %v2318
    %v2386 = vpop.f32.mrf.mxu0
    %v2387 = vadd.f32 0.0, %v2386
    %2388 = vdwg.mxu0
    %v2390 = vsel %vm2013, %v1827, 0
    %v2393 = vsel %vm2013, %v1828, 0
    %2395 = vmatpush.msra.mxu0 0.0
    %2396 = vmatpush.msra.mxu0 0.0
    %2397 = vmatpush.msra.mxu0 0.0
    %2398 = vmatpush.msra.mxu0 0.0
    %2399 = vmatpush.msra.mxu0 0.0
    %2400 = vmatpush.msra.mxu0 0.0
    %2401 = vmatpush.msra.mxu0 0.0
    %2402 = vmatpush.msra.mxu0 0.0
    %2403 = vmatpush.msra.mxu0 %v1972
    %2404 = vmatpush.msra.mxu0 %v1969
    %2405 = vmatpush.msra.mxu0 %v1966
    %2406 = vmatpush.msra.mxu0 %v1963
    %2407 = vmatpush.msra.mxu0 %v1960
    %2408 = vmatpush.msra.mxu0 %v1957
    %2409 = vmatpush.msra.mxu0 %v1954
    %2410 = vmatpush.msra.mxu0 %v1951
    %2411 = vmatmul.f32.gmra.mxu0 %v2390
    %v2412 = vpop.f32.mrf.mxu0
    %v2413 = vadd.f32 0.0, %v2412
    %2414 = vmatmul.f32.gmra.mxu0 %v2393
    %v2415 = vpop.f32.mrf.mxu0
    %v2416 = vadd.f32 0.0, %v2415
    %2417 = vdwg.mxu0
    %2418 = vmatpush.msra.mxu0 0.0
    %2419 = vmatpush.msra.mxu0 0.0
    %2420 = vmatpush.msra.mxu0 0.0
    %2421 = vmatpush.msra.mxu0 0.0
    %2422 = vmatpush.msra.mxu0 0.0
    %2423 = vmatpush.msra.mxu0 0.0
    %2424 = vmatpush.msra.mxu0 0.0
    %2425 = vmatpush.msra.mxu0 0.0
    %2426 = vmatpush.msra.mxu0 %v1973
    %2427 = vmatpush.msra.mxu0 %v1970
    %2428 = vmatpush.msra.mxu0 %v1967
    %2429 = vmatpush.msra.mxu0 %v1964
    %2430 = vmatpush.msra.mxu0 %v1961
    %2431 = vmatpush.msra.mxu0 %v1958
    %2432 = vmatpush.msra.mxu0 %v1955
    %2433 = vmatpush.msra.mxu0 %v1952
    %2434 = vmatmul.f32.gmra.mxu0 %v2390
    %v2435 = vpop.f32.mrf.mxu0
    %v2436 = vadd.f32 0.0, %v2435
    %2437 = vmatmul.f32.gmra.mxu0 %v2393
    %v2438 = vpop.f32.mrf.mxu0
    %v2439 = vadd.f32 0.0, %v2438
    %2440 = vdwg.mxu0
    %2441 = vmatpush.msra.mxu0 0.0
    %2442 = vmatpush.msra.mxu0 0.0
    %2443 = vmatpush.msra.mxu0 0.0
    %2444 = vmatpush.msra.mxu0 0.0
    %2445 = vmatpush.msra.mxu0 0.0
    %2446 = vmatpush.msra.mxu0 0.0
    %2447 = vmatpush.msra.mxu0 0.0
    %2448 = vmatpush.msra.mxu0 0.0
    %2449 = vmatpush.msra.mxu0 %v1974
    %2450 = vmatpush.msra.mxu0 %v1971
    %2451 = vmatpush.msra.mxu0 %v1968
    %2452 = vmatpush.msra.mxu0 %v1965
    %2453 = vmatpush.msra.mxu0 %v1962
    %2454 = vmatpush.msra.mxu0 %v1959
    %2455 = vmatpush.msra.mxu0 %v1956
    %2456 = vmatpush.msra.mxu0 %v1953
    %2457 = vmatmul.f32.gmra.mxu0 %v2390
    %v2458 = vpop.f32.mrf.mxu0
    %v2459 = vadd.f32 0.0, %v2458
    %2460 = vmatmul.f32.gmra.mxu0 %v2393
    %v2461 = vpop.f32.mrf.mxu0
    %v2462 = vadd.f32 0.0, %v2461
    %2463 = vdwg.mxu0
    %v2465 = vsel %vm2013, %v1829, 0
    %v2468 = vsel %vm2013, %v1830, 0
    %2470 = vmatpush.msra.mxu0 0.0
    %2471 = vmatpush.msra.mxu0 0.0
    %2472 = vmatpush.msra.mxu0 0.0
    %2473 = vmatpush.msra.mxu0 0.0
    %2474 = vmatpush.msra.mxu0 0.0
    %2475 = vmatpush.msra.mxu0 0.0
    %2476 = vmatpush.msra.mxu0 0.0
    %2477 = vmatpush.msra.mxu0 0.0
    %2478 = vmatpush.msra.mxu0 %v1996
    %2479 = vmatpush.msra.mxu0 %v1993
    %2480 = vmatpush.msra.mxu0 %v1990
    %2481 = vmatpush.msra.mxu0 %v1987
    %2482 = vmatpush.msra.mxu0 %v1984
    %2483 = vmatpush.msra.mxu0 %v1981
    %2484 = vmatpush.msra.mxu0 %v1978
    %2485 = vmatpush.msra.mxu0 %v1975
    %2486 = vmatmul.f32.gmra.mxu0 %v2465
    %v2487 = vpop.f32.mrf.mxu0
    %v2488 = vadd.f32 0.0, %v2487
    %2489 = vmatmul.f32.gmra.mxu0 %v2468
    %v2490 = vpop.f32.mrf.mxu0
    %v2491 = vadd.f32 0.0, %v2490
    %2492 = vdwg.mxu0
    %2493 = vmatpush.msra.mxu0 0.0
    %2494 = vmatpush.msra.mxu0 0.0
    %2495 = vmatpush.msra.mxu0 0.0
    %2496 = vmatpush.msra.mxu0 0.0
    %2497 = vmatpush.msra.mxu0 0.0
    %2498 = vmatpush.msra.mxu0 0.0
    %2499 = vmatpush.msra.mxu0 0.0
    %2500 = vmatpush.msra.mxu0 0.0
    %2501 = vmatpush.msra.mxu0 %v1997
    %2502 = vmatpush.msra.mxu0 %v1994
    %2503 = vmatpush.msra.mxu0 %v1991
    %2504 = vmatpush.msra.mxu0 %v1988
    %2505 = vmatpush.msra.mxu0 %v1985
    %2506 = vmatpush.msra.mxu0 %v1982
    %2507 = vmatpush.msra.mxu0 %v1979
    %2508 = vmatpush.msra.mxu0 %v1976
    %2509 = vmatmul.f32.gmra.mxu0 %v2465
    %v2510 = vpop.f32.mrf.mxu0
    %v2511 = vadd.f32 0.0, %v2510
    %2512 = vmatmul.f32.gmra.mxu0 %v2468
    %v2513 = vpop.f32.mrf.mxu0
    %v2514 = vadd.f32 0.0, %v2513
    %2515 = vdwg.mxu0
    %2516 = vmatpush.msra.mxu0 0.0
    %2517 = vmatpush.msra.mxu0 0.0
    %2518 = vmatpush.msra.mxu0 0.0
    %2519 = vmatpush.msra.mxu0 0.0
    %2520 = vmatpush.msra.mxu0 0.0
    %2521 = vmatpush.msra.mxu0 0.0
    %2522 = vmatpush.msra.mxu0 0.0
    %2523 = vmatpush.msra.mxu0 0.0
    %2524 = vmatpush.msra.mxu0 %v1998
    %2525 = vmatpush.msra.mxu0 %v1995
    %2526 = vmatpush.msra.mxu0 %v1992
    %2527 = vmatpush.msra.mxu0 %v1989
    %2528 = vmatpush.msra.mxu0 %v1986
    %2529 = vmatpush.msra.mxu0 %v1983
    %2530 = vmatpush.msra.mxu0 %v1980
    %2531 = vmatpush.msra.mxu0 %v1977
    %2532 = vmatmul.f32.gmra.mxu0 %v2465
    %v2533 = vpop.f32.mrf.mxu0
    %v2534 = vadd.f32 0.0, %v2533
    %2535 = vmatmul.f32.gmra.mxu0 %v2468
    %v2536 = vpop.f32.mrf.mxu0
    %v2537 = vadd.f32 0.0, %v2536
    %2538 = vdwg.mxu0
    %v2539 = vmul.f32 %v2061, %v167
    %v2540 = vmul.f32 %v2064, %v168
    %v2541 = vmul.f32 %v2136, %v169
    %v2542 = vmul.f32 %v2139, %v170
    %v2543 = vmul.f32 %v2211, %v171
    %v2544 = vmul.f32 %v2214, %v172
    %v2545 = vmul.f32 %v2286, %v173
    %v2546 = vmul.f32 %v2289, %v174
    %v2547 = vmul.f32 %v2361, %v175
    %v2548 = vmul.f32 %v2364, %v176
    %v2549 = vmul.f32 %v2436, %v177
    %v2550 = vmul.f32 %v2439, %v178
    %v2551 = vmul.f32 %v2511, %v179
    %v2552 = vmul.f32 %v2514, %v180
    %2553 = vmatpush.msra.mxu0 0.0
    %2554 = vmatpush.msra.mxu0 0.0
    %2555 = vmatpush.msra.mxu0 %v2552
    %2556 = vmatpush.msra.mxu0 %v2551
    %2557 = vmatpush.msra.mxu0 %v2550
    %2558 = vmatpush.msra.mxu0 %v2549
    %2559 = vmatpush.msra.mxu0 %v2548
    %2560 = vmatpush.msra.mxu0 %v2547
    %2561 = vmatpush.msra.mxu0 %v2546
    %2562 = vmatpush.msra.mxu0 %v2545
    %2563 = vmatpush.msra.mxu0 %v2544
    %2564 = vmatpush.msra.mxu0 %v2543
    %2565 = vmatpush.msra.mxu0 %v2542
    %2566 = vmatpush.msra.mxu0 %v2541
    %2567 = vmatpush.msra.mxu0 %v2540
    %2568 = vmatpush.msra.mxu0 %v2539
    %2569 = vmatmul.f32.gmra.mxu0 %v881
    %v2570 = vpop.f32.mrf.mxu0
    %v2571 = vadd.f32 0.0, %v2570
    %2572 = vmatmul.f32.gmra.mxu0 %v884
    %v2573 = vpop.f32.mrf.mxu0
    %v2574 = vadd.f32 0.0, %v2573
    %2575 = vmatmul.f32.gmra.mxu0 %v887
    %v2576 = vpop.f32.mrf.mxu0
    %v2577 = vadd.f32 0.0, %v2576
    %2578 = vmatmul.f32.gmra.mxu0 %v890
    %v2579 = vpop.f32.mrf.mxu0
    %v2580 = vadd.f32 0.0, %v2579
    %2581 = vmatmul.f32.gmra.mxu0 %v893
    %v2582 = vpop.f32.mrf.mxu0
    %v2583 = vadd.f32 0.0, %v2582
    %2584 = vmatmul.f32.gmra.mxu0 %v896
    %v2585 = vpop.f32.mrf.mxu0
    %v2586 = vadd.f32 0.0, %v2585
    %2587 = vmatmul.f32.gmra.mxu0 %v899
    %v2588 = vpop.f32.mrf.mxu0
    %v2589 = vadd.f32 0.0, %v2588
    %2590 = vmatmul.f32.gmra.mxu0 %v902
    %v2591 = vpop.f32.mrf.mxu0
    %v2592 = vadd.f32 0.0, %v2591
    %2593 = vmatmul.f32.gmra.mxu0 %v905
    %v2594 = vpop.f32.mrf.mxu0
    %v2595 = vadd.f32 0.0, %v2594
    %2596 = vmatmul.f32.gmra.mxu0 %v908
    %v2597 = vpop.f32.mrf.mxu0
    %v2598 = vadd.f32 0.0, %v2597
    %2599 = vmatmul.f32.gmra.mxu0 %v911
    %v2600 = vpop.f32.mrf.mxu0
    %v2601 = vadd.f32 0.0, %v2600
    %2602 = vmatmul.f32.gmra.mxu0 %v914
    %v2603 = vpop.f32.mrf.mxu0
    %v2604 = vadd.f32 0.0, %v2603
    %2605 = vmatmul.f32.gmra.mxu0 %v917
    %v2606 = vpop.f32.mrf.mxu0
    %v2607 = vadd.f32 0.0, %v2606
    %2608 = vmatmul.f32.gmra.mxu0 %v920
    %v2609 = vpop.f32.mrf.mxu0
    %v2610 = vadd.f32 0.0, %v2609
    %2611 = vdwg.mxu0
    %v2612 = vadd.f32 %v2038, %v2571
    %v2613 = vadd.f32 %v2041, %v2574
    %v2614 = vadd.f32 %v2113, %v2577
    %v2615 = vadd.f32 %v2116, %v2580
    %v2616 = vadd.f32 %v2188, %v2583
    %v2617 = vadd.f32 %v2191, %v2586
    %v2618 = vadd.f32 %v2263, %v2589
    %v2619 = vadd.f32 %v2266, %v2592
    %v2620 = vadd.f32 %v2338, %v2595
    %v2621 = vadd.f32 %v2341, %v2598
    %v2622 = vadd.f32 %v2413, %v2601
    %v2623 = vadd.f32 %v2416, %v2604
    %v2624 = vadd.f32 %v2488, %v2607
    %v2625 = vadd.f32 %v2491, %v2610
    %vm2626 = vcmp.gt.f32.partialorder %v2612, 0.0
    %vm2627 = vcmp.gt.f32.partialorder %v2613, 0.0
    %vm2628 = vcmp.gt.f32.partialorder %v2614, 0.0
    %vm2629 = vcmp.gt.f32.partialorder %v2615, 0.0
    %vm2630 = vcmp.gt.f32.partialorder %v2616, 0.0
    %vm2631 = vcmp.gt.f32.partialorder %v2617, 0.0
    %vm2632 = vcmp.gt.f32.partialorder %v2618, 0.0
    %vm2633 = vcmp.gt.f32.partialorder %v2619, 0.0
    %vm2634 = vcmp.gt.f32.partialorder %v2620, 0.0
    %vm2635 = vcmp.gt.f32.partialorder %v2621, 0.0
    %vm2636 = vcmp.gt.f32.partialorder %v2622, 0.0
    %vm2637 = vcmp.gt.f32.partialorder %v2623, 0.0
    %vm2638 = vcmp.gt.f32.partialorder %v2624, 0.0
    %vm2639 = vcmp.gt.f32.partialorder %v2625, 0.0
    %v2640 = vmul.f32 %v2612, 0.2
    %v2641 = vmul.f32 %v2613, 0.2
    %v2642 = vmul.f32 %v2614, 0.2
    %v2643 = vmul.f32 %v2615, 0.2
    %v2644 = vmul.f32 %v2616, 0.2
    %v2645 = vmul.f32 %v2617, 0.2
    %v2646 = vmul.f32 %v2618, 0.2
    %v2647 = vmul.f32 %v2619, 0.2
    %v2648 = vmul.f32 %v2620, 0.2
    %v2649 = vmul.f32 %v2621, 0.2
    %v2650 = vmul.f32 %v2622, 0.2
    %v2651 = vmul.f32 %v2623, 0.2
    %v2652 = vmul.f32 %v2624, 0.2
    %v2653 = vmul.f32 %v2625, 0.2
    %v2654 = vsel %vm2626, %v2612, %v2640
    %v2655 = vsel %vm2627, %v2613, %v2641
    %v2656 = vsel %vm2628, %v2614, %v2642
    %v2657 = vsel %vm2629, %v2615, %v2643
    %v2658 = vsel %vm2630, %v2616, %v2644
    %v2659 = vsel %vm2631, %v2617, %v2645
    %v2660 = vsel %vm2632, %v2618, %v2646
    %v2661 = vsel %vm2633, %v2619, %v2647
    %v2662 = vsel %vm2634, %v2620, %v2648
    %v2663 = vsel %vm2635, %v2621, %v2649
    %v2664 = vsel %vm2636, %v2622, %v2650
    %v2665 = vsel %vm2637, %v2623, %v2651
    %v2666 = vsel %vm2638, %v2624, %v2652
    %v2667 = vsel %vm2639, %v2625, %v2653
    %v2668 = vsel %vm153, %v2654, -1e+30
    %v2669 = vsel %vm154, %v2655, -1e+30
    %v2670 = vsel %vm155, %v2656, -1e+30
    %v2671 = vsel %vm156, %v2657, -1e+30
    %v2672 = vsel %vm157, %v2658, -1e+30
    %v2673 = vsel %vm158, %v2659, -1e+30
    %v2674 = vsel %vm159, %v2660, -1e+30
    %v2675 = vsel %vm160, %v2661, -1e+30
    %v2676 = vsel %vm161, %v2662, -1e+30
    %v2677 = vsel %vm162, %v2663, -1e+30
    %v2678 = vsel %vm163, %v2664, -1e+30
    %v2679 = vsel %vm164, %v2665, -1e+30
    %v2680 = vsel %vm165, %v2666, -1e+30
    %v2681 = vsel %vm166, %v2667, -1e+30
    %2682 = vmax.xlane.f32.xlu0 %v2668
    %v2683 = vpop.xlane.xlu0 %2682
    %2684 = vmax.xlane.f32.xlu0 %v2669
    %v2685 = vpop.xlane.xlu0 %2684
    %2686 = vmax.xlane.f32.xlu0 %v2670
    %v2687 = vpop.xlane.xlu0 %2686
    %2688 = vmax.xlane.f32.xlu0 %v2671
    %v2689 = vpop.xlane.xlu0 %2688
    %2690 = vmax.xlane.f32.xlu0 %v2672
    %v2691 = vpop.xlane.xlu0 %2690
    %2692 = vmax.xlane.f32.xlu0 %v2673
    %v2693 = vpop.xlane.xlu0 %2692
    %2694 = vmax.xlane.f32.xlu0 %v2674
    %v2695 = vpop.xlane.xlu0 %2694
    %2696 = vmax.xlane.f32.xlu0 %v2675
    %v2697 = vpop.xlane.xlu0 %2696
    %2698 = vmax.xlane.f32.xlu0 %v2676
    %v2699 = vpop.xlane.xlu0 %2698
    %2700 = vmax.xlane.f32.xlu0 %v2677
    %v2701 = vpop.xlane.xlu0 %2700
    %2702 = vmax.xlane.f32.xlu0 %v2678
    %v2703 = vpop.xlane.xlu0 %2702
    %2704 = vmax.xlane.f32.xlu0 %v2679
    %v2705 = vpop.xlane.xlu0 %2704
    %2706 = vmax.xlane.f32.xlu0 %v2680
    %v2707 = vpop.xlane.xlu0 %2706
    %2708 = vmax.xlane.f32.xlu0 %v2681
    %v2709 = vpop.xlane.xlu0 %2708
    %v2710 = vsub.f32 %v2668, %v2683
    %v2711 = vsub.f32 %v2669, %v2685
    %v2712 = vsub.f32 %v2670, %v2687
    %v2713 = vsub.f32 %v2671, %v2689
    %v2714 = vsub.f32 %v2672, %v2691
    %v2715 = vsub.f32 %v2673, %v2693
    %v2716 = vsub.f32 %v2674, %v2695
    %v2717 = vsub.f32 %v2675, %v2697
    %v2718 = vsub.f32 %v2676, %v2699
    %v2719 = vsub.f32 %v2677, %v2701
    %v2720 = vsub.f32 %v2678, %v2703
    %v2721 = vsub.f32 %v2679, %v2705
    %v2722 = vsub.f32 %v2680, %v2707
    %v2723 = vsub.f32 %v2681, %v2709
    %v2724 = vmul.f32 %v2710, 1.442695
    %v2725 = vpow.pop %v2724
    %v2726 = vmul.f32 %v2711, 1.442695
    %v2727 = vpow.pop %v2726
    %v2728 = vmul.f32 %v2712, 1.442695
    %v2729 = vpow.pop %v2728
    %v2730 = vmul.f32 %v2713, 1.442695
    %v2731 = vpow.pop %v2730
    %v2732 = vmul.f32 %v2714, 1.442695
    %v2733 = vpow.pop %v2732
    %v2734 = vmul.f32 %v2715, 1.442695
    %v2735 = vpow.pop %v2734
    %v2736 = vmul.f32 %v2716, 1.442695
    %v2737 = vpow.pop %v2736
    %v2738 = vmul.f32 %v2717, 1.442695
    %v2739 = vpow.pop %v2738
    %v2740 = vmul.f32 %v2718, 1.442695
    %v2741 = vpow.pop %v2740
    %v2742 = vmul.f32 %v2719, 1.442695
    %v2743 = vpow.pop %v2742
    %v2744 = vmul.f32 %v2720, 1.442695
    %v2745 = vpow.pop %v2744
    %v2746 = vmul.f32 %v2721, 1.442695
    %v2747 = vpow.pop %v2746
    %v2748 = vmul.f32 %v2722, 1.442695
    %v2749 = vpow.pop %v2748
    %v2750 = vmul.f32 %v2723, 1.442695
    %v2751 = vpow.pop %v2750
    %v2752 = vsel %vm153, %v2725, 0.0
    %v2753 = vsel %vm154, %v2727, 0.0
    %v2754 = vsel %vm155, %v2729, 0.0
    %v2755 = vsel %vm156, %v2731, 0.0
    %v2756 = vsel %vm157, %v2733, 0.0
    %v2757 = vsel %vm158, %v2735, 0.0
    %v2758 = vsel %vm159, %v2737, 0.0
    %v2759 = vsel %vm160, %v2739, 0.0
    %v2760 = vsel %vm161, %v2741, 0.0
    %v2761 = vsel %vm162, %v2743, 0.0
    %v2762 = vsel %vm163, %v2745, 0.0
    %v2763 = vsel %vm164, %v2747, 0.0
    %v2764 = vsel %vm165, %v2749, 0.0
    %v2765 = vsel %vm166, %v2751, 0.0
    %2766 = vmatpush.msra.mxu0 %v210
    %2767 = vmatpush.msra.mxu0 %v209
    %2768 = vmatpush.msra.mxu0 %v208
    %2769 = vmatpush.msra.mxu0 %v207
    %2770 = vmatpush.msra.mxu0 %v206
    %2771 = vmatpush.msra.mxu0 %v205
    %2772 = vmatpush.msra.mxu0 %v204
    %2773 = vmatpush.msra.mxu0 %v203
    %2774 = vmatpush.msra.mxu0 %v202
    %2775 = vmatpush.msra.mxu0 %v201
    %2776 = vmatpush.msra.mxu0 %v200
    %2777 = vmatpush.msra.mxu0 %v199
    %2778 = vmatpush.msra.mxu0 %v198
    %2779 = vmatpush.msra.mxu0 %v197
    %2780 = vmatpush.msra.mxu0 %v196
    %2781 = vmatpush.msra.mxu0 %v195
    %2782 = vmatmul.f32.gmra.mxu0 %v2752
    %v2783 = vpop.f32.mrf.mxu0
    %v2784 = vadd.f32 0.0, %v2783
    %2785 = vmatmul.f32.gmra.mxu0 %v2753
    %v2786 = vpop.f32.mrf.mxu0
    %v2787 = vadd.f32 0.0, %v2786
    %2788 = vmatmul.f32.gmra.mxu0 %v2754
    %v2789 = vpop.f32.mrf.mxu0
    %v2790 = vadd.f32 0.0, %v2789
    %2791 = vmatmul.f32.gmra.mxu0 %v2755
    %v2792 = vpop.f32.mrf.mxu0
    %v2793 = vadd.f32 0.0, %v2792
    %2794 = vmatmul.f32.gmra.mxu0 %v2756
    %v2795 = vpop.f32.mrf.mxu0
    %v2796 = vadd.f32 0.0, %v2795
    %2797 = vmatmul.f32.gmra.mxu0 %v2757
    %v2798 = vpop.f32.mrf.mxu0
    %v2799 = vadd.f32 0.0, %v2798
    %2800 = vmatmul.f32.gmra.mxu0 %v2758
    %v2801 = vpop.f32.mrf.mxu0
    %v2802 = vadd.f32 0.0, %v2801
    %2803 = vmatmul.f32.gmra.mxu0 %v2759
    %v2804 = vpop.f32.mrf.mxu0
    %v2805 = vadd.f32 0.0, %v2804
    %2806 = vmatmul.f32.gmra.mxu0 %v2760
    %v2807 = vpop.f32.mrf.mxu0
    %v2808 = vadd.f32 0.0, %v2807
    %2809 = vmatmul.f32.gmra.mxu0 %v2761
    %v2810 = vpop.f32.mrf.mxu0
    %v2811 = vadd.f32 0.0, %v2810
    %2812 = vmatmul.f32.gmra.mxu0 %v2762
    %v2813 = vpop.f32.mrf.mxu0
    %v2814 = vadd.f32 0.0, %v2813
    %2815 = vmatmul.f32.gmra.mxu0 %v2763
    %v2816 = vpop.f32.mrf.mxu0
    %v2817 = vadd.f32 0.0, %v2816
    %2818 = vmatmul.f32.gmra.mxu0 %v2764
    %v2819 = vpop.f32.mrf.mxu0
    %v2820 = vadd.f32 0.0, %v2819
    %2821 = vmatmul.f32.gmra.mxu0 %v2765
    %v2822 = vpop.f32.mrf.mxu0
    %v2823 = vadd.f32 0.0, %v2822
    %2824 = vdwg.mxu0
    %vm2825 = vcmp.gt.f32.partialorder %v2784, 0.0
    %vm2826 = vcmp.gt.f32.partialorder %v2787, 0.0
    %vm2827 = vcmp.gt.f32.partialorder %v2790, 0.0
    %vm2828 = vcmp.gt.f32.partialorder %v2793, 0.0
    %vm2829 = vcmp.gt.f32.partialorder %v2796, 0.0
    %vm2830 = vcmp.gt.f32.partialorder %v2799, 0.0
    %vm2831 = vcmp.gt.f32.partialorder %v2802, 0.0
    %vm2832 = vcmp.gt.f32.partialorder %v2805, 0.0
    %vm2833 = vcmp.gt.f32.partialorder %v2808, 0.0
    %vm2834 = vcmp.gt.f32.partialorder %v2811, 0.0
    %vm2835 = vcmp.gt.f32.partialorder %v2814, 0.0
    %vm2836 = vcmp.gt.f32.partialorder %v2817, 0.0
    %vm2837 = vcmp.gt.f32.partialorder %v2820, 0.0
    %vm2838 = vcmp.gt.f32.partialorder %v2823, 0.0
    %v2839 = vsel %vm2825, %v2784, 1.0
    %v2840 = vsel %vm2826, %v2787, 1.0
    %v2841 = vsel %vm2827, %v2790, 1.0
    %v2842 = vsel %vm2828, %v2793, 1.0
    %v2843 = vsel %vm2829, %v2796, 1.0
    %v2844 = vsel %vm2830, %v2799, 1.0
    %v2845 = vsel %vm2831, %v2802, 1.0
    %v2846 = vsel %vm2832, %v2805, 1.0
    %v2847 = vsel %vm2833, %v2808, 1.0
    %v2848 = vsel %vm2834, %v2811, 1.0
    %v2849 = vsel %vm2835, %v2814, 1.0
    %v2850 = vsel %vm2836, %v2817, 1.0
    %v2851 = vsel %vm2837, %v2820, 1.0
    %v2852 = vsel %vm2838, %v2823, 1.0
    %v2853 = vrcp.pop %v2839
    %v2854 = vmul.f32 %v2839, %v2853
    %v2855 = vsub.f32 1.0, %v2854
    %v2856 = vmul.f32 %v2853, %v2855
    %v2857 = vadd.f32 %v2853, %v2856
    %vm2858 = vweird.f32 %v2839
    %vm2859 = vweird.f32 %v2853
    %vm2860 = vmor %vm2858, %vm2859
    %v2861 = vsel %vm2860, %v2853, %v2857
    %v2862 = vand.u32 2147483647, %v2839
    %vm2863 = vcmp.eq.f32.partialorder %v2862, 8.507059e+37
    %v2864 = vand.u32 %v2839, 2147483648
    %v2865 = vor.u32 1.1754944e-38, %v2864
    %v2866 = vsel %vm2863, %v2865, %v2861
    %v2867 = vmul.f32 %v2752, %v2866
    %v2868 = vrcp.pop %v2840
    %v2869 = vmul.f32 %v2840, %v2868
    %v2870 = vsub.f32 1.0, %v2869
    %v2871 = vmul.f32 %v2868, %v2870
    %v2872 = vadd.f32 %v2868, %v2871
    %vm2873 = vweird.f32 %v2840
    %vm2874 = vweird.f32 %v2868
    %vm2875 = vmor %vm2873, %vm2874
    %v2876 = vsel %vm2875, %v2868, %v2872
    %v2877 = vand.u32 2147483647, %v2840
    %vm2878 = vcmp.eq.f32.partialorder %v2877, 8.507059e+37
    %v2879 = vand.u32 %v2840, 2147483648
    %v2880 = vor.u32 1.1754944e-38, %v2879
    %v2881 = vsel %vm2878, %v2880, %v2876
    %v2882 = vmul.f32 %v2753, %v2881
    %v2883 = vrcp.pop %v2841
    %v2884 = vmul.f32 %v2841, %v2883
    %v2885 = vsub.f32 1.0, %v2884
    %v2886 = vmul.f32 %v2883, %v2885
    %v2887 = vadd.f32 %v2883, %v2886
    %vm2888 = vweird.f32 %v2841
    %vm2889 = vweird.f32 %v2883
    %vm2890 = vmor %vm2888, %vm2889
    %v2891 = vsel %vm2890, %v2883, %v2887
    %v2892 = vand.u32 2147483647, %v2841
    %vm2893 = vcmp.eq.f32.partialorder %v2892, 8.507059e+37
    %v2894 = vand.u32 %v2841, 2147483648
    %v2895 = vor.u32 1.1754944e-38, %v2894
    %v2896 = vsel %vm2893, %v2895, %v2891
    %v2897 = vmul.f32 %v2754, %v2896
    %v2898 = vrcp.pop %v2842
    %v2899 = vmul.f32 %v2842, %v2898
    %v2900 = vsub.f32 1.0, %v2899
    %v2901 = vmul.f32 %v2898, %v2900
    %v2902 = vadd.f32 %v2898, %v2901
    %vm2903 = vweird.f32 %v2842
    %vm2904 = vweird.f32 %v2898
    %vm2905 = vmor %vm2903, %vm2904
    %v2906 = vsel %vm2905, %v2898, %v2902
    %v2907 = vand.u32 2147483647, %v2842
    %vm2908 = vcmp.eq.f32.partialorder %v2907, 8.507059e+37
    %v2909 = vand.u32 %v2842, 2147483648
    %v2910 = vor.u32 1.1754944e-38, %v2909
    %v2911 = vsel %vm2908, %v2910, %v2906
    %v2912 = vmul.f32 %v2755, %v2911
    %v2913 = vrcp.pop %v2843
    %v2914 = vmul.f32 %v2843, %v2913
    %v2915 = vsub.f32 1.0, %v2914
    %v2916 = vmul.f32 %v2913, %v2915
    %v2917 = vadd.f32 %v2913, %v2916
    %vm2918 = vweird.f32 %v2843
    %vm2919 = vweird.f32 %v2913
    %vm2920 = vmor %vm2918, %vm2919
    %v2921 = vsel %vm2920, %v2913, %v2917
    %v2922 = vand.u32 2147483647, %v2843
    %vm2923 = vcmp.eq.f32.partialorder %v2922, 8.507059e+37
    %v2924 = vand.u32 %v2843, 2147483648
    %v2925 = vor.u32 1.1754944e-38, %v2924
    %v2926 = vsel %vm2923, %v2925, %v2921
    %v2927 = vmul.f32 %v2756, %v2926
    %v2928 = vrcp.pop %v2844
    %v2929 = vmul.f32 %v2844, %v2928
    %v2930 = vsub.f32 1.0, %v2929
    %v2931 = vmul.f32 %v2928, %v2930
    %v2932 = vadd.f32 %v2928, %v2931
    %vm2933 = vweird.f32 %v2844
    %vm2934 = vweird.f32 %v2928
    %vm2935 = vmor %vm2933, %vm2934
    %v2936 = vsel %vm2935, %v2928, %v2932
    %v2937 = vand.u32 2147483647, %v2844
    %vm2938 = vcmp.eq.f32.partialorder %v2937, 8.507059e+37
    %v2939 = vand.u32 %v2844, 2147483648
    %v2940 = vor.u32 1.1754944e-38, %v2939
    %v2941 = vsel %vm2938, %v2940, %v2936
    %v2942 = vmul.f32 %v2757, %v2941
    %v2943 = vrcp.pop %v2845
    %v2944 = vmul.f32 %v2845, %v2943
    %v2945 = vsub.f32 1.0, %v2944
    %v2946 = vmul.f32 %v2943, %v2945
    %v2947 = vadd.f32 %v2943, %v2946
    %vm2948 = vweird.f32 %v2845
    %vm2949 = vweird.f32 %v2943
    %vm2950 = vmor %vm2948, %vm2949
    %v2951 = vsel %vm2950, %v2943, %v2947
    %v2952 = vand.u32 2147483647, %v2845
    %vm2953 = vcmp.eq.f32.partialorder %v2952, 8.507059e+37
    %v2954 = vand.u32 %v2845, 2147483648
    %v2955 = vor.u32 1.1754944e-38, %v2954
    %v2956 = vsel %vm2953, %v2955, %v2951
    %v2957 = vmul.f32 %v2758, %v2956
    %v2958 = vrcp.pop %v2846
    %v2959 = vmul.f32 %v2846, %v2958
    %v2960 = vsub.f32 1.0, %v2959
    %v2961 = vmul.f32 %v2958, %v2960
    %v2962 = vadd.f32 %v2958, %v2961
    %vm2963 = vweird.f32 %v2846
    %vm2964 = vweird.f32 %v2958
    %vm2965 = vmor %vm2963, %vm2964
    %v2966 = vsel %vm2965, %v2958, %v2962
    %v2967 = vand.u32 2147483647, %v2846
    %vm2968 = vcmp.eq.f32.partialorder %v2967, 8.507059e+37
    %v2969 = vand.u32 %v2846, 2147483648
    %v2970 = vor.u32 1.1754944e-38, %v2969
    %v2971 = vsel %vm2968, %v2970, %v2966
    %v2972 = vmul.f32 %v2759, %v2971
    %v2973 = vrcp.pop %v2847
    %v2974 = vmul.f32 %v2847, %v2973
    %v2975 = vsub.f32 1.0, %v2974
    %v2976 = vmul.f32 %v2973, %v2975
    %v2977 = vadd.f32 %v2973, %v2976
    %vm2978 = vweird.f32 %v2847
    %vm2979 = vweird.f32 %v2973
    %vm2980 = vmor %vm2978, %vm2979
    %v2981 = vsel %vm2980, %v2973, %v2977
    %v2982 = vand.u32 2147483647, %v2847
    %vm2983 = vcmp.eq.f32.partialorder %v2982, 8.507059e+37
    %v2984 = vand.u32 %v2847, 2147483648
    %v2985 = vor.u32 1.1754944e-38, %v2984
    %v2986 = vsel %vm2983, %v2985, %v2981
    %v2987 = vmul.f32 %v2760, %v2986
    %v2988 = vrcp.pop %v2848
    %v2989 = vmul.f32 %v2848, %v2988
    %v2990 = vsub.f32 1.0, %v2989
    %v2991 = vmul.f32 %v2988, %v2990
    %v2992 = vadd.f32 %v2988, %v2991
    %vm2993 = vweird.f32 %v2848
    %vm2994 = vweird.f32 %v2988
    %vm2995 = vmor %vm2993, %vm2994
    %v2996 = vsel %vm2995, %v2988, %v2992
    %v2997 = vand.u32 2147483647, %v2848
    %vm2998 = vcmp.eq.f32.partialorder %v2997, 8.507059e+37
    %v2999 = vand.u32 %v2848, 2147483648
    %v3000 = vor.u32 1.1754944e-38, %v2999
    %v3001 = vsel %vm2998, %v3000, %v2996
    %v3002 = vmul.f32 %v2761, %v3001
    %v3003 = vrcp.pop %v2849
    %v3004 = vmul.f32 %v2849, %v3003
    %v3005 = vsub.f32 1.0, %v3004
    %v3006 = vmul.f32 %v3003, %v3005
    %v3007 = vadd.f32 %v3003, %v3006
    %vm3008 = vweird.f32 %v2849
    %vm3009 = vweird.f32 %v3003
    %vm3010 = vmor %vm3008, %vm3009
    %v3011 = vsel %vm3010, %v3003, %v3007
    %v3012 = vand.u32 2147483647, %v2849
    %vm3013 = vcmp.eq.f32.partialorder %v3012, 8.507059e+37
    %v3014 = vand.u32 %v2849, 2147483648
    %v3015 = vor.u32 1.1754944e-38, %v3014
    %v3016 = vsel %vm3013, %v3015, %v3011
    %v3017 = vmul.f32 %v2762, %v3016
    %v3018 = vrcp.pop %v2850
    %v3019 = vmul.f32 %v2850, %v3018
    %v3020 = vsub.f32 1.0, %v3019
    %v3021 = vmul.f32 %v3018, %v3020
    %v3022 = vadd.f32 %v3018, %v3021
    %vm3023 = vweird.f32 %v2850
    %vm3024 = vweird.f32 %v3018
    %vm3025 = vmor %vm3023, %vm3024
    %v3026 = vsel %vm3025, %v3018, %v3022
    %v3027 = vand.u32 2147483647, %v2850
    %vm3028 = vcmp.eq.f32.partialorder %v3027, 8.507059e+37
    %v3029 = vand.u32 %v2850, 2147483648
    %v3030 = vor.u32 1.1754944e-38, %v3029
    %v3031 = vsel %vm3028, %v3030, %v3026
    %v3032 = vmul.f32 %v2763, %v3031
    %v3033 = vrcp.pop %v2851
    %v3034 = vmul.f32 %v2851, %v3033
    %v3035 = vsub.f32 1.0, %v3034
    %v3036 = vmul.f32 %v3033, %v3035
    %v3037 = vadd.f32 %v3033, %v3036
    %vm3038 = vweird.f32 %v2851
    %vm3039 = vweird.f32 %v3033
    %vm3040 = vmor %vm3038, %vm3039
    %v3041 = vsel %vm3040, %v3033, %v3037
    %v3042 = vand.u32 2147483647, %v2851
    %vm3043 = vcmp.eq.f32.partialorder %v3042, 8.507059e+37
    %v3044 = vand.u32 %v2851, 2147483648
    %v3045 = vor.u32 1.1754944e-38, %v3044
    %v3046 = vsel %vm3043, %v3045, %v3041
    %v3047 = vmul.f32 %v2764, %v3046
    %v3048 = vrcp.pop %v2852
    %v3049 = vmul.f32 %v2852, %v3048
    %v3050 = vsub.f32 1.0, %v3049
    %v3051 = vmul.f32 %v3048, %v3050
    %v3052 = vadd.f32 %v3048, %v3051
    %vm3053 = vweird.f32 %v2852
    %vm3054 = vweird.f32 %v3048
    %vm3055 = vmor %vm3053, %vm3054
    %v3056 = vsel %vm3055, %v3048, %v3052
    %v3057 = vand.u32 2147483647, %v2852
    %vm3058 = vcmp.eq.f32.partialorder %v3057, 8.507059e+37
    %v3059 = vand.u32 %v2852, 2147483648
    %v3060 = vor.u32 1.1754944e-38, %v3059
    %v3061 = vsel %vm3058, %v3060, %v3056
    %v3062 = vmul.f32 %v2765, %v3061
    %v3063 = vmul.f32 %v2084, %v211
    %v3064 = vmul.f32 %v2087, %v212
    %v3065 = vmul.f32 %v2084, %v213
    %v3066 = vmul.f32 %v2087, %v214
    %v3067 = vmul.f32 %v2084, %v215
    %v3068 = vmul.f32 %v2087, %v216
    %v3069 = vmul.f32 %v2084, %v217
    %v3070 = vmul.f32 %v2087, %v218
    %v3071 = vmul.f32 %v2084, %v219
    %v3072 = vmul.f32 %v2087, %v220
    %v3073 = vmul.f32 %v2084, %v221
    %v3074 = vmul.f32 %v2087, %v222
    %v3075 = vmul.f32 %v2084, %v223
    %v3076 = vmul.f32 %v2087, %v224
    %v3077 = vmul.f32 %v2084, %v225
    %v3078 = vmul.f32 %v2087, %v226
    %v3079 = vmul.f32 %v2159, %v211
    %v3080 = vmul.f32 %v2162, %v212
    %v3081 = vmul.f32 %v2159, %v213
    %v3082 = vmul.f32 %v2162, %v214
    %v3083 = vmul.f32 %v2159, %v215
    %v3084 = vmul.f32 %v2162, %v216
    %v3085 = vmul.f32 %v2159, %v217
    %v3086 = vmul.f32 %v2162, %v218
    %v3087 = vmul.f32 %v2159, %v219
    %v3088 = vmul.f32 %v2162, %v220
    %v3089 = vmul.f32 %v2159, %v221
    %v3090 = vmul.f32 %v2162, %v222
    %v3091 = vmul.f32 %v2159, %v223
    %v3092 = vmul.f32 %v2162, %v224
    %v3093 = vmul.f32 %v2159, %v225
    %v3094 = vmul.f32 %v2162, %v226
    %v3095 = vmul.f32 %v2234, %v211
    %v3096 = vmul.f32 %v2237, %v212
    %v3097 = vmul.f32 %v2234, %v213
    %v3098 = vmul.f32 %v2237, %v214
    %v3099 = vmul.f32 %v2234, %v215
    %v3100 = vmul.f32 %v2237, %v216
    %v3101 = vmul.f32 %v2234, %v217
    %v3102 = vmul.f32 %v2237, %v218
    %v3103 = vmul.f32 %v2234, %v219
    %v3104 = vmul.f32 %v2237, %v220
    %v3105 = vmul.f32 %v2234, %v221
    %v3106 = vmul.f32 %v2237, %v222
    %v3107 = vmul.f32 %v2234, %v223
    %v3108 = vmul.f32 %v2237, %v224
    %v3109 = vmul.f32 %v2234, %v225
    %v3110 = vmul.f32 %v2237, %v226
    %v3111 = vmul.f32 %v2309, %v211
    %v3112 = vmul.f32 %v2312, %v212
    %v3113 = vmul.f32 %v2309, %v213
    %v3114 = vmul.f32 %v2312, %v214
    %v3115 = vmul.f32 %v2309, %v215
    %v3116 = vmul.f32 %v2312, %v216
    %v3117 = vmul.f32 %v2309, %v217
    %v3118 = vmul.f32 %v2312, %v218
    %v3119 = vmul.f32 %v2309, %v219
    %v3120 = vmul.f32 %v2312, %v220
    %v3121 = vmul.f32 %v2309, %v221
    %v3122 = vmul.f32 %v2312, %v222
    %v3123 = vmul.f32 %v2309, %v223
    %v3124 = vmul.f32 %v2312, %v224
    %v3125 = vmul.f32 %v2309, %v225
    %v3126 = vmul.f32 %v2312, %v226
    %v3127 = vmul.f32 %v2384, %v211
    %v3128 = vmul.f32 %v2387, %v212
    %v3129 = vmul.f32 %v2384, %v213
    %v3130 = vmul.f32 %v2387, %v214
    %v3131 = vmul.f32 %v2384, %v215
    %v3132 = vmul.f32 %v2387, %v216
    %v3133 = vmul.f32 %v2384, %v217
    %v3134 = vmul.f32 %v2387, %v218
    %v3135 = vmul.f32 %v2384, %v219
    %v3136 = vmul.f32 %v2387, %v220
    %v3137 = vmul.f32 %v2384, %v221
    %v3138 = vmul.f32 %v2387, %v222
    %v3139 = vmul.f32 %v2384, %v223
    %v3140 = vmul.f32 %v2387, %v224
    %v3141 = vmul.f32 %v2384, %v225
    %v3142 = vmul.f32 %v2387, %v226
    %v3143 = vmul.f32 %v2459, %v211
    %v3144 = vmul.f32 %v2462, %v212
    %v3145 = vmul.f32 %v2459, %v213
    %v3146 = vmul.f32 %v2462, %v214
    %v3147 = vmul.f32 %v2459, %v215
    %v3148 = vmul.f32 %v2462, %v216
    %v3149 = vmul.f32 %v2459, %v217
    %v3150 = vmul.f32 %v2462, %v218
    %v3151 = vmul.f32 %v2459, %v219
    %v3152 = vmul.f32 %v2462, %v220
    %v3153 = vmul.f32 %v2459, %v221
    %v3154 = vmul.f32 %v2462, %v222
    %v3155 = vmul.f32 %v2459, %v223
    %v3156 = vmul.f32 %v2462, %v224
    %v3157 = vmul.f32 %v2459, %v225
    %v3158 = vmul.f32 %v2462, %v226
    %v3159 = vmul.f32 %v2534, %v211
    %v3160 = vmul.f32 %v2537, %v212
    %v3161 = vmul.f32 %v2534, %v213
    %v3162 = vmul.f32 %v2537, %v214
    %v3163 = vmul.f32 %v2534, %v215
    %v3164 = vmul.f32 %v2537, %v216
    %v3165 = vmul.f32 %v2534, %v217
    %v3166 = vmul.f32 %v2537, %v218
    %v3167 = vmul.f32 %v2534, %v219
    %v3168 = vmul.f32 %v2537, %v220
    %v3169 = vmul.f32 %v2534, %v221
    %v3170 = vmul.f32 %v2537, %v222
    %v3171 = vmul.f32 %v2534, %v223
    %v3172 = vmul.f32 %v2537, %v224
    %v3173 = vmul.f32 %v2534, %v225
    %v3174 = vmul.f32 %v2537, %v226
    %3175 = vmatpush.msra.mxu0 %v3078
    %3176 = vmatpush.msra.mxu0 %v3077
    %3177 = vmatpush.msra.mxu0 %v3076
    %3178 = vmatpush.msra.mxu0 %v3075
    %3179 = vmatpush.msra.mxu0 %v3074
    %3180 = vmatpush.msra.mxu0 %v3073
    %3181 = vmatpush.msra.mxu0 %v3072
    %3182 = vmatpush.msra.mxu0 %v3071
    %3183 = vmatpush.msra.mxu0 %v3070
    %3184 = vmatpush.msra.mxu0 %v3069
    %3185 = vmatpush.msra.mxu0 %v3068
    %3186 = vmatpush.msra.mxu0 %v3067
    %3187 = vmatpush.msra.mxu0 %v3066
    %3188 = vmatpush.msra.mxu0 %v3065
    %3189 = vmatpush.msra.mxu0 %v3064
    %3190 = vmatpush.msra.mxu0 %v3063
    %3191 = vmatmul.f32.gmra.mxu0 %v2867
    %v3192 = vpop.f32.mrf.mxu0
    %v3193 = vadd.f32 0.0, %v3192
    %3194 = vmatmul.f32.gmra.mxu0 %v2882
    %v3195 = vpop.f32.mrf.mxu0
    %v3196 = vadd.f32 0.0, %v3195
    %3197 = vdwg.mxu0
    %3198 = vmatpush.msra.mxu0 %v3094
    %3199 = vmatpush.msra.mxu0 %v3093
    %3200 = vmatpush.msra.mxu0 %v3092
    %3201 = vmatpush.msra.mxu0 %v3091
    %3202 = vmatpush.msra.mxu0 %v3090
    %3203 = vmatpush.msra.mxu0 %v3089
    %3204 = vmatpush.msra.mxu0 %v3088
    %3205 = vmatpush.msra.mxu0 %v3087
    %3206 = vmatpush.msra.mxu0 %v3086
    %3207 = vmatpush.msra.mxu0 %v3085
    %3208 = vmatpush.msra.mxu0 %v3084
    %3209 = vmatpush.msra.mxu0 %v3083
    %3210 = vmatpush.msra.mxu0 %v3082
    %3211 = vmatpush.msra.mxu0 %v3081
    %3212 = vmatpush.msra.mxu0 %v3080
    %3213 = vmatpush.msra.mxu0 %v3079
    %3214 = vmatmul.f32.gmra.mxu0 %v2897
    %v3215 = vpop.f32.mrf.mxu0
    %v3216 = vadd.f32 0.0, %v3215
    %3217 = vmatmul.f32.gmra.mxu0 %v2912
    %v3218 = vpop.f32.mrf.mxu0
    %v3219 = vadd.f32 0.0, %v3218
    %3220 = vdwg.mxu0
    %3221 = vmatpush.msra.mxu0 %v3110
    %3222 = vmatpush.msra.mxu0 %v3109
    %3223 = vmatpush.msra.mxu0 %v3108
    %3224 = vmatpush.msra.mxu0 %v3107
    %3225 = vmatpush.msra.mxu0 %v3106
    %3226 = vmatpush.msra.mxu0 %v3105
    %3227 = vmatpush.msra.mxu0 %v3104
    %3228 = vmatpush.msra.mxu0 %v3103
    %3229 = vmatpush.msra.mxu0 %v3102
    %3230 = vmatpush.msra.mxu0 %v3101
    %3231 = vmatpush.msra.mxu0 %v3100
    %3232 = vmatpush.msra.mxu0 %v3099
    %3233 = vmatpush.msra.mxu0 %v3098
    %3234 = vmatpush.msra.mxu0 %v3097
    %3235 = vmatpush.msra.mxu0 %v3096
    %3236 = vmatpush.msra.mxu0 %v3095
    %3237 = vmatmul.f32.gmra.mxu0 %v2927
    %v3238 = vpop.f32.mrf.mxu0
    %v3239 = vadd.f32 0.0, %v3238
    %3240 = vmatmul.f32.gmra.mxu0 %v2942
    %v3241 = vpop.f32.mrf.mxu0
    %v3242 = vadd.f32 0.0, %v3241
    %3243 = vdwg.mxu0
    %3244 = vmatpush.msra.mxu0 %v3126
    %3245 = vmatpush.msra.mxu0 %v3125
    %3246 = vmatpush.msra.mxu0 %v3124
    %3247 = vmatpush.msra.mxu0 %v3123
    %3248 = vmatpush.msra.mxu0 %v3122
    %3249 = vmatpush.msra.mxu0 %v3121
    %3250 = vmatpush.msra.mxu0 %v3120
    %3251 = vmatpush.msra.mxu0 %v3119
    %3252 = vmatpush.msra.mxu0 %v3118
    %3253 = vmatpush.msra.mxu0 %v3117
    %3254 = vmatpush.msra.mxu0 %v3116
    %3255 = vmatpush.msra.mxu0 %v3115
    %3256 = vmatpush.msra.mxu0 %v3114
    %3257 = vmatpush.msra.mxu0 %v3113
    %3258 = vmatpush.msra.mxu0 %v3112
    %3259 = vmatpush.msra.mxu0 %v3111
    %3260 = vmatmul.f32.gmra.mxu0 %v2957
    %v3261 = vpop.f32.mrf.mxu0
    %v3262 = vadd.f32 0.0, %v3261
    %3263 = vmatmul.f32.gmra.mxu0 %v2972
    %v3264 = vpop.f32.mrf.mxu0
    %v3265 = vadd.f32 0.0, %v3264
    %3266 = vdwg.mxu0
    %3267 = vmatpush.msra.mxu0 %v3142
    %3268 = vmatpush.msra.mxu0 %v3141
    %3269 = vmatpush.msra.mxu0 %v3140
    %3270 = vmatpush.msra.mxu0 %v3139
    %3271 = vmatpush.msra.mxu0 %v3138
    %3272 = vmatpush.msra.mxu0 %v3137
    %3273 = vmatpush.msra.mxu0 %v3136
    %3274 = vmatpush.msra.mxu0 %v3135
    %3275 = vmatpush.msra.mxu0 %v3134
    %3276 = vmatpush.msra.mxu0 %v3133
    %3277 = vmatpush.msra.mxu0 %v3132
    %3278 = vmatpush.msra.mxu0 %v3131
    %3279 = vmatpush.msra.mxu0 %v3130
    %3280 = vmatpush.msra.mxu0 %v3129
    %3281 = vmatpush.msra.mxu0 %v3128
    %3282 = vmatpush.msra.mxu0 %v3127
    %3283 = vmatmul.f32.gmra.mxu0 %v2987
    %v3284 = vpop.f32.mrf.mxu0
    %v3285 = vadd.f32 0.0, %v3284
    %3286 = vmatmul.f32.gmra.mxu0 %v3002
    %v3287 = vpop.f32.mrf.mxu0
    %v3288 = vadd.f32 0.0, %v3287
    %3289 = vdwg.mxu0
    %3290 = vmatpush.msra.mxu0 %v3158
    %3291 = vmatpush.msra.mxu0 %v3157
    %3292 = vmatpush.msra.mxu0 %v3156
    %3293 = vmatpush.msra.mxu0 %v3155
    %3294 = vmatpush.msra.mxu0 %v3154
    %3295 = vmatpush.msra.mxu0 %v3153
    %3296 = vmatpush.msra.mxu0 %v3152
    %3297 = vmatpush.msra.mxu0 %v3151
    %3298 = vmatpush.msra.mxu0 %v3150
    %3299 = vmatpush.msra.mxu0 %v3149
    %3300 = vmatpush.msra.mxu0 %v3148
    %3301 = vmatpush.msra.mxu0 %v3147
    %3302 = vmatpush.msra.mxu0 %v3146
    %3303 = vmatpush.msra.mxu0 %v3145
    %3304 = vmatpush.msra.mxu0 %v3144
    %3305 = vmatpush.msra.mxu0 %v3143
    %3306 = vmatmul.f32.gmra.mxu0 %v3017
    %v3307 = vpop.f32.mrf.mxu0
    %v3308 = vadd.f32 0.0, %v3307
    %3309 = vmatmul.f32.gmra.mxu0 %v3032
    %v3310 = vpop.f32.mrf.mxu0
    %v3311 = vadd.f32 0.0, %v3310
    %3312 = vdwg.mxu0
    %3313 = vmatpush.msra.mxu0 %v3174
    %3314 = vmatpush.msra.mxu0 %v3173
    %3315 = vmatpush.msra.mxu0 %v3172
    %3316 = vmatpush.msra.mxu0 %v3171
    %3317 = vmatpush.msra.mxu0 %v3170
    %3318 = vmatpush.msra.mxu0 %v3169
    %3319 = vmatpush.msra.mxu0 %v3168
    %3320 = vmatpush.msra.mxu0 %v3167
    %3321 = vmatpush.msra.mxu0 %v3166
    %3322 = vmatpush.msra.mxu0 %v3165
    %3323 = vmatpush.msra.mxu0 %v3164
    %3324 = vmatpush.msra.mxu0 %v3163
    %3325 = vmatpush.msra.mxu0 %v3162
    %3326 = vmatpush.msra.mxu0 %v3161
    %3327 = vmatpush.msra.mxu0 %v3160
    %3328 = vmatpush.msra.mxu0 %v3159
    %3329 = vmatmul.f32.gmra.mxu0 %v3047
    %v3330 = vpop.f32.mrf.mxu0
    %v3331 = vadd.f32 0.0, %v3330
    %3332 = vmatmul.f32.gmra.mxu0 %v3062
    %v3333 = vpop.f32.mrf.mxu0
    %v3334 = vadd.f32 0.0, %v3333
    %3335 = vdwg.mxu0
    %v3336 = vadd.f32 %v3193, %v1999
    %v3337 = vadd.f32 %v3196, %v2000
    %v3338 = vadd.f32 %v3216, %v2001
    %v3339 = vadd.f32 %v3219, %v2002
    %v3340 = vadd.f32 %v3239, %v2003
    %v3341 = vadd.f32 %v3242, %v2004
    %v3342 = vadd.f32 %v3262, %v2005
    %v3343 = vadd.f32 %v3265, %v2006
    %v3344 = vadd.f32 %v3285, %v2007
    %v3345 = vadd.f32 %v3288, %v2008
    %v3346 = vadd.f32 %v3308, %v2009
    %v3347 = vadd.f32 %v3311, %v2010
    %v3348 = vadd.f32 %v3331, %v2011
    %v3349 = vadd.f32 %v3334, %v2012
    %vm3350 = vcmp.gt.f32.partialorder %v3336, 0.0
    %vm3351 = vcmp.gt.f32.partialorder %v3337, 0.0
    %vm3352 = vcmp.gt.f32.partialorder %v3338, 0.0
    %vm3353 = vcmp.gt.f32.partialorder %v3339, 0.0
    %vm3354 = vcmp.gt.f32.partialorder %v3340, 0.0
    %vm3355 = vcmp.gt.f32.partialorder %v3341, 0.0
    %vm3356 = vcmp.gt.f32.partialorder %v3342, 0.0
    %vm3357 = vcmp.gt.f32.partialorder %v3343, 0.0
    %vm3358 = vcmp.gt.f32.partialorder %v3344, 0.0
    %vm3359 = vcmp.gt.f32.partialorder %v3345, 0.0
    %vm3360 = vcmp.gt.f32.partialorder %v3346, 0.0
    %vm3361 = vcmp.gt.f32.partialorder %v3347, 0.0
    %vm3362 = vcmp.gt.f32.partialorder %v3348, 0.0
    %vm3363 = vcmp.gt.f32.partialorder %v3349, 0.0
    %v3364 = vmin.f32 %v3336, 0.0
    %v3365 = vmin.f32 %v3337, 0.0
    %v3366 = vmin.f32 %v3338, 0.0
    %v3367 = vmin.f32 %v3339, 0.0
    %v3368 = vmin.f32 %v3340, 0.0
    %v3369 = vmin.f32 %v3341, 0.0
    %v3370 = vmin.f32 %v3342, 0.0
    %v3371 = vmin.f32 %v3343, 0.0
    %v3372 = vmin.f32 %v3344, 0.0
    %v3373 = vmin.f32 %v3345, 0.0
    %v3374 = vmin.f32 %v3346, 0.0
    %v3375 = vmin.f32 %v3347, 0.0
    %v3376 = vmin.f32 %v3348, 0.0
    %v3377 = vmin.f32 %v3349, 0.0
    %v3378 = vmul.f32 %v3364, 1.442695
    %v3379 = vpow.pop %v3378
    %v3380 = vmul.f32 %v3365, 1.442695
    %v3381 = vpow.pop %v3380
    %v3382 = vmul.f32 %v3366, 1.442695
    %v3383 = vpow.pop %v3382
    %v3384 = vmul.f32 %v3367, 1.442695
    %v3385 = vpow.pop %v3384
    %v3386 = vmul.f32 %v3368, 1.442695
    %v3387 = vpow.pop %v3386
    %v3388 = vmul.f32 %v3369, 1.442695
    %v3389 = vpow.pop %v3388
    %v3390 = vmul.f32 %v3370, 1.442695
    %v3391 = vpow.pop %v3390
    %v3392 = vmul.f32 %v3371, 1.442695
    %v3393 = vpow.pop %v3392
    %v3394 = vmul.f32 %v3372, 1.442695
    %v3395 = vpow.pop %v3394
    %v3396 = vmul.f32 %v3373, 1.442695
    %v3397 = vpow.pop %v3396
    %v3398 = vmul.f32 %v3374, 1.442695
    %v3399 = vpow.pop %v3398
    %v3400 = vmul.f32 %v3375, 1.442695
    %v3401 = vpow.pop %v3400
    %v3402 = vmul.f32 %v3376, 1.442695
    %v3403 = vpow.pop %v3402
    %v3404 = vmul.f32 %v3377, 1.442695
    %v3405 = vpow.pop %v3404
    %v3406 = vsub.f32 %v3379, 1.0
    %v3407 = vsub.f32 %v3381, 1.0
    %v3408 = vsub.f32 %v3383, 1.0
    %v3409 = vsub.f32 %v3385, 1.0
    %v3410 = vsub.f32 %v3387, 1.0
    %v3411 = vsub.f32 %v3389, 1.0
    %v3412 = vsub.f32 %v3391, 1.0
    %v3413 = vsub.f32 %v3393, 1.0
    %v3414 = vsub.f32 %v3395, 1.0
    %v3415 = vsub.f32 %v3397, 1.0
    %v3416 = vsub.f32 %v3399, 1.0
    %v3417 = vsub.f32 %v3401, 1.0
    %v3418 = vsub.f32 %v3403, 1.0
    %v3419 = vsub.f32 %v3405, 1.0
    %v3420 = vmul.f32 %v3406, 1.6732632
    %v3421 = vmul.f32 %v3407, 1.6732632
    %v3422 = vmul.f32 %v3408, 1.6732632
    %v3423 = vmul.f32 %v3409, 1.6732632
    %v3424 = vmul.f32 %v3410, 1.6732632
    %v3425 = vmul.f32 %v3411, 1.6732632
    %v3426 = vmul.f32 %v3412, 1.6732632
    %v3427 = vmul.f32 %v3413, 1.6732632
    %v3428 = vmul.f32 %v3414, 1.6732632
    %v3429 = vmul.f32 %v3415, 1.6732632
    %v3430 = vmul.f32 %v3416, 1.6732632
    %v3431 = vmul.f32 %v3417, 1.6732632
    %v3432 = vmul.f32 %v3418, 1.6732632
    %v3433 = vmul.f32 %v3419, 1.6732632
    %v3434 = vsel %vm3350, %v3336, %v3420
    %v3435 = vsel %vm3351, %v3337, %v3421
    %v3436 = vsel %vm3352, %v3338, %v3422
    %v3437 = vsel %vm3353, %v3339, %v3423
    %v3438 = vsel %vm3354, %v3340, %v3424
    %v3439 = vsel %vm3355, %v3341, %v3425
    %v3440 = vsel %vm3356, %v3342, %v3426
    %v3441 = vsel %vm3357, %v3343, %v3427
    %v3442 = vsel %vm3358, %v3344, %v3428
    %v3443 = vsel %vm3359, %v3345, %v3429
    %v3444 = vsel %vm3360, %v3346, %v3430
    %v3445 = vsel %vm3361, %v3347, %v3431
    %v3446 = vsel %vm3362, %v3348, %v3432
    %v3447 = vsel %vm3363, %v3349, %v3433
    %v3448 = vmul.f32 %v3434, 1.050701
    %v3449 = vmul.f32 %v3435, 1.050701
    %v3450 = vmul.f32 %v3436, 1.050701
    %v3451 = vmul.f32 %v3437, 1.050701
    %v3452 = vmul.f32 %v3438, 1.050701
    %v3453 = vmul.f32 %v3439, 1.050701
    %v3454 = vmul.f32 %v3440, 1.050701
    %v3455 = vmul.f32 %v3441, 1.050701
    %v3456 = vmul.f32 %v3442, 1.050701
    %v3457 = vmul.f32 %v3443, 1.050701
    %v3458 = vmul.f32 %v3444, 1.050701
    %v3459 = vmul.f32 %v3445, 1.050701
    %v3460 = vmul.f32 %v3446, 1.050701
    %v3461 = vmul.f32 %v3447, 1.050701
    %v3462 = vld [vmem:[%s2] sm:$0xff]
    %v3463 = vld [vmem:[%s2 + $0x8] sm:$0xff]
    %v3464 = vld [vmem:[%s2 + $0x10] sm:$0xff]
    %v3465 = vld [vmem:[%s2 + $0x18] sm:$0xff]
    %v3466 = vld [vmem:[%s2 + $0x20] sm:$0xff]
    %v3467 = vld [vmem:[%s2 + $0x28] sm:$0xff]
    %v3468 = vld [vmem:[%s2 + $0x30] sm:$0xff]
    %v3469 = vld [vmem:[%s2 + $0x38] sm:$0xff]
    %v3470 = vld [vmem:[%s2 + $0x40] sm:$0xff]
    %v3471 = vld [vmem:[%s2 + $0x48] sm:$0xff]
    %v3472 = vld [vmem:[%s2 + $0x50] sm:$0xff]
    %v3473 = vld [vmem:[%s2 + $0x58] sm:$0xff]
    %v3474 = vld [vmem:[%s2 + $0x60] sm:$0xff]
    %v3475 = vld [vmem:[%s2 + $0x68] sm:$0xff]
    %3477 = vset.pattern.permute.xlu0 0
    %3478 = vperm.xlu0 %3477, %v3462
    %v3479 = vpop.permute.xlu0 %3478
    %3482 = vset.pattern.permute.xlu0 0
    %3483 = vperm.xlu0 %3482, %v3463
    %v3484 = vpop.permute.xlu0 %3483
    %3487 = vset.pattern.permute.xlu0 0
    %3488 = vperm.xlu0 %3487, %v3464
    %v3489 = vpop.permute.xlu0 %3488
    %3492 = vset.pattern.permute.xlu0 0
    %3493 = vperm.xlu0 %3492, %v3465
    %v3494 = vpop.permute.xlu0 %3493
    %3497 = vset.pattern.permute.xlu0 0
    %3498 = vperm.xlu0 %3497, %v3466
    %v3499 = vpop.permute.xlu0 %3498
    %3502 = vset.pattern.permute.xlu0 0
    %3503 = vperm.xlu0 %3502, %v3467
    %v3504 = vpop.permute.xlu0 %3503
    %3507 = vset.pattern.permute.xlu0 0
    %3508 = vperm.xlu0 %3507, %v3468
    %v3509 = vpop.permute.xlu0 %3508
    %3512 = vset.pattern.permute.xlu0 0
    %3513 = vperm.xlu0 %3512, %v3469
    %v3514 = vpop.permute.xlu0 %3513
    %3517 = vset.pattern.permute.xlu0 0
    %3518 = vperm.xlu0 %3517, %v3470
    %v3519 = vpop.permute.xlu0 %3518
    %3522 = vset.pattern.permute.xlu0 0
    %3523 = vperm.xlu0 %3522, %v3471
    %v3524 = vpop.permute.xlu0 %3523
    %3527 = vset.pattern.permute.xlu0 0
    %3528 = vperm.xlu0 %3527, %v3472
    %v3529 = vpop.permute.xlu0 %3528
    %3532 = vset.pattern.permute.xlu0 0
    %3533 = vperm.xlu0 %3532, %v3473
    %v3534 = vpop.permute.xlu0 %3533
    %3537 = vset.pattern.permute.xlu0 0
    %3538 = vperm.xlu0 %3537, %v3474
    %v3539 = vpop.permute.xlu0 %3538
    %3542 = vset.pattern.permute.xlu0 0
    %3543 = vperm.xlu0 %3542, %v3475
    %v3544 = vpop.permute.xlu0 %3543
    %v3546 = vmul.f32 %v3448, %v3479
    %v3547 = vmul.f32 %v3449, %v3484
    %v3548 = vmul.f32 %v3450, %v3489
    %v3549 = vmul.f32 %v3451, %v3494
    %v3550 = vmul.f32 %v3452, %v3499
    %v3551 = vmul.f32 %v3453, %v3504
    %v3552 = vmul.f32 %v3454, %v3509
    %v3553 = vmul.f32 %v3455, %v3514
    %v3554 = vmul.f32 %v3456, %v3519
    %v3555 = vmul.f32 %v3457, %v3524
    %v3556 = vmul.f32 %v3458, %v3529
    %v3557 = vmul.f32 %v3459, %v3534
    %v3558 = vmul.f32 %v3460, %v3539
    %v3559 = vmul.f32 %v3461, %v3544
    %v3560 = vsel %vm2013, %v3546, 0.0
    %v3561 = vsel %vm2013, %v3547, 0.0
    %v3562 = vadd.f32 %v3560, %v3561
    %v3563 = vsel %vm2013, %v3548, 0.0
    %v3564 = vadd.f32 %v3562, %v3563
    %v3565 = vsel %vm2013, %v3549, 0.0
    %v3566 = vadd.f32 %v3564, %v3565
    %v3567 = vsel %vm2013, %v3550, 0.0
    %v3568 = vadd.f32 %v3566, %v3567
    %v3569 = vsel %vm2013, %v3551, 0.0
    %v3570 = vadd.f32 %v3568, %v3569
    %v3571 = vsel %vm2013, %v3552, 0.0
    %v3572 = vadd.f32 %v3570, %v3571
    %v3573 = vsel %vm2013, %v3553, 0.0
    %v3574 = vadd.f32 %v3572, %v3573
    %v3575 = vsel %vm2013, %v3554, 0.0
    %v3576 = vadd.f32 %v3574, %v3575
    %v3577 = vsel %vm2013, %v3555, 0.0
    %v3578 = vadd.f32 %v3576, %v3577
    %v3579 = vsel %vm2013, %v3556, 0.0
    %v3580 = vadd.f32 %v3578, %v3579
    %v3581 = vsel %vm2013, %v3557, 0.0
    %v3582 = vadd.f32 %v3580, %v3581
    %v3583 = vsel %vm2013, %v3558, 0.0
    %v3584 = vadd.f32 %v3582, %v3583
    %v3585 = vsel %vm2013, %v3559, 0.0
    %v3586 = vadd.f32 %v3584, %v3585
    %v3587 = vrot.slane %v3586, 4
    %v3588 = vadd.f32 %v3586, %v3587
    %v3589 = vrot.slane %v3588, 2
    %v3590 = vadd.f32 %v3588, %v3589
    %v3591 = vrot.slane %v3590, 1
    %v3592 = vadd.f32 %v3590, %v3591
    %v3593 = vmul.f32 %v3592, 0.008928572
    %v3594 = vld [vmem:[%s11] sm:$0xff]
    %v3595 = vld [vmem:[%s11 + $0x8] sm:$0xff]
    %v3596 = vld [vmem:[%s11 + $0x10] sm:$0xff]
    %v3597 = vld [vmem:[%s11 + $0x18] sm:$0xff]
    %v3598 = vld [vmem:[%s11 + $0x20] sm:$0xff]
    %v3599 = vld [vmem:[%s11 + $0x28] sm:$0xff]
    %v3600 = vld [vmem:[%s11 + $0x30] sm:$0xff]
    %v3601 = vld [vmem:[%s11 + $0x38] sm:$0xff]
    %v3602 = vld [vmem:[%s12] sm:$0x1]
    %v3604 = vsel %vm2013, %v3593, 0
    %3606 = vmatpush.msra.mxu0 0.0
    %3607 = vmatpush.msra.mxu0 0.0
    %3608 = vmatpush.msra.mxu0 0.0
    %3609 = vmatpush.msra.mxu0 0.0
    %3610 = vmatpush.msra.mxu0 0.0
    %3611 = vmatpush.msra.mxu0 0.0
    %3612 = vmatpush.msra.mxu0 0.0
    %3613 = vmatpush.msra.mxu0 0.0
    %3614 = vmatpush.msra.mxu0 %v3601
    %3615 = vmatpush.msra.mxu0 %v3600
    %3616 = vmatpush.msra.mxu0 %v3599
    %3617 = vmatpush.msra.mxu0 %v3598
    %3618 = vmatpush.msra.mxu0 %v3597
    %3619 = vmatpush.msra.mxu0 %v3596
    %3620 = vmatpush.msra.mxu0 %v3595
    %3621 = vmatpush.msra.mxu0 %v3594
    %3622 = vmatmul.f32.gmra.mxu0 %v3604
    %v3623 = vpop.f32.mrf.mxu0
    %v3624 = vadd.f32 %v3602, %v3623
    %3625 = vdwg.mxu0
    %vm3626 = vcmask 24576
    %v3627 = vsel %vm3626, %v3624, -inf
    %3628 = vmax.xlane.f32.xlu0 %v3627
    %v3629 = vpop.xlane.xlu0 %3628
    %v3630 = vsub.f32 %v3624, %v3629
    %v3631 = vmul.f32 %v3630, 1.442695
    %v3632 = vpow.pop %v3631
    %v3633 = vsel %vm3626, %v3632, 0.0
    %3634 = vadd.xlane.f32.xlu0 %v3633
    %v3635 = vpop.xlane.xlu0 %3634
    %v3636 = vrcp.pop %v3635
    %v3637 = vmul.f32 %v3635, %v3636
    %v3638 = vsub.f32 1.0, %v3637
    %v3639 = vmul.f32 %v3636, %v3638
    %v3640 = vadd.f32 %v3636, %v3639
    %vm3641 = vweird.f32 %v3635
    %vm3642 = vweird.f32 %v3636
    %vm3643 = vmor %vm3641, %vm3642
    %v3644 = vsel %vm3643, %v3636, %v3640
    %v3645 = vand.u32 2147483647, %v3635
    %vm3646 = vcmp.eq.f32.partialorder %v3645, 8.507059e+37
    %v3647 = vand.u32 %v3635, 2147483648
    %v3648 = vor.u32 1.1754944e-38, %v3647
    %v3649 = vsel %vm3646, %v3648, %v3644
    %v3650 = vmul.f32 %v3632, %v3649
    %3651 = vst.msk [vmem:[#allocation13] sm:$0x1] %vm3626, %v3650
    // Predicated region
    $region78: #{multigat_fused.1} parent=1 // pred_check
      _
    $region79: #{multigat_fused.1} parent=1 // pred_check_branch
      %3653 = sbr.rel (0) target = $region81
    $region80: #{multigat_fused.1} parent=1 // pred_region
      %3655 = vsyncadd [#allocation4], 0
      %s3657 = sshll.u32 [#allocation13], 4
      %s3658 = int_to_ptr.vmem [resolvable:$true] %s3657
      %s3659 = sshll.u32 %s13, 4
      %s3660 = int_to_ptr.hbm [resolvable:$true] %s3659
      %3662 = dma.vmem_to_hbm [thread:$0]  %s3658, 16, %s3660, [#allocation4]
    $region81: #{multigat_fused.1} parent=1 // pred_fallthru
      _
    // Predicated region
    $region82: #{multigat_fused.1} parent=1 // pred_check
      _
    $region83: #{multigat_fused.1} parent=1 // pred_check_branch
      %3664 = sbr.rel (0) target = $region85
    $region84: #{multigat_fused.1} parent=1 // pred_region
      %3666 = dma.done [#allocation4], 16
    $region85: #{multigat_fused.1} parent=1 // pred_fallthru
      _
    %3667 = vsyncpa [#allocation3], 1
    %3668 = vsyncpa [#allocation6], 1
    %3669 = vsyncpa [#allocation9], 1
    %3670 = vsyncpa [#allocation12], 1
    %3671 = vsyncpa [#allocation4], 1

</llo_original>
